<compile_context>
chip_gen: v6e
topology: v6e:2x2x1
jax: 0.10.0
libtpu: 0.0.40
codegen_flags: <defaults>
</compile_context>

<pallas_src>
import jax
import jax.numpy as jnp
from jax import lax
from jax.experimental import pallas as pl
from jax.experimental.pallas import tpu as pltpu

EPS = 1e-5
TK = 768  # K-tile of the first layer: 3072 / 768 = 4 grid steps


def mlp_kernel(x_ref,
               w1_ref, b1_ref, g1_ref, bt1_ref,
               w2_ref, b2_ref, g2_ref, bt2_ref,
               w3_ref, b3_ref, g3_ref, bt3_ref,
               w4_ref, b4_ref,
               o_ref, acc_ref):
    k = pl.program_id(0)

    @pl.when(k == 0)
    def _():
        acc_ref[...] = jnp.zeros_like(acc_ref)

    # Layer-1 partial product: (B, TK) @ (TK, 1024), bf16 operands, f32 accum.
    acc_ref[...] += jnp.dot(x_ref[...], w1_ref[...],
                            preferred_element_type=jnp.float32)

    @pl.when(k == pl.num_programs(0) - 1)
    def _():
        def linear(h, w_ref, b_ref):
            # bf16 MXU matmul with f32 accumulation; bias add in f32.
            return jnp.dot(h.astype(w_ref.dtype), w_ref[...],
                           preferred_element_type=jnp.float32) + b_ref[...]

        def batchnorm(h, g_ref, bt_ref):
            # Training-mode BN folded to one fused multiply-add (f32 math):
            #   scale = gamma * rsqrt(var + eps); shift = beta - mean * scale
            mean = jnp.mean(h, axis=0, keepdims=True)
            var = jnp.mean((h - mean) ** 2, axis=0, keepdims=True)  # biased
            scale = g_ref[...] * lax.rsqrt(var + EPS)
            return h * scale + (bt_ref[...] - mean * scale)

        h = jnp.maximum(acc_ref[...] + b1_ref[...], 0.0)
        h = batchnorm(h, g1_ref, bt1_ref)
        h = jnp.maximum(linear(h, w2_ref, b2_ref), 0.0)
        h = batchnorm(h, g2_ref, bt2_ref)
        h = jnp.maximum(linear(h, w3_ref, b3_ref), 0.0)
        h = batchnorm(h, g3_ref, bt3_ref)
        o_ref[...] = linear(h, w4_ref, b4_ref).astype(o_ref.dtype)


def model_forward(x_nchw, params):
    B = x_nchw.shape[0]
    x = x_nchw.reshape(B, -1).astype(jnp.bfloat16)   # Flatten: (B, 3072)
    (w1, b1, g1, bt1,
     w2, b2, g2, bt2,
     w3, b3, g3, bt3,
     w4, b4) = params

    K = x.shape[1]
    assert K % TK == 0
    n_k = K // TK

    def const_spec(shape):
        return pl.BlockSpec(shape, lambda k: (0, 0))

    in_specs = [
        pl.BlockSpec((B, TK), lambda k: (0, k)),        # x : stream K-tiles
        pl.BlockSpec((TK, 1024), lambda k: (k, 0)),     # w1: stream K-tiles
        const_spec((1, 1024)),                          # b1
        const_spec((1, 1024)),                          # g1
        const_spec((1, 1024)),                          # bt1
        const_spec((1024, 512)),                        # w2 (resident)
        const_spec((1, 512)),                           # b2
        const_spec((1, 512)),                           # g2
        const_spec((1, 512)),                           # bt2
        const_spec((512, 256)),                         # w3 (resident)
        const_spec((1, 256)),                           # b3
        const_spec((1, 256)),                           # g3
        const_spec((1, 256)),                           # bt3
        const_spec((256, 10)),                          # w4 (resident)
        const_spec((1, 10)),                            # b4
    ]

    out = pl.pallas_call(
        mlp_kernel,
        out_shape=jax.ShapeDtypeStruct((B, 10), jnp.float32),
        grid_spec=pltpu.PrefetchScalarGridSpec(
            num_scalar_prefetch=0,
            grid=(n_k,),
            in_specs=in_specs,
            out_specs=pl.BlockSpec((B, 10), lambda k: (0, 0)),
            scratch_shapes=[pltpu.VMEM((B, 1024), jnp.float32)],
        ),
        compiler_params=pltpu.CompilerParams(
            dimension_semantics=("arbitrary",),
            vmem_limit_bytes=32 << 20,
        ),
    )(x, w1, b1, g1, bt1, w2, b2, g2, bt2, w3, b3, g3, bt3, w4, b4)
    return out


def init_params(key):
    dims = [(3072, 1024), (1024, 512), (512, 256), (256, 10)]
    params = []
    keys = jax.random.split(key, 2 * len(dims))
    for i, (fin, fout) in enumerate(dims):
        kw, kb = keys[2 * i], keys[2 * i + 1]
        bound = 1.0 / jnp.sqrt(fin)
        # stored as (in, out) so the kernel can do x @ W; weights streamed bf16
        w = jax.random.uniform(kw, (fin, fout), jnp.float32, -bound, bound)
        b = jax.random.uniform(kb, (1, fout), jnp.float32, -bound, bound)
        params.append(w.astype(jnp.bfloat16))
        params.append(b)
        if i < 3:  # batchnorm affine params (gamma=1, beta=0), kept in f32
            params.append(jnp.ones((1, fout), jnp.float32))
            params.append(jnp.zeros((1, fout), jnp.float32))
    return tuple(params)


def reference_forward(x_nchw, params):
    # Pure-JAX reference mirroring the kernel's bf16 operand quantization
    # (weights are bf16, matmul operands rounded to bf16, accumulation in f32).
    (w1, b1, g1, bt1, w2, b2, g2, bt2, w3, b3, g3, bt3, w4, b4) = params
    h = x_nchw.reshape(x_nchw.shape[0], -1).astype(jnp.bfloat16).astype(jnp.float32)

    def lin(h, w, b):
        return jnp.dot(h.astype(jnp.bfloat16).astype(jnp.float32),
                       w.astype(jnp.float32),
                       preferred_element_type=jnp.float32) + b

    def bn(h, g, bt):
        m = jnp.mean(h, axis=0, keepdims=True)
        v = jnp.mean((h - m) ** 2, axis=0, keepdims=True)
        scale = g * lax.rsqrt(v + EPS)
        return h * scale + (bt - m * scale)

    h = bn(jnp.maximum(lin(h, w1, b1), 0.0), g1, bt1)
    h = bn(jnp.maximum(lin(h, w2, b2), 0.0), g2, bt2)
    h = bn(jnp.maximum(lin(h, w3, b3), 0.0), g3, bt3)
    return lin(h, w4, b4)


if __name__ == "__main__":
    key = jax.random.PRNGKey(0)
    kx, kp = jax.random.split(key)
    # CIFAR-like input: B=8, C=3, H=W=32  (3*32*32 = 3072, required by fc_in)
    x = jax.random.normal(kx, (8, 3, 32, 32), jnp.float32)
    params = init_params(kp)

    out = jax.block_until_ready(model_forward(x, params))
    ref = reference_forward(x, params)

    assert out.shape == (8, 10)
    assert jnp.allclose(out, ref, atol=1e-2, rtol=1e-2), "mismatch vs JAX reference"
    print("KERNEL_OK")
</pallas_src>

<mosaic_0001>
module attributes {stable_mosaic.version = 11 : i64} {
  func.func @mlp_kernel(%arg0: i32, %arg1: memref<8x768xbf16, #tpu.memory_space<vmem>>, %arg2: memref<768x1024xbf16, #tpu.memory_space<vmem>>, %arg3: memref<1x1024xf32, #tpu.memory_space<vmem>>, %arg4: memref<1x1024xf32, #tpu.memory_space<vmem>>, %arg5: memref<1x1024xf32, #tpu.memory_space<vmem>>, %arg6: memref<1024x512xbf16, #tpu.memory_space<vmem>>, %arg7: memref<1x512xf32, #tpu.memory_space<vmem>>, %arg8: memref<1x512xf32, #tpu.memory_space<vmem>>, %arg9: memref<1x512xf32, #tpu.memory_space<vmem>>, %arg10: memref<512x256xbf16, #tpu.memory_space<vmem>>, %arg11: memref<1x256xf32, #tpu.memory_space<vmem>>, %arg12: memref<1x256xf32, #tpu.memory_space<vmem>>, %arg13: memref<1x256xf32, #tpu.memory_space<vmem>>, %arg14: memref<256x10xbf16, #tpu.memory_space<vmem>>, %arg15: memref<1x10xf32, #tpu.memory_space<vmem>>, %arg16: memref<8x10xf32, #tpu.memory_space<vmem>>, %arg17: memref<8x1024xf32, #tpu.memory_space<vmem>>) attributes {dimension_semantics = [#tpu.dimension_semantics<arbitrary>], iteration_bounds = array<i64: 4>, scalar_prefetch = 0 : i64, scratch_operands = 1 : i64, tpu.core_type = #tpu.core_type<tc>, window_params = [{transform_indices = @transform_0, window_bounds = array<i64: 8, 768>}, {transform_indices = @transform_1, window_bounds = array<i64: 768, 1024>}, {pipeline_mode = #tpu.pipeline_mode<synchronous>, transform_indices = @transform_2, window_bounds = array<i64: 1, 1024>}, {pipeline_mode = #tpu.pipeline_mode<synchronous>, transform_indices = @transform_3, window_bounds = array<i64: 1, 1024>}, {pipeline_mode = #tpu.pipeline_mode<synchronous>, transform_indices = @transform_4, window_bounds = array<i64: 1, 1024>}, {pipeline_mode = #tpu.pipeline_mode<synchronous>, transform_indices = @transform_5, window_bounds = array<i64: 1024, 512>}, {pipeline_mode = #tpu.pipeline_mode<synchronous>, transform_indices = @transform_6, window_bounds = array<i64: 1, 512>}, {pipeline_mode = #tpu.pipeline_mode<synchronous>, transform_indices = @transform_7, window_bounds = array<i64: 1, 512>}, {pipeline_mode = #tpu.pipeline_mode<synchronous>, transform_indices = @transform_8, window_bounds = array<i64: 1, 512>}, {pipeline_mode = #tpu.pipeline_mode<synchronous>, transform_indices = @transform_9, window_bounds = array<i64: 512, 256>}, {pipeline_mode = #tpu.pipeline_mode<synchronous>, transform_indices = @transform_10, window_bounds = array<i64: 1, 256>}, {pipeline_mode = #tpu.pipeline_mode<synchronous>, transform_indices = @transform_11, window_bounds = array<i64: 1, 256>}, {pipeline_mode = #tpu.pipeline_mode<synchronous>, transform_indices = @transform_12, window_bounds = array<i64: 1, 256>}, {pipeline_mode = #tpu.pipeline_mode<synchronous>, transform_indices = @transform_13, window_bounds = array<i64: 256, 10>}, {pipeline_mode = #tpu.pipeline_mode<synchronous>, transform_indices = @transform_14, window_bounds = array<i64: 1, 10>}, {pipeline_mode = #tpu.pipeline_mode<synchronous>, transform_indices = @transform_15, window_bounds = array<i64: 8, 10>}]} {
    %c0_i32 = arith.constant 0 : i32
    %0 = arith.cmpi eq, %arg0, %c0_i32 : i32
    %1 = arith.extui %0 : i1 to i32
    %c0_i32_0 = arith.constant 0 : i32
    %2 = arith.cmpi ne, %1, %c0_i32_0 : i32
    scf.if %2 {
      %cst_9 = arith.constant 0.000000e+00 : f32
      %12 = vector.broadcast %cst_9 : f32 to vector<8x1024xf32>
      %c0_10 = arith.constant 0 : index
      %c0_11 = arith.constant 0 : index
      %13 = vector.load %arg17[%c0_10, %c0_11] : memref<8x1024xf32, #tpu.memory_space<vmem>>, vector<8x1024xf32>
      tpu.vector_store %arg17[%c0_10, %c0_11], %12 {strides = array<i32>} : memref<8x1024xf32, #tpu.memory_space<vmem>>, vector<8x1024xf32>,
    } else {
    }
    %c0 = arith.constant 0 : index
    %c0_1 = arith.constant 0 : index
    %3 = vector.load %arg17[%c0, %c0_1] : memref<8x1024xf32, #tpu.memory_space<vmem>>, vector<8x1024xf32>
    %c0_2 = arith.constant 0 : index
    %c0_3 = arith.constant 0 : index
    %4 = vector.load %arg1[%c0_2, %c0_3] : memref<8x768xbf16, #tpu.memory_space<vmem>>, vector<8x768xbf16>
    %c0_4 = arith.constant 0 : index
    %c0_5 = arith.constant 0 : index
    %5 = vector.load %arg2[%c0_4, %c0_5] : memref<768x1024xbf16, #tpu.memory_space<vmem>>, vector<768x1024xbf16>
    %cst = arith.constant dense<0.000000e+00> : vector<8x1024xf32>
    %6 = tpu.matmul %4, %5, %cst {dimension_numbers = #tpu.dot_dimension_numbers<[1], [0], [0], [1], [0, 0, 1, 1], [], []>} : vector<8x768xbf16>, vector<768x1024xbf16>, vector<8x1024xf32> -> vector<8x1024xf32>
    %7 = arith.addf %3, %6 : vector<8x1024xf32>
    %c0_6 = arith.constant 0 : index
    %c0_7 = arith.constant 0 : index
    %8 = vector.load %arg17[%c0_6, %c0_7] : memref<8x1024xf32, #tpu.memory_space<vmem>>, vector<8x1024xf32>
    tpu.vector_store %arg17[%c0_6, %c0_7], %7 {strides = array<i32>} : memref<8x1024xf32, #tpu.memory_space<vmem>>, vector<8x1024xf32>,
    %c3_i32 = arith.constant 3 : i32
    %9 = arith.cmpi eq, %arg0, %c3_i32 : i32
    %10 = arith.extui %9 : i1 to i32
    %c0_i32_8 = arith.constant 0 : i32
    %11 = arith.cmpi ne, %10, %c0_i32_8 : i32
    scf.if %11 {
      %c0_9 = arith.constant 0 : index
      %c0_10 = arith.constant 0 : index
      %12 = vector.load %arg17[%c0_9, %c0_10] : memref<8x1024xf32, #tpu.memory_space<vmem>>, vector<8x1024xf32>
      %c0_11 = arith.constant 0 : index
      %c0_12 = arith.constant 0 : index
      %13 = vector.load %arg3[%c0_11, %c0_12] : memref<1x1024xf32, #tpu.memory_space<vmem>>, vector<1x1024xf32>
      %14 = vector.broadcast %13 : vector<1x1024xf32> to vector<8x1024xf32>
      %15 = arith.addf %12, %14 : vector<8x1024xf32>
      %cst_13 = arith.constant 0.000000e+00 : f32
      %16 = vector.broadcast %cst_13 : f32 to vector<8x1024xf32>
      %17 = arith.maximumf %15, %16 : vector<8x1024xf32>
      %cst_14 = arith.constant dense<0.000000e+00> : vector<1024xf32>
      %18 = vector.multi_reduction <add>, %17, %cst_14 [0] : vector<8x1024xf32> to vector<1024xf32>
      %19 = vector.shape_cast %18 : vector<1024xf32> to vector<1x1024xf32>
      %cst_15 = arith.constant 8.000000e+00 : f32
      %20 = vector.broadcast %cst_15 : f32 to vector<1x1024xf32>
      %21 = arith.divf %19, %20 : vector<1x1024xf32>
      %22 = vector.broadcast %21 : vector<1x1024xf32> to vector<8x1024xf32>
      %23 = arith.subf %17, %22 : vector<8x1024xf32>
      %24 = arith.mulf %23, %23 : vector<8x1024xf32>
      %cst_16 = arith.constant dense<0.000000e+00> : vector<1024xf32>
      %25 = vector.multi_reduction <add>, %24, %cst_16 [0] : vector<8x1024xf32> to vector<1024xf32>
      %26 = vector.shape_cast %25 : vector<1024xf32> to vector<1x1024xf32>
      %cst_17 = arith.constant 8.000000e+00 : f32
      %27 = vector.broadcast %cst_17 : f32 to vector<1x1024xf32>
      %28 = arith.divf %26, %27 : vector<1x1024xf32>
      %c0_18 = arith.constant 0 : index
      %c0_19 = arith.constant 0 : index
      %29 = vector.load %arg4[%c0_18, %c0_19] : memref<1x1024xf32, #tpu.memory_space<vmem>>, vector<1x1024xf32>
      %cst_20 = arith.constant 9.99999974E-6 : f32
      %30 = vector.broadcast %cst_20 : f32 to vector<1x1024xf32>
      %31 = arith.addf %28, %30 : vector<1x1024xf32>
      %32 = math.rsqrt %31 : vector<1x1024xf32>
      %33 = arith.mulf %29, %32 : vector<1x1024xf32>
      %34 = vector.broadcast %33 : vector<1x1024xf32> to vector<8x1024xf32>
      %35 = arith.mulf %17, %34 : vector<8x1024xf32>
      %c0_21 = arith.constant 0 : index
      %c0_22 = arith.constant 0 : index
      %36 = vector.load %arg5[%c0_21, %c0_22] : memref<1x1024xf32, #tpu.memory_space<vmem>>, vector<1x1024xf32>
      %37 = arith.mulf %21, %33 : vector<1x1024xf32>
      %38 = arith.subf %36, %37 : vector<1x1024xf32>
      %39 = vector.broadcast %38 : vector<1x1024xf32> to vector<8x1024xf32>
      %40 = arith.addf %35, %39 : vector<8x1024xf32>
      %41 = arith.truncf %40 : vector<8x1024xf32> to vector<8x1024xbf16>
      %c0_23 = arith.constant 0 : index
      %c0_24 = arith.constant 0 : index
      %42 = vector.load %arg6[%c0_23, %c0_24] : memref<1024x512xbf16, #tpu.memory_space<vmem>>, vector<1024x512xbf16>
      %cst_25 = arith.constant dense<0.000000e+00> : vector<8x512xf32>
      %43 = tpu.matmul %41, %42, %cst_25 {dimension_numbers = #tpu.dot_dimension_numbers<[1], [0], [0], [1], [0, 0, 1, 1], [], []>} : vector<8x1024xbf16>, vector<1024x512xbf16>, vector<8x512xf32> -> vector<8x512xf32>
      %c0_26 = arith.constant 0 : index
      %c0_27 = arith.constant 0 : index
      %44 = vector.load %arg7[%c0_26, %c0_27] : memref<1x512xf32, #tpu.memory_space<vmem>>, vector<1x512xf32>
      %45 = vector.broadcast %44 : vector<1x512xf32> to vector<8x512xf32>
      %46 = arith.addf %43, %45 : vector<8x512xf32>
      %cst_28 = arith.constant 0.000000e+00 : f32
      %47 = vector.broadcast %cst_28 : f32 to vector<8x512xf32>
      %48 = arith.maximumf %46, %47 : vector<8x512xf32>
      %cst_29 = arith.constant dense<0.000000e+00> : vector<512xf32>
      %49 = vector.multi_reduction <add>, %48, %cst_29 [0] : vector<8x512xf32> to vector<512xf32>
      %50 = vector.shape_cast %49 : vector<512xf32> to vector<1x512xf32>
      %cst_30 = arith.constant 8.000000e+00 : f32
      %51 = vector.broadcast %cst_30 : f32 to vector<1x512xf32>
      %52 = arith.divf %50, %51 : vector<1x512xf32>
      %53 = vector.broadcast %52 : vector<1x512xf32> to vector<8x512xf32>
      %54 = arith.subf %48, %53 : vector<8x512xf32>
      %55 = arith.mulf %54, %54 : vector<8x512xf32>
      %cst_31 = arith.constant dense<0.000000e+00> : vector<512xf32>
      %56 = vector.multi_reduction <add>, %55, %cst_31 [0] : vector<8x512xf32> to vector<512xf32>
      %57 = vector.shape_cast %56 : vector<512xf32> to vector<1x512xf32>
      %cst_32 = arith.constant 8.000000e+00 : f32
      %58 = vector.broadcast %cst_32 : f32 to vector<1x512xf32>
      %59 = arith.divf %57, %58 : vector<1x512xf32>
      %c0_33 = arith.constant 0 : index
      %c0_34 = arith.constant 0 : index
      %60 = vector.load %arg8[%c0_33, %c0_34] : memref<1x512xf32, #tpu.memory_space<vmem>>, vector<1x512xf32>
      %cst_35 = arith.constant 9.99999974E-6 : f32
      %61 = vector.broadcast %cst_35 : f32 to vector<1x512xf32>
      %62 = arith.addf %59, %61 : vector<1x512xf32>
      %63 = math.rsqrt %62 : vector<1x512xf32>
      %64 = arith.mulf %60, %63 : vector<1x512xf32>
      %65 = vector.broadcast %64 : vector<1x512xf32> to vector<8x512xf32>
      %66 = arith.mulf %48, %65 : vector<8x512xf32>
      %c0_36 = arith.constant 0 : index
      %c0_37 = arith.constant 0 : index
      %67 = vector.load %arg9[%c0_36, %c0_37] : memref<1x512xf32, #tpu.memory_space<vmem>>, vector<1x512xf32>
      %68 = arith.mulf %52, %64 : vector<1x512xf32>
      %69 = arith.subf %67, %68 : vector<1x512xf32>
      %70 = vector.broadcast %69 : vector<1x512xf32> to vector<8x512xf32>
      %71 = arith.addf %66, %70 : vector<8x512xf32>
      %72 = arith.truncf %71 : vector<8x512xf32> to vector<8x512xbf16>
      %c0_38 = arith.constant 0 : index
      %c0_39 = arith.constant 0 : index
      %73 = vector.load %arg10[%c0_38, %c0_39] : memref<512x256xbf16, #tpu.memory_space<vmem>>, vector<512x256xbf16>
      %cst_40 = arith.constant dense<0.000000e+00> : vector<8x256xf32>
      %74 = tpu.matmul %72, %73, %cst_40 {dimension_numbers = #tpu.dot_dimension_numbers<[1], [0], [0], [1], [0, 0, 1, 1], [], []>} : vector<8x512xbf16>, vector<512x256xbf16>, vector<8x256xf32> -> vector<8x256xf32>
      %c0_41 = arith.constant 0 : index
      %c0_42 = arith.constant 0 : index
      %75 = vector.load %arg11[%c0_41, %c0_42] : memref<1x256xf32, #tpu.memory_space<vmem>>, vector<1x256xf32>
      %76 = vector.broadcast %75 : vector<1x256xf32> to vector<8x256xf32>
      %77 = arith.addf %74, %76 : vector<8x256xf32>
      %cst_43 = arith.constant 0.000000e+00 : f32
      %78 = vector.broadcast %cst_43 : f32 to vector<8x256xf32>
      %79 = arith.maximumf %77, %78 : vector<8x256xf32>
      %cst_44 = arith.constant dense<0.000000e+00> : vector<256xf32>
      %80 = vector.multi_reduction <add>, %79, %cst_44 [0] : vector<8x256xf32> to vector<256xf32>
      %81 = vector.shape_cast %80 : vector<256xf32> to vector<1x256xf32>
      %cst_45 = arith.constant 8.000000e+00 : f32
      %82 = vector.broadcast %cst_45 : f32 to vector<1x256xf32>
      %83 = arith.divf %81, %82 : vector<1x256xf32>
      %84 = vector.broadcast %83 : vector<1x256xf32> to vector<8x256xf32>
      %85 = arith.subf %79, %84 : vector<8x256xf32>
      %86 = arith.mulf %85, %85 : vector<8x256xf32>
      %cst_46 = arith.constant dense<0.000000e+00> : vector<256xf32>
      %87 = vector.multi_reduction <add>, %86, %cst_46 [0] : vector<8x256xf32> to vector<256xf32>
      %88 = vector.shape_cast %87 : vector<256xf32> to vector<1x256xf32>
      %cst_47 = arith.constant 8.000000e+00 : f32
      %89 = vector.broadcast %cst_47 : f32 to vector<1x256xf32>
      %90 = arith.divf %88, %89 : vector<1x256xf32>
      %c0_48 = arith.constant 0 : index
      %c0_49 = arith.constant 0 : index
      %91 = vector.load %arg12[%c0_48, %c0_49] : memref<1x256xf32, #tpu.memory_space<vmem>>, vector<1x256xf32>
      %cst_50 = arith.constant 9.99999974E-6 : f32
      %92 = vector.broadcast %cst_50 : f32 to vector<1x256xf32>
      %93 = arith.addf %90, %92 : vector<1x256xf32>
      %94 = math.rsqrt %93 : vector<1x256xf32>
      %95 = arith.mulf %91, %94 : vector<1x256xf32>
      %96 = vector.broadcast %95 : vector<1x256xf32> to vector<8x256xf32>
      %97 = arith.mulf %79, %96 : vector<8x256xf32>
      %c0_51 = arith.constant 0 : index
      %c0_52 = arith.constant 0 : index
      %98 = vector.load %arg13[%c0_51, %c0_52] : memref<1x256xf32, #tpu.memory_space<vmem>>, vector<1x256xf32>
      %99 = arith.mulf %83, %95 : vector<1x256xf32>
      %100 = arith.subf %98, %99 : vector<1x256xf32>
      %101 = vector.broadcast %100 : vector<1x256xf32> to vector<8x256xf32>
      %102 = arith.addf %97, %101 : vector<8x256xf32>
      %103 = arith.truncf %102 : vector<8x256xf32> to vector<8x256xbf16>
      %c0_53 = arith.constant 0 : index
      %c0_54 = arith.constant 0 : index
      %104 = vector.load %arg14[%c0_53, %c0_54] : memref<256x10xbf16, #tpu.memory_space<vmem>>, vector<256x10xbf16>
      %cst_55 = arith.constant dense<0.000000e+00> : vector<8x10xf32>
      %105 = tpu.matmul %103, %104, %cst_55 {dimension_numbers = #tpu.dot_dimension_numbers<[1], [0], [0], [1], [0, 0, 1, 1], [], []>} : vector<8x256xbf16>, vector<256x10xbf16>, vector<8x10xf32> -> vector<8x10xf32>
      %c0_56 = arith.constant 0 : index
      %c0_57 = arith.constant 0 : index
      %106 = vector.load %arg15[%c0_56, %c0_57] : memref<1x10xf32, #tpu.memory_space<vmem>>, vector<1x10xf32>
      %107 = vector.broadcast %106 : vector<1x10xf32> to vector<8x10xf32>
      %108 = arith.addf %105, %107 : vector<8x10xf32>
      %c0_58 = arith.constant 0 : index
      %c0_59 = arith.constant 0 : index
      %109 = vector.load %arg16[%c0_58, %c0_59] : memref<8x10xf32, #tpu.memory_space<vmem>>, vector<8x10xf32>
      tpu.vector_store %arg16[%c0_58, %c0_59], %108 {strides = array<i32>} : memref<8x10xf32, #tpu.memory_space<vmem>>, vector<8x10xf32>,
    } else {
    }
    return
  }
  func.func @transform_0(%arg0: i32) -> (i32, i32) {
    %c0_i32 = arith.constant 0 : i32
    %c0_i32_0 = arith.constant 0 : i32
    return %c0_i32, %arg0 : i32, i32
  }
  func.func @transform_1(%arg0: i32) -> (i32, i32) {
    %c0_i32 = arith.constant 0 : i32
    %c0_i32_0 = arith.constant 0 : i32
    return %arg0, %c0_i32 : i32, i32
  }
  func.func @transform_2(%arg0: i32) -> (i32, i32) {
    %c0_i32 = arith.constant 0 : i32
    %c0_i32_0 = arith.constant 0 : i32
    %c0_i32_1 = arith.constant 0 : i32
    return %c0_i32, %c0_i32_0 : i32, i32
  }
  func.func @transform_3(%arg0: i32) -> (i32, i32) {
    %c0_i32 = arith.constant 0 : i32
    %c0_i32_0 = arith.constant 0 : i32
    %c0_i32_1 = arith.constant 0 : i32
    return %c0_i32, %c0_i32_0 : i32, i32
  }
  func.func @transform_4(%arg0: i32) -> (i32, i32) {
    %c0_i32 = arith.constant 0 : i32
    %c0_i32_0 = arith.constant 0 : i32
    %c0_i32_1 = arith.constant 0 : i32
    return %c0_i32, %c0_i32_0 : i32, i32
  }
  func.func @transform_5(%arg0: i32) -> (i32, i32) {
    %c0_i32 = arith.constant 0 : i32
    %c0_i32_0 = arith.constant 0 : i32
    %c0_i32_1 = arith.constant 0 : i32
    return %c0_i32, %c0_i32_0 : i32, i32
  }
  func.func @transform_6(%arg0: i32) -> (i32, i32) {
    %c0_i32 = arith.constant 0 : i32
    %c0_i32_0 = arith.constant 0 : i32
    %c0_i32_1 = arith.constant 0 : i32
    return %c0_i32, %c0_i32_0 : i32, i32
  }
  func.func @transform_7(%arg0: i32) -> (i32, i32) {
    %c0_i32 = arith.constant 0 : i32
    %c0_i32_0 = arith.constant 0 : i32
    %c0_i32_1 = arith.constant 0 : i32
    return %c0_i32, %c0_i32_0 : i32, i32
  }
  func.func @transform_8(%arg0: i32) -> (i32, i32) {
    %c0_i32 = arith.constant 0 : i32
    %c0_i32_0 = arith.constant 0 : i32
    %c0_i32_1 = arith.constant 0 : i32
    return %c0_i32, %c0_i32_0 : i32, i32
  }
  func.func @transform_9(%arg0: i32) -> (i32, i32) {
    %c0_i32 = arith.constant 0 : i32
    %c0_i32_0 = arith.constant 0 : i32
    %c0_i32_1 = arith.constant 0 : i32
    return %c0_i32, %c0_i32_0 : i32, i32
  }
  func.func @transform_10(%arg0: i32) -> (i32, i32) {
    %c0_i32 = arith.constant 0 : i32
    %c0_i32_0 = arith.constant 0 : i32
    %c0_i32_1 = arith.constant 0 : i32
    return %c0_i32, %c0_i32_0 : i32, i32
  }
  func.func @transform_11(%arg0: i32) -> (i32, i32) {
    %c0_i32 = arith.constant 0 : i32
    %c0_i32_0 = arith.constant 0 : i32
    %c0_i32_1 = arith.constant 0 : i32
    return %c0_i32, %c0_i32_0 : i32, i32
  }
  func.func @transform_12(%arg0: i32) -> (i32, i32) {
    %c0_i32 = arith.constant 0 : i32
    %c0_i32_0 = arith.constant 0 : i32
    %c0_i32_1 = arith.constant 0 : i32
    return %c0_i32, %c0_i32_0 : i32, i32
  }
  func.func @transform_13(%arg0: i32) -> (i32, i32) {
    %c0_i32 = arith.constant 0 : i32
    %c0_i32_0 = arith.constant 0 : i32
    %c0_i32_1 = arith.constant 0 : i32
    return %c0_i32, %c0_i32_0 : i32, i32
  }
  func.func @transform_14(%arg0: i32) -> (i32, i32) {
    %c0_i32 = arith.constant 0 : i32
    %c0_i32_0 = arith.constant 0 : i32
    %c0_i32_1 = arith.constant 0 : i32
    return %c0_i32, %c0_i32_0 : i32, i32
  }
  func.func @transform_15(%arg0: i32) -> (i32, i32) {
    %c0_i32 = arith.constant 0 : i32
    %c0_i32_0 = arith.constant 0 : i32
    %c0_i32_1 = arith.constant 0 : i32
    return %c0_i32, %c0_i32_0 : i32, i32
  }
}

</mosaic_0001>

<llo_original>
// kernel: tpu_custom_call.1
$region0: #{tpu_custom_call.1}
  #allocation0 [shape = 'u32[]', space=smem, size = 0x4, offset = 0x4, fixed_abs, tag = 'smem constant byte address 0x4 - core index']
  #allocation1 [shape = 'u32[144,128]{1,0:T(1,128)}', space=vmem, size = 0x12000, scoped, tag = 'internal scratch']
  #allocation2 [shape = 'f32[8,1024]{1,0:T(8,128)}', space=vmem, size = 0x8000, scoped, tag = 'scratch operand']
  %s0 = inlined_call_operand.hbm [shape: bf16[8,3072], index: 0, kind: input, shape index: {}]
  %s1 = inlined_call_operand.hbm [shape: bf16[3072,1024], index: 1, kind: input, shape index: {}]
  %s2 = inlined_call_operand.hbm [shape: f32[1,1024], index: 2, kind: input, shape index: {}]
  %s3 = inlined_call_operand.hbm [shape: f32[1,1024], index: 3, kind: input, shape index: {}]
  %s4 = inlined_call_operand.hbm [shape: f32[1,1024], index: 4, kind: input, shape index: {}]
  %s5 = inlined_call_operand.hbm [shape: bf16[1024,512], index: 5, kind: input, shape index: {}]
  %s6 = inlined_call_operand.hbm [shape: f32[1,512], index: 6, kind: input, shape index: {}]
  %s7 = inlined_call_operand.hbm [shape: f32[1,512], index: 7, kind: input, shape index: {}]
  %s8 = inlined_call_operand.hbm [shape: f32[1,512], index: 8, kind: input, shape index: {}]
  %s9 = inlined_call_operand.hbm [shape: bf16[512,256], index: 9, kind: input, shape index: {}]
  %s10 = inlined_call_operand.hbm [shape: f32[1,256], index: 10, kind: input, shape index: {}]
  %s11 = inlined_call_operand.hbm [shape: f32[1,256], index: 11, kind: input, shape index: {}]
  %s12 = inlined_call_operand.hbm [shape: f32[1,256], index: 12, kind: input, shape index: {}]
  %s13 = inlined_call_operand.vmem [shape: bf16[256,10], index: 13, kind: input, shape index: {}]
  %s14 = inlined_call_operand.hbm [shape: f32[1,10], index: 14, kind: input, shape index: {}]
  %s15 = inlined_call_operand.hbm [shape: f32[8,10], index: 15, kind: output, shape index: {}]
  %s16 = sld [smem:[#allocation0]]
  $region157: #{tpu_custom_call.1} parent=0
    _
  %s18 = ssub.s32 1, %s16
  %s19 = scalar_select 0, %s18, %s16
  $region1: #{tpu_custom_call.1} parent=0
    #allocation3 [shape = 'u8[24576]{0}', space=vmem, size = 0x6000, scoped, tag = 'input window, operand 0']
    #allocation4 [shape = 's32[2]{0}', space=sflag, size = 0x8, scoped, tag = 'scoped memory for tpu_custom_call.1']
    #allocation5 [shape = 's32[2]{0}', space=sflag, size = 0x8, scoped, tag = 'scoped memory for tpu_custom_call.1']
    #allocation6 [shape = 'u8[3145728]{0}', space=vmem, size = 0x300000, scoped, tag = 'input window, operand 1']
    #allocation7 [shape = 's32[2]{0}', space=sflag, size = 0x8, scoped, tag = 'scoped memory for tpu_custom_call.1']
    #allocation8 [shape = 'u8[4096]{0}', space=vmem, size = 0x1000, scoped, tag = 'input window, operand 2, single buffered']
    #allocation9 [shape = 'u8[4096]{0}', space=vmem, size = 0x1000, scoped, tag = 'input window, operand 3, single buffered']
    #allocation10 [shape = 's32[1]{0}', space=sflag, size = 0x4, scoped, tag = 'scoped memory for tpu_custom_call.1']
    #allocation11 [shape = 'u8[4096]{0}', space=vmem, size = 0x1000, scoped, tag = 'input window, operand 4, single buffered']
    #allocation12 [shape = 'u8[1048576]{0}', space=vmem, size = 0x100000, scoped, tag = 'input window, operand 5, single buffered']
    #allocation13 [shape = 's32[1]{0}', space=sflag, size = 0x4, scoped, tag = 'scoped memory for tpu_custom_call.1']
    #allocation14 [shape = 'u8[2048]{0}', space=vmem, size = 0x800, scoped, tag = 'input window, operand 6, single buffered']
    #allocation15 [shape = 'u8[2048]{0}', space=vmem, size = 0x800, scoped, tag = 'input window, operand 7, single buffered']
    #allocation16 [shape = 's32[1]{0}', space=sflag, size = 0x4, scoped, tag = 'scoped memory for tpu_custom_call.1']
    #allocation17 [shape = 'u8[2048]{0}', space=vmem, size = 0x800, scoped, tag = 'input window, operand 8, single buffered']
    #allocation18 [shape = 'u8[262144]{0}', space=vmem, size = 0x40000, scoped, tag = 'input window, operand 9, single buffered']
    #allocation19 [shape = 's32[1]{0}', space=sflag, size = 0x4, scoped, tag = 'scoped memory for tpu_custom_call.1']
    #allocation20 [shape = 'u8[1024]{0}', space=vmem, size = 0x400, scoped, tag = 'input window, operand 10, single buffered']
    #allocation21 [shape = 'u8[1024]{0}', space=vmem, size = 0x400, scoped, tag = 'input window, operand 11, single buffered']
    #allocation22 [shape = 's32[1]{0}', space=sflag, size = 0x4, scoped, tag = 'scoped memory for tpu_custom_call.1']
    #allocation23 [shape = 'u8[1024]{0}', space=vmem, size = 0x400, scoped, tag = 'input window, operand 12, single buffered']
    #allocation24 [shape = 'u8[512]{0}', space=vmem, size = 0x400, scoped, tag = 'input window, operand 14, single buffered']
    #allocation25 [shape = 's32[1]{0}', space=sflag, size = 0x4, scoped, tag = 'scoped memory for tpu_custom_call.1']
    #allocation26 [shape = 'u8[4096]{0}', space=vmem, size = 0x1000, scoped, tag = 'output window, operand 0, single buffered']
    %20 = vsyncpa [#allocation4], 0
    %s21 = scalar_lea.sflag [#allocation4], 1
    %22 = vsyncpa %s21, 0
    %23 = vsyncpa [#allocation7], 0
    %s24 = scalar_lea.sflag [#allocation7], 1
    %25 = vsyncpa %s24, 0
    %26 = vsyncpa [#allocation10], 0
    %27 = vsyncpa [#allocation13], 0
    %28 = vsyncpa [#allocation16], 0
    %29 = vsyncpa [#allocation19], 0
    %30 = vsyncpa [#allocation22], 0
    %31 = vsyncpa [#allocation25], 0
    %32 = vsyncpa [#allocation5], 0
    loop: start=0, step=1, limit=6
    $region2: #{tpu_custom_call.1} parent=1 // loop_pre_header
      _
    $region3: #{tpu_custom_call.1} parent=1 // loop_header
      %s34 = sphi 0, %s38
      %p35 = scmp.ge.s32.totalorder %s34, 6
      %s44 = sphi 0, %s46
      %s47 = sphi 0, %s44
      %s48 = sphi 0, %s47
      %s64 = sphi 0, %s48
      %s70 = sphi 0, %s72
      %s73 = sphi 0, %s70
      %s74 = sphi 0, %s73
      %s90 = sphi 0, %s74
      %s94 = sphi 0, %s94
      %s96 = sphi 0, %s94
      %s97 = sphi 0, %s96
      %s111 = sphi 0, %s97
      %s115 = sphi 0, %s115
      %s117 = sphi 0, %s115
      %s118 = sphi 0, %s117
      %s132 = sphi 0, %s118
      %s136 = sphi 0, %s136
      %s138 = sphi 0, %s136
      %s139 = sphi 0, %s138
      %s153 = sphi 0, %s139
      %s157 = sphi 0, %s157
      %s159 = sphi 0, %s157
      %s160 = sphi 0, %s159
      %s174 = sphi 0, %s160
      %s178 = sphi 0, %s178
      %s180 = sphi 0, %s178
      %s181 = sphi 0, %s180
      %s195 = sphi 0, %s181
      %s199 = sphi 0, %s199
      %s201 = sphi 0, %s199
      %s202 = sphi 0, %s201
      %s216 = sphi 0, %s202
      %s220 = sphi 0, %s220
      %s222 = sphi 0, %s220
      %s223 = sphi 0, %s222
      %s237 = sphi 0, %s223
      %s241 = sphi 0, %s241
      %s243 = sphi 0, %s241
      %s244 = sphi 0, %s243
      %s258 = sphi 0, %s244
      %s262 = sphi 0, %s262
      %s264 = sphi 0, %s262
      %s265 = sphi 0, %s264
      %s279 = sphi 0, %s265
      %s283 = sphi 0, %s283
      %s285 = sphi 0, %s283
      %s286 = sphi 0, %s285
      %s300 = sphi 0, %s286
      %s304 = sphi 0, %s304
      %s306 = sphi 0, %s304
      %s307 = sphi 0, %s306
      %s321 = sphi 0, %s307
      %s325 = sphi 0, %s325
      %s327 = sphi 0, %s325
      %s328 = sphi 0, %s327
      %s342 = sphi 0, %s328
      %s346 = sphi 0, %s346
      %s348 = sphi 0, %s346
      %s349 = sphi 0, %s348
      %s363 = sphi 0, %s349
      %s367 = sphi 0, %s367
      %s369 = sphi 0, %s367
      %s370 = sphi 0, %s369
      %s384 = sphi 0, %s370
    $region4: #{tpu_custom_call.1} parent=1 // loop_header_branch
      %37 = sbr.rel (%p35) target = $region8
    $region5: #{tpu_custom_call.1} parent=1 // loop_body
      %s39 = ssub.s32 %s34, 1
      %s40 = ssub.s32 %s34, 2
      %s41 = sadd.s32 %s34, 1
      %s42 = ssub.s32 %s34, %s41
      %p43 = scmp.eq.s32.totalorder %s42, 0
      %s45 = sadd.s32 %s44, 1
      %s46 = scalar_select %p43, %s44, %s45
      %p49 = pneg %p43
      %p50 = scmp.eq.s32.totalorder %s34, 3
      %p51 = por %p49, %p50
      %p52 = scmp.ne.s32.totalorder %s44, %s47
      %p53 = scmp.eq.s32.totalorder %s34, 0
      %p54 = por %p52, %p53
      %p55 = scmp.ne.s32.totalorder %s44, %s47
      %p56 = scmp.eq.s32.totalorder %s39, 3
      %p57 = por %p55, %p56
      %p58 = scmp.ne.s32.totalorder %s47, %s48
      %p59 = scmp.eq.s32.totalorder %s39, 0
      %p60 = por %p58, %p59
      %p61 = scmp.ne.s32.totalorder %s47, %s48
      %p62 = scmp.eq.s32.totalorder %s40, 3
      %p63 = por %p61, %p62
      %p65 = scmp.ne.s32.totalorder %s48, %s64
      %p66 = scmp.eq.s32.totalorder %s40, 0
      %p67 = por %p65, %p66
      %s68 = ssub.s32 %s34, %s41
      %p69 = scmp.eq.s32.totalorder %s68, 0
      %s71 = sadd.s32 %s70, 1
      %s72 = scalar_select %p69, %s70, %s71
      %p75 = pneg %p69
      %p76 = scmp.eq.s32.totalorder %s34, 3
      %p77 = por %p75, %p76
      %p78 = scmp.ne.s32.totalorder %s70, %s73
      %p79 = scmp.eq.s32.totalorder %s34, 0
      %p80 = por %p78, %p79
      %p81 = scmp.ne.s32.totalorder %s70, %s73
      %p82 = scmp.eq.s32.totalorder %s39, 3
      %p83 = por %p81, %p82
      %p84 = scmp.ne.s32.totalorder %s73, %s74
      %p85 = scmp.eq.s32.totalorder %s39, 0
      %p86 = por %p84, %p85
      %p87 = scmp.ne.s32.totalorder %s73, %s74
      %p88 = scmp.eq.s32.totalorder %s40, 3
      %p89 = por %p87, %p88
      %p91 = scmp.ne.s32.totalorder %s74, %s90
      %p92 = scmp.eq.s32.totalorder %s40, 0
      %p93 = por %p91, %p92
      %s95 = sadd.s32 %s94, 1
      %p98 = scmp.eq.s32.totalorder %s34, 3
      %p99 = scmp.ne.s32.totalorder %s94, %s96
      %p100 = scmp.eq.s32.totalorder %s34, 0
      %p101 = por %p99, %p100
      %p102 = scmp.ne.s32.totalorder %s94, %s96
      %p103 = scmp.eq.s32.totalorder %s39, 3
      %p104 = por %p102, %p103
      %p105 = scmp.ne.s32.totalorder %s96, %s97
      %p106 = scmp.eq.s32.totalorder %s39, 0
      %p107 = por %p105, %p106
      %p108 = scmp.ne.s32.totalorder %s96, %s97
      %p109 = scmp.eq.s32.totalorder %s40, 3
      %p110 = por %p108, %p109
      %p112 = scmp.ne.s32.totalorder %s97, %s111
      %p113 = scmp.eq.s32.totalorder %s40, 0
      %p114 = por %p112, %p113
      %s116 = sadd.s32 %s115, 1
      %p119 = scmp.eq.s32.totalorder %s34, 3
      %p120 = scmp.ne.s32.totalorder %s115, %s117
      %p121 = scmp.eq.s32.totalorder %s34, 0
      %p122 = por %p120, %p121
      %p123 = scmp.ne.s32.totalorder %s115, %s117
      %p124 = scmp.eq.s32.totalorder %s39, 3
      %p125 = por %p123, %p124
      %p126 = scmp.ne.s32.totalorder %s117, %s118
      %p127 = scmp.eq.s32.totalorder %s39, 0
      %p128 = por %p126, %p127
      %p129 = scmp.ne.s32.totalorder %s117, %s118
      %p130 = scmp.eq.s32.totalorder %s40, 3
      %p131 = por %p129, %p130
      %p133 = scmp.ne.s32.totalorder %s118, %s132
      %p134 = scmp.eq.s32.totalorder %s40, 0
      %p135 = por %p133, %p134
      %s137 = sadd.s32 %s136, 1
      %p140 = scmp.eq.s32.totalorder %s34, 3
      %p141 = scmp.ne.s32.totalorder %s136, %s138
      %p142 = scmp.eq.s32.totalorder %s34, 0
      %p143 = por %p141, %p142
      %p144 = scmp.ne.s32.totalorder %s136, %s138
      %p145 = scmp.eq.s32.totalorder %s39, 3
      %p146 = por %p144, %p145
      %p147 = scmp.ne.s32.totalorder %s138, %s139
      %p148 = scmp.eq.s32.totalorder %s39, 0
      %p149 = por %p147, %p148
      %p150 = scmp.ne.s32.totalorder %s138, %s139
      %p151 = scmp.eq.s32.totalorder %s40, 3
      %p152 = por %p150, %p151
      %p154 = scmp.ne.s32.totalorder %s139, %s153
      %p155 = scmp.eq.s32.totalorder %s40, 0
      %p156 = por %p154, %p155
      %s158 = sadd.s32 %s157, 1
      %p161 = scmp.eq.s32.totalorder %s34, 3
      %p162 = scmp.ne.s32.totalorder %s157, %s159
      %p163 = scmp.eq.s32.totalorder %s34, 0
      %p164 = por %p162, %p163
      %p165 = scmp.ne.s32.totalorder %s157, %s159
      %p166 = scmp.eq.s32.totalorder %s39, 3
      %p167 = por %p165, %p166
      %p168 = scmp.ne.s32.totalorder %s159, %s160
      %p169 = scmp.eq.s32.totalorder %s39, 0
      %p170 = por %p168, %p169
      %p171 = scmp.ne.s32.totalorder %s159, %s160
      %p172 = scmp.eq.s32.totalorder %s40, 3
      %p173 = por %p171, %p172
      %p175 = scmp.ne.s32.totalorder %s160, %s174
      %p176 = scmp.eq.s32.totalorder %s40, 0
      %p177 = por %p175, %p176
      %s179 = sadd.s32 %s178, 1
      %p182 = scmp.eq.s32.totalorder %s34, 3
      %p183 = scmp.ne.s32.totalorder %s178, %s180
      %p184 = scmp.eq.s32.totalorder %s34, 0
      %p185 = por %p183, %p184
      %p186 = scmp.ne.s32.totalorder %s178, %s180
      %p187 = scmp.eq.s32.totalorder %s39, 3
      %p188 = por %p186, %p187
      %p189 = scmp.ne.s32.totalorder %s180, %s181
      %p190 = scmp.eq.s32.totalorder %s39, 0
      %p191 = por %p189, %p190
      %p192 = scmp.ne.s32.totalorder %s180, %s181
      %p193 = scmp.eq.s32.totalorder %s40, 3
      %p194 = por %p192, %p193
      %p196 = scmp.ne.s32.totalorder %s181, %s195
      %p197 = scmp.eq.s32.totalorder %s40, 0
      %p198 = por %p196, %p197
      %s200 = sadd.s32 %s199, 1
      %p203 = scmp.eq.s32.totalorder %s34, 3
      %p204 = scmp.ne.s32.totalorder %s199, %s201
      %p205 = scmp.eq.s32.totalorder %s34, 0
      %p206 = por %p204, %p205
      %p207 = scmp.ne.s32.totalorder %s199, %s201
      %p208 = scmp.eq.s32.totalorder %s39, 3
      %p209 = por %p207, %p208
      %p210 = scmp.ne.s32.totalorder %s201, %s202
      %p211 = scmp.eq.s32.totalorder %s39, 0
      %p212 = por %p210, %p211
      %p213 = scmp.ne.s32.totalorder %s201, %s202
      %p214 = scmp.eq.s32.totalorder %s40, 3
      %p215 = por %p213, %p214
      %p217 = scmp.ne.s32.totalorder %s202, %s216
      %p218 = scmp.eq.s32.totalorder %s40, 0
      %p219 = por %p217, %p218
      %s221 = sadd.s32 %s220, 1
      %p224 = scmp.eq.s32.totalorder %s34, 3
      %p225 = scmp.ne.s32.totalorder %s220, %s222
      %p226 = scmp.eq.s32.totalorder %s34, 0
      %p227 = por %p225, %p226
      %p228 = scmp.ne.s32.totalorder %s220, %s222
      %p229 = scmp.eq.s32.totalorder %s39, 3
      %p230 = por %p228, %p229
      %p231 = scmp.ne.s32.totalorder %s222, %s223
      %p232 = scmp.eq.s32.totalorder %s39, 0
      %p233 = por %p231, %p232
      %p234 = scmp.ne.s32.totalorder %s222, %s223
      %p235 = scmp.eq.s32.totalorder %s40, 3
      %p236 = por %p234, %p235
      %p238 = scmp.ne.s32.totalorder %s223, %s237
      %p239 = scmp.eq.s32.totalorder %s40, 0
      %p240 = por %p238, %p239
      %s242 = sadd.s32 %s241, 1
      %p245 = scmp.eq.s32.totalorder %s34, 3
      %p246 = scmp.ne.s32.totalorder %s241, %s243
      %p247 = scmp.eq.s32.totalorder %s34, 0
      %p248 = por %p246, %p247
      %p249 = scmp.ne.s32.totalorder %s241, %s243
      %p250 = scmp.eq.s32.totalorder %s39, 3
      %p251 = por %p249, %p250
      %p252 = scmp.ne.s32.totalorder %s243, %s244
      %p253 = scmp.eq.s32.totalorder %s39, 0
      %p254 = por %p252, %p253
      %p255 = scmp.ne.s32.totalorder %s243, %s244
      %p256 = scmp.eq.s32.totalorder %s40, 3
      %p257 = por %p255, %p256
      %p259 = scmp.ne.s32.totalorder %s244, %s258
      %p260 = scmp.eq.s32.totalorder %s40, 0
      %p261 = por %p259, %p260
      %s263 = sadd.s32 %s262, 1
      %p266 = scmp.eq.s32.totalorder %s34, 3
      %p267 = scmp.ne.s32.totalorder %s262, %s264
      %p268 = scmp.eq.s32.totalorder %s34, 0
      %p269 = por %p267, %p268
      %p270 = scmp.ne.s32.totalorder %s262, %s264
      %p271 = scmp.eq.s32.totalorder %s39, 3
      %p272 = por %p270, %p271
      %p273 = scmp.ne.s32.totalorder %s264, %s265
      %p274 = scmp.eq.s32.totalorder %s39, 0
      %p275 = por %p273, %p274
      %p276 = scmp.ne.s32.totalorder %s264, %s265
      %p277 = scmp.eq.s32.totalorder %s40, 3
      %p278 = por %p276, %p277
      %p280 = scmp.ne.s32.totalorder %s265, %s279
      %p281 = scmp.eq.s32.totalorder %s40, 0
      %p282 = por %p280, %p281
      %s284 = sadd.s32 %s283, 1
      %p287 = scmp.eq.s32.totalorder %s34, 3
      %p288 = scmp.ne.s32.totalorder %s283, %s285
      %p289 = scmp.eq.s32.totalorder %s34, 0
      %p290 = por %p288, %p289
      %p291 = scmp.ne.s32.totalorder %s283, %s285
      %p292 = scmp.eq.s32.totalorder %s39, 3
      %p293 = por %p291, %p292
      %p294 = scmp.ne.s32.totalorder %s285, %s286
      %p295 = scmp.eq.s32.totalorder %s39, 0
      %p296 = por %p294, %p295
      %p297 = scmp.ne.s32.totalorder %s285, %s286
      %p298 = scmp.eq.s32.totalorder %s40, 3
      %p299 = por %p297, %p298
      %p301 = scmp.ne.s32.totalorder %s286, %s300
      %p302 = scmp.eq.s32.totalorder %s40, 0
      %p303 = por %p301, %p302
      %s305 = sadd.s32 %s304, 1
      %p308 = scmp.eq.s32.totalorder %s34, 3
      %p309 = scmp.ne.s32.totalorder %s304, %s306
      %p310 = scmp.eq.s32.totalorder %s34, 0
      %p311 = por %p309, %p310
      %p312 = scmp.ne.s32.totalorder %s304, %s306
      %p313 = scmp.eq.s32.totalorder %s39, 3
      %p314 = por %p312, %p313
      %p315 = scmp.ne.s32.totalorder %s306, %s307
      %p316 = scmp.eq.s32.totalorder %s39, 0
      %p317 = por %p315, %p316
      %p318 = scmp.ne.s32.totalorder %s306, %s307
      %p319 = scmp.eq.s32.totalorder %s40, 3
      %p320 = por %p318, %p319
      %p322 = scmp.ne.s32.totalorder %s307, %s321
      %p323 = scmp.eq.s32.totalorder %s40, 0
      %p324 = por %p322, %p323
      %s326 = sadd.s32 %s325, 1
      %p329 = scmp.eq.s32.totalorder %s34, 3
      %p330 = scmp.ne.s32.totalorder %s325, %s327
      %p331 = scmp.eq.s32.totalorder %s34, 0
      %p332 = por %p330, %p331
      %p333 = scmp.ne.s32.totalorder %s325, %s327
      %p334 = scmp.eq.s32.totalorder %s39, 3
      %p335 = por %p333, %p334
      %p336 = scmp.ne.s32.totalorder %s327, %s328
      %p337 = scmp.eq.s32.totalorder %s39, 0
      %p338 = por %p336, %p337
      %p339 = scmp.ne.s32.totalorder %s327, %s328
      %p340 = scmp.eq.s32.totalorder %s40, 3
      %p341 = por %p339, %p340
      %p343 = scmp.ne.s32.totalorder %s328, %s342
      %p344 = scmp.eq.s32.totalorder %s40, 0
      %p345 = por %p343, %p344
      %s347 = sadd.s32 %s346, 1
      %p350 = scmp.eq.s32.totalorder %s34, 3
      %p351 = scmp.ne.s32.totalorder %s346, %s348
      %p352 = scmp.eq.s32.totalorder %s34, 0
      %p353 = por %p351, %p352
      %p354 = scmp.ne.s32.totalorder %s346, %s348
      %p355 = scmp.eq.s32.totalorder %s39, 3
      %p356 = por %p354, %p355
      %p357 = scmp.ne.s32.totalorder %s348, %s349
      %p358 = scmp.eq.s32.totalorder %s39, 0
      %p359 = por %p357, %p358
      %p360 = scmp.ne.s32.totalorder %s348, %s349
      %p361 = scmp.eq.s32.totalorder %s40, 3
      %p362 = por %p360, %p361
      %p364 = scmp.ne.s32.totalorder %s349, %s363
      %p365 = scmp.eq.s32.totalorder %s40, 0
      %p366 = por %p364, %p365
      %s368 = sadd.s32 %s367, 1
      %p371 = scmp.eq.s32.totalorder %s34, 3
      %p372 = scmp.ne.s32.totalorder %s367, %s369
      %p373 = scmp.eq.s32.totalorder %s34, 0
      %p374 = por %p372, %p373
      %p375 = scmp.ne.s32.totalorder %s367, %s369
      %p376 = scmp.eq.s32.totalorder %s39, 3
      %p377 = por %p375, %p376
      %p378 = scmp.ne.s32.totalorder %s369, %s370
      %p379 = scmp.eq.s32.totalorder %s39, 0
      %p380 = por %p378, %p379
      %p381 = scmp.ne.s32.totalorder %s369, %s370
      %p382 = scmp.eq.s32.totalorder %s40, 3
      %p383 = por %p381, %p382
      %p385 = scmp.ne.s32.totalorder %s370, %s384
      %p386 = scmp.eq.s32.totalorder %s40, 0
      %p387 = por %p385, %p386
      %p388 = scmp.le.s32.totalorder 1, %s34
      %p389 = scmp.lt.s32.totalorder %s34, 5
      %p390 = pnand %p388, %p389
      %p391 = pneg %p390
      // Predicated region
      $region9: #{tpu_custom_call.1} parent=5 // pred_check
        _
      $region10: #{tpu_custom_call.1} parent=5 // pred_check_branch
        %393 = sbr.rel (%p390) target = $region12
      $region11: #{tpu_custom_call.1} parent=5 // pred_region
        %s394 = ssub.s32 %s34, 1
        // Predicated region
        $region13: #{tpu_custom_call.1} parent=11 // pred_check
          %p395 = pneg %p107
        $region14: #{tpu_custom_call.1} parent=11 // pred_check_branch
          %397 = sbr.rel (%p395) target = $region16
        $region15: #{tpu_custom_call.1} parent=11 // pred_region
          %s399 = ssub.s32 128, 128
          %400 = vsyncadd [#allocation7], %s399
          %s402 = sshll.u32 [#allocation8], 4
          %s403 = int_to_ptr.vmem [resolvable:$true] %s402
          %405 = dma.hbm_to_vmem [thread:$0]  %s2, 128, %s403, [#allocation7]
        $region16: #{tpu_custom_call.1} parent=11 // pred_fallthru
          _
        // Predicated region
        $region17: #{tpu_custom_call.1} parent=11 // pred_check
          %p406 = pneg %p128
        $region18: #{tpu_custom_call.1} parent=11 // pred_check_branch
          %408 = sbr.rel (%p406) target = $region20
        $region19: #{tpu_custom_call.1} parent=11 // pred_region
          %s410 = ssub.s32 128, 128
          %411 = vsyncadd [#allocation10], %s410
          %s413 = sshll.u32 [#allocation9], 4
          %s414 = int_to_ptr.vmem [resolvable:$true] %s413
          %416 = dma.hbm_to_vmem [thread:$0]  %s3, 128, %s414, [#allocation10]
        $region20: #{tpu_custom_call.1} parent=11 // pred_fallthru
          _
        // Predicated region
        $region21: #{tpu_custom_call.1} parent=11 // pred_check
          %p417 = pneg %p149
        $region22: #{tpu_custom_call.1} parent=11 // pred_check_branch
          %419 = sbr.rel (%p417) target = $region24
        $region23: #{tpu_custom_call.1} parent=11 // pred_region
          %s421 = ssub.s32 128, 128
          %422 = vsyncadd [#allocation10], %s421
          %s424 = sshll.u32 [#allocation11], 4
          %s425 = int_to_ptr.vmem [resolvable:$true] %s424
          %427 = dma.hbm_to_vmem [thread:$0]  %s4, 128, %s425, [#allocation10]
        $region24: #{tpu_custom_call.1} parent=11 // pred_fallthru
          _
        // Predicated region
        $region25: #{tpu_custom_call.1} parent=11 // pred_check
          %p428 = pneg %p170
        $region26: #{tpu_custom_call.1} parent=11 // pred_check_branch
          %430 = sbr.rel (%p428) target = $region28
        $region27: #{tpu_custom_call.1} parent=11 // pred_region
          %s432 = ssub.s32 32768, 32768
          %433 = vsyncadd [#allocation13], %s432
          %s434 = sshll.u32 [#allocation12], 4
          %s435 = int_to_ptr.vmem [resolvable:$true] %s434
          %440 = dma.hbm_to_vmem [thread:$0]  %s5, 32768, %s435, [#allocation13], 256, 256, 16
        $region28: #{tpu_custom_call.1} parent=11 // pred_fallthru
          _
        // Predicated region
        $region29: #{tpu_custom_call.1} parent=11 // pred_check
          %p441 = pneg %p191
        $region30: #{tpu_custom_call.1} parent=11 // pred_check_branch
          %443 = sbr.rel (%p441) target = $region32
        $region31: #{tpu_custom_call.1} parent=11 // pred_region
          %s445 = ssub.s32 64, 64
          %446 = vsyncadd [#allocation13], %s445
          %s448 = sshll.u32 [#allocation14], 4
          %s449 = int_to_ptr.vmem [resolvable:$true] %s448
          %451 = dma.hbm_to_vmem [thread:$0]  %s6, 64, %s449, [#allocation13]
        $region32: #{tpu_custom_call.1} parent=11 // pred_fallthru
          _
        // Predicated region
        $region33: #{tpu_custom_call.1} parent=11 // pred_check
          %p452 = pneg %p212
        $region34: #{tpu_custom_call.1} parent=11 // pred_check_branch
          %454 = sbr.rel (%p452) target = $region36
        $region35: #{tpu_custom_call.1} parent=11 // pred_region
          %s456 = ssub.s32 64, 64
          %457 = vsyncadd [#allocation16], %s456
          %s459 = sshll.u32 [#allocation15], 4
          %s460 = int_to_ptr.vmem [resolvable:$true] %s459
          %462 = dma.hbm_to_vmem [thread:$0]  %s7, 64, %s460, [#allocation16]
        $region36: #{tpu_custom_call.1} parent=11 // pred_fallthru
          _
        // Predicated region
        $region37: #{tpu_custom_call.1} parent=11 // pred_check
          %p463 = pneg %p233
        $region38: #{tpu_custom_call.1} parent=11 // pred_check_branch
          %465 = sbr.rel (%p463) target = $region40
        $region39: #{tpu_custom_call.1} parent=11 // pred_region
          %s467 = ssub.s32 64, 64
          %468 = vsyncadd [#allocation16], %s467
          %s470 = sshll.u32 [#allocation17], 4
          %s471 = int_to_ptr.vmem [resolvable:$true] %s470
          %473 = dma.hbm_to_vmem [thread:$0]  %s8, 64, %s471, [#allocation16]
        $region40: #{tpu_custom_call.1} parent=11 // pred_fallthru
          _
        // Predicated region
        $region41: #{tpu_custom_call.1} parent=11 // pred_check
          %p474 = pneg %p254
        $region42: #{tpu_custom_call.1} parent=11 // pred_check_branch
          %476 = sbr.rel (%p474) target = $region44
        $region43: #{tpu_custom_call.1} parent=11 // pred_region
          %s478 = ssub.s32 8192, 8192
          %479 = vsyncadd [#allocation19], %s478
          %s480 = sshll.u32 [#allocation18], 4
          %s481 = int_to_ptr.vmem [resolvable:$true] %s480
          %486 = dma.hbm_to_vmem [thread:$0]  %s9, 8192, %s481, [#allocation19], 128, 128, 8
        $region44: #{tpu_custom_call.1} parent=11 // pred_fallthru
          _
        // Predicated region
        $region45: #{tpu_custom_call.1} parent=11 // pred_check
          %p487 = pneg %p275
        $region46: #{tpu_custom_call.1} parent=11 // pred_check_branch
          %489 = sbr.rel (%p487) target = $region48
        $region47: #{tpu_custom_call.1} parent=11 // pred_region
          %s491 = ssub.s32 32, 32
          %492 = vsyncadd [#allocation19], %s491
          %s494 = sshll.u32 [#allocation20], 4
          %s495 = int_to_ptr.vmem [resolvable:$true] %s494
          %497 = dma.hbm_to_vmem [thread:$0]  %s10, 32, %s495, [#allocation19]
        $region48: #{tpu_custom_call.1} parent=11 // pred_fallthru
          _
        // Predicated region
        $region49: #{tpu_custom_call.1} parent=11 // pred_check
          %p498 = pneg %p296
        $region50: #{tpu_custom_call.1} parent=11 // pred_check_branch
          %500 = sbr.rel (%p498) target = $region52
        $region51: #{tpu_custom_call.1} parent=11 // pred_region
          %s502 = ssub.s32 32, 32
          %503 = vsyncadd [#allocation22], %s502
          %s505 = sshll.u32 [#allocation21], 4
          %s506 = int_to_ptr.vmem [resolvable:$true] %s505
          %508 = dma.hbm_to_vmem [thread:$0]  %s11, 32, %s506, [#allocation22]
        $region52: #{tpu_custom_call.1} parent=11 // pred_fallthru
          _
        // Predicated region
        $region53: #{tpu_custom_call.1} parent=11 // pred_check
          %p509 = pneg %p317
        $region54: #{tpu_custom_call.1} parent=11 // pred_check_branch
          %511 = sbr.rel (%p509) target = $region56
        $region55: #{tpu_custom_call.1} parent=11 // pred_region
          %s513 = ssub.s32 32, 32
          %514 = vsyncadd [#allocation22], %s513
          %s516 = sshll.u32 [#allocation23], 4
          %s517 = int_to_ptr.vmem [resolvable:$true] %s516
          %519 = dma.hbm_to_vmem [thread:$0]  %s12, 32, %s517, [#allocation22]
        $region56: #{tpu_custom_call.1} parent=11 // pred_fallthru
          _
        // Predicated region
        $region57: #{tpu_custom_call.1} parent=11 // pred_check
          %p520 = pneg %p338
        $region58: #{tpu_custom_call.1} parent=11 // pred_check_branch
          %522 = sbr.rel (%p520) target = $region60
        $region59: #{tpu_custom_call.1} parent=11 // pred_region
          _
        $region60: #{tpu_custom_call.1} parent=11 // pred_fallthru
          _
        // Predicated region
        $region61: #{tpu_custom_call.1} parent=11 // pred_check
          %p523 = pneg %p359
        $region62: #{tpu_custom_call.1} parent=11 // pred_check_branch
          %525 = sbr.rel (%p523) target = $region64
        $region63: #{tpu_custom_call.1} parent=11 // pred_region
          %s527 = ssub.s32 16, 16
          %528 = vsyncadd [#allocation25], %s527
          %s530 = sshll.u32 [#allocation24], 4
          %s531 = int_to_ptr.vmem [resolvable:$true] %s530
          %533 = dma.hbm_to_vmem [thread:$0]  %s14, 16, %s531, [#allocation25]
        $region64: #{tpu_custom_call.1} parent=11 // pred_fallthru
          _
      $region12: #{tpu_custom_call.1} parent=5 // pred_fallthru
        _
      %p534 = scmp.lt.s32.totalorder %s34, 4
      // Predicated region
      $region65: #{tpu_custom_call.1} parent=5 // pred_check
        %p535 = pneg %p534
      $region66: #{tpu_custom_call.1} parent=5 // pred_check_branch
        %537 = sbr.rel (%p535) target = $region68
      $region67: #{tpu_custom_call.1} parent=5 // pred_region
        // Predicated region
        $region69: #{tpu_custom_call.1} parent=67 // pred_check
          %p538 = pneg %p54
        $region70: #{tpu_custom_call.1} parent=67 // pred_check_branch
          %540 = sbr.rel (%p538) target = $region72
        $region71: #{tpu_custom_call.1} parent=67 // pred_region
          %s541 = sand.u32 %s44, 1
          %s542 = scalar_lea.sflag [#allocation4], %s541
          %s543 = sand.u32 %s44, 1
          %s544 = smul.addr %s543, 24
          %s545 = scalar_lea.vmem [#allocation3], %s544
          %s546 = smul.u32 6, %s34
          %s548 = ssub.s32 384, 384
          %549 = vsyncadd %s542, %s548
          %s550 = smul.addr %s546, 64
          %s551 = scalar_lea.hbm %s0, %s550
          %s553 = sshll.u32 %s545, 4
          %s554 = int_to_ptr.vmem [resolvable:$true] %s553
          %556 = dma.hbm_to_vmem [thread:$0]  %s551, 384, %s554, %s542
        $region72: #{tpu_custom_call.1} parent=67 // pred_fallthru
          _
        // Predicated region
        $region73: #{tpu_custom_call.1} parent=67 // pred_check
          %p557 = pneg %p80
        $region74: #{tpu_custom_call.1} parent=67 // pred_check_branch
          %559 = sbr.rel (%p557) target = $region76
        $region75: #{tpu_custom_call.1} parent=67 // pred_region
          %s560 = sand.u32 %s34, 1
          %s561 = scalar_lea.sflag [#allocation7], %s560
          %s562 = sand.u32 %s70, 1
          %s563 = smul.addr %s562, 3072
          %s564 = scalar_lea.vmem [#allocation6], %s563
          %s565 = smul.u32 96, %s34
          %s567 = ssub.s32 49152, 49152
          %568 = vsyncadd %s561, %s567
          %s569 = smul.addr %s565, 8
          %s570 = smul.addr %s569, 64
          %s571 = scalar_lea.hbm %s1, %s570
          %s572 = sshll.u32 %s564, 4
          %s573 = int_to_ptr.vmem [resolvable:$true] %s572
          %578 = dma.hbm_to_vmem [thread:$0]  %s571, 49152, %s573, %s561, 512, 512, 32
        $region76: #{tpu_custom_call.1} parent=67 // pred_fallthru
          _
      $region68: #{tpu_custom_call.1} parent=5 // pred_fallthru
        _
      %p579 = scmp.le.s32.totalorder 1, %s34
      %p580 = scmp.lt.s32.totalorder %s34, 5
      %p581 = pnand %p579, %p580
      %p582 = pneg %p581
      // Predicated region
      $region77: #{tpu_custom_call.1} parent=5 // pred_check
        _
      $region78: #{tpu_custom_call.1} parent=5 // pred_check_branch
        %584 = sbr.rel (%p581) target = $region80
      $region79: #{tpu_custom_call.1} parent=5 // pred_region
        %s585 = ssub.s32 %s34, 1
        %s586 = sand.u32 %s47, 1
        %s587 = scalar_lea.sflag [#allocation4], %s586
        %s588 = sand.u32 %s47, 1
        %s589 = smul.addr %s588, 24
        %s590 = scalar_lea.vmem [#allocation3], %s589
        // Predicated region
        $region81: #{tpu_custom_call.1} parent=79 // pred_check
          %p591 = pneg %p60
        $region82: #{tpu_custom_call.1} parent=79 // pred_check_branch
          %593 = sbr.rel (%p591) target = $region84
        $region83: #{tpu_custom_call.1} parent=79 // pred_region
          %594 = dma.done %s587, 384
        $region84: #{tpu_custom_call.1} parent=79 // pred_fallthru
          _
        %s595 = sand.u32 %s39, 1
        %s596 = scalar_lea.sflag [#allocation7], %s595
        %s597 = sand.u32 %s73, 1
        %s598 = smul.addr %s597, 3072
        %s599 = scalar_lea.vmem [#allocation6], %s598
        // Predicated region
        $region85: #{tpu_custom_call.1} parent=79 // pred_check
          %p600 = pneg %p86
        $region86: #{tpu_custom_call.1} parent=79 // pred_check_branch
          %602 = sbr.rel (%p600) target = $region88
        $region87: #{tpu_custom_call.1} parent=79 // pred_region
          %603 = dma.done %s596, 49152
        $region88: #{tpu_custom_call.1} parent=79 // pred_fallthru
          _
        // Predicated region
        $region89: #{tpu_custom_call.1} parent=79 // pred_check
          %p604 = pneg %p107
        $region90: #{tpu_custom_call.1} parent=79 // pred_check_branch
          %606 = sbr.rel (%p604) target = $region92
        $region91: #{tpu_custom_call.1} parent=79 // pred_region
          %607 = dma.done [#allocation7], 128
        $region92: #{tpu_custom_call.1} parent=79 // pred_fallthru
          _
        // Predicated region
        $region93: #{tpu_custom_call.1} parent=79 // pred_check
          %p608 = pneg %p128
        $region94: #{tpu_custom_call.1} parent=79 // pred_check_branch
          %610 = sbr.rel (%p608) target = $region96
        $region95: #{tpu_custom_call.1} parent=79 // pred_region
          %611 = dma.done [#allocation10], 128
        $region96: #{tpu_custom_call.1} parent=79 // pred_fallthru
          _
        // Predicated region
        $region97: #{tpu_custom_call.1} parent=79 // pred_check
          %p612 = pneg %p149
        $region98: #{tpu_custom_call.1} parent=79 // pred_check_branch
          %614 = sbr.rel (%p612) target = $region100
        $region99: #{tpu_custom_call.1} parent=79 // pred_region
          %615 = dma.done [#allocation10], 128
        $region100: #{tpu_custom_call.1} parent=79 // pred_fallthru
          _
        // Predicated region
        $region101: #{tpu_custom_call.1} parent=79 // pred_check
          %p616 = pneg %p170
        $region102: #{tpu_custom_call.1} parent=79 // pred_check_branch
          %618 = sbr.rel (%p616) target = $region104
        $region103: #{tpu_custom_call.1} parent=79 // pred_region
          %619 = dma.done [#allocation13], 32768
        $region104: #{tpu_custom_call.1} parent=79 // pred_fallthru
          _
        // Predicated region
        $region105: #{tpu_custom_call.1} parent=79 // pred_check
          %p620 = pneg %p191
        $region106: #{tpu_custom_call.1} parent=79 // pred_check_branch
          %622 = sbr.rel (%p620) target = $region108
        $region107: #{tpu_custom_call.1} parent=79 // pred_region
          %623 = dma.done [#allocation13], 64
        $region108: #{tpu_custom_call.1} parent=79 // pred_fallthru
          _
        // Predicated region
        $region109: #{tpu_custom_call.1} parent=79 // pred_check
          %p624 = pneg %p212
        $region110: #{tpu_custom_call.1} parent=79 // pred_check_branch
          %626 = sbr.rel (%p624) target = $region112
        $region111: #{tpu_custom_call.1} parent=79 // pred_region
          %627 = dma.done [#allocation16], 64
        $region112: #{tpu_custom_call.1} parent=79 // pred_fallthru
          _
        // Predicated region
        $region113: #{tpu_custom_call.1} parent=79 // pred_check
          %p628 = pneg %p233
        $region114: #{tpu_custom_call.1} parent=79 // pred_check_branch
          %630 = sbr.rel (%p628) target = $region116
        $region115: #{tpu_custom_call.1} parent=79 // pred_region
          %631 = dma.done [#allocation16], 64
        $region116: #{tpu_custom_call.1} parent=79 // pred_fallthru
          _
        // Predicated region
        $region117: #{tpu_custom_call.1} parent=79 // pred_check
          %p632 = pneg %p254
        $region118: #{tpu_custom_call.1} parent=79 // pred_check_branch
          %634 = sbr.rel (%p632) target = $region120
        $region119: #{tpu_custom_call.1} parent=79 // pred_region
          %635 = dma.done [#allocation19], 8192
        $region120: #{tpu_custom_call.1} parent=79 // pred_fallthru
          _
        // Predicated region
        $region121: #{tpu_custom_call.1} parent=79 // pred_check
          %p636 = pneg %p275
        $region122: #{tpu_custom_call.1} parent=79 // pred_check_branch
          %638 = sbr.rel (%p636) target = $region124
        $region123: #{tpu_custom_call.1} parent=79 // pred_region
          %639 = dma.done [#allocation19], 32
        $region124: #{tpu_custom_call.1} parent=79 // pred_fallthru
          _
        // Predicated region
        $region125: #{tpu_custom_call.1} parent=79 // pred_check
          %p640 = pneg %p296
        $region126: #{tpu_custom_call.1} parent=79 // pred_check_branch
          %642 = sbr.rel (%p640) target = $region128
        $region127: #{tpu_custom_call.1} parent=79 // pred_region
          %643 = dma.done [#allocation22], 32
        $region128: #{tpu_custom_call.1} parent=79 // pred_fallthru
          _
        // Predicated region
        $region129: #{tpu_custom_call.1} parent=79 // pred_check
          %p644 = pneg %p317
        $region130: #{tpu_custom_call.1} parent=79 // pred_check_branch
          %646 = sbr.rel (%p644) target = $region132
        $region131: #{tpu_custom_call.1} parent=79 // pred_region
          %647 = dma.done [#allocation22], 32
        $region132: #{tpu_custom_call.1} parent=79 // pred_fallthru
          _
        // Predicated region
        $region133: #{tpu_custom_call.1} parent=79 // pred_check
          %p648 = pneg %p359
        $region134: #{tpu_custom_call.1} parent=79 // pred_check_branch
          %650 = sbr.rel (%p648) target = $region136
        $region135: #{tpu_custom_call.1} parent=79 // pred_region
          %651 = dma.done [#allocation25], 16
        $region136: #{tpu_custom_call.1} parent=79 // pred_fallthru
          _
        %s652 = sand.u32 %s47, 1
        %s653 = scalar_lea.sflag [#allocation4], %s652
        %s654 = sand.u32 %s47, 1
        %s655 = smul.addr %s654, 24
        %s656 = scalar_lea.vmem [#allocation3], %s655
        %p657 = pneg %p60
        %p658 = pneg %p57
        %s659 = sand.u32 %s39, 1
        %s660 = scalar_lea.sflag [#allocation7], %s659
        %s661 = sand.u32 %s73, 1
        %s662 = smul.addr %s661, 3072
        %s663 = scalar_lea.vmem [#allocation6], %s662
        %p664 = pneg %p86
        %p665 = pneg %p83
        %p666 = pneg %p107
        %p667 = pneg %p104
        %p668 = pneg %p128
        %p669 = pneg %p125
        %p670 = pneg %p149
        %p671 = pneg %p146
        %p672 = pneg %p170
        %p673 = pneg %p167
        %p674 = pneg %p191
        %p675 = pneg %p188
        %p676 = pneg %p212
        %p677 = pneg %p209
        %p678 = pneg %p233
        %p679 = pneg %p230
        %p680 = pneg %p254
        %p681 = pneg %p251
        %p682 = pneg %p275
        %p683 = pneg %p272
        %p684 = pneg %p296
        %p685 = pneg %p293
        %p686 = pneg %p317
        %p687 = pneg %p314
        %p688 = pneg %p338
        %p689 = pneg %p335
        %p690 = pneg %p359
        %p691 = pneg %p356
        %p692 = pneg %p380
        %p693 = pneg %p377
        %s694 = smul.u32 6, %s39
        %s695 = smul.u32 96, %s39
        %p697 = scmp.eq.s32.totalorder %s39, 0
        // Predicated region
        $region137: #{tpu_custom_call.1} parent=79 // pred_check
          %p698 = pneg %p697
        $region138: #{tpu_custom_call.1} parent=79 // pred_check_branch
          %700 = sbr.rel (%p698) target = $region140
        $region139: #{tpu_custom_call.1} parent=79 // pred_region
          %701 = vst [vmem:[#allocation2] sm:$0xff] 0.0
          %702 = vst [vmem:[#allocation2 + $0x8] sm:$0xff] 0.0
          %703 = vst [vmem:[#allocation2 + $0x10] sm:$0xff] 0.0
          %704 = vst [vmem:[#allocation2 + $0x18] sm:$0xff] 0.0
          %705 = vst [vmem:[#allocation2 + $0x20] sm:$0xff] 0.0
          %706 = vst [vmem:[#allocation2 + $0x28] sm:$0xff] 0.0
          %707 = vst [vmem:[#allocation2 + $0x30] sm:$0xff] 0.0
          %708 = vst [vmem:[#allocation2 + $0x38] sm:$0xff] 0.0
        $region140: #{tpu_custom_call.1} parent=79 // pred_fallthru
          _
        %v709 = vld [vmem:[#allocation2] sm:$0xff]
        %v710 = vld [vmem:[#allocation2 + $0x8] sm:$0xff]
        %v711 = vld [vmem:[#allocation2 + $0x10] sm:$0xff]
        %v712 = vld [vmem:[#allocation2 + $0x18] sm:$0xff]
        %v713 = vld [vmem:[#allocation2 + $0x20] sm:$0xff]
        %v714 = vld [vmem:[#allocation2 + $0x28] sm:$0xff]
        %v715 = vld [vmem:[#allocation2 + $0x30] sm:$0xff]
        %v716 = vld [vmem:[#allocation2 + $0x38] sm:$0xff]
        %v717 = vld [vmem:[%s590] sm:$0xff]
        %v718 = vld [vmem:[%s590 + $0x8] sm:$0xff]
        %v719 = vld [vmem:[%s590 + $0x10] sm:$0xff]
        %v720 = vld [vmem:[%s599] sm:$0xff]
        %v721 = vld [vmem:[%s599 + $0x8] sm:$0xff]
        %v722 = vld [vmem:[%s599 + $0x10] sm:$0xff]
        %v723 = vld [vmem:[%s599 + $0x18] sm:$0xff]
        %v724 = vld [vmem:[%s599 + $0x20] sm:$0xff]
        %v725 = vld [vmem:[%s599 + $0x28] sm:$0xff]
        %v726 = vld [vmem:[%s599 + $0x30] sm:$0xff]
        %v727 = vld [vmem:[%s599 + $0x38] sm:$0xff]
        %v728 = vld [vmem:[%s599 + $0x40] sm:$0xff]
        %v729 = vld [vmem:[%s599 + $0x48] sm:$0xff]
        %v730 = vld [vmem:[%s599 + $0x50] sm:$0xff]
        %v731 = vld [vmem:[%s599 + $0x58] sm:$0xff]
        %v732 = vld [vmem:[%s599 + $0x60] sm:$0xff]
        %v733 = vld [vmem:[%s599 + $0x68] sm:$0xff]
        %v734 = vld [vmem:[%s599 + $0x70] sm:$0xff]
        %v735 = vld [vmem:[%s599 + $0x78] sm:$0xff]
        %v736 = vld [vmem:[%s599 + $0x80] sm:$0xff]
        %v737 = vld [vmem:[%s599 + $0x88] sm:$0xff]
        %v738 = vld [vmem:[%s599 + $0x90] sm:$0xff]
        %v739 = vld [vmem:[%s599 + $0x98] sm:$0xff]
        %v740 = vld [vmem:[%s599 + $0xa0] sm:$0xff]
        %v741 = vld [vmem:[%s599 + $0xa8] sm:$0xff]
        %v742 = vld [vmem:[%s599 + $0xb0] sm:$0xff]
        %v743 = vld [vmem:[%s599 + $0xb8] sm:$0xff]
        %v744 = vld [vmem:[%s599 + $0xc0] sm:$0xff]
        %v745 = vld [vmem:[%s599 + $0xc8] sm:$0xff]
        %v746 = vld [vmem:[%s599 + $0xd0] sm:$0xff]
        %v747 = vld [vmem:[%s599 + $0xd8] sm:$0xff]
        %v748 = vld [vmem:[%s599 + $0xe0] sm:$0xff]
        %v749 = vld [vmem:[%s599 + $0xe8] sm:$0xff]
        %v750 = vld [vmem:[%s599 + $0xf0] sm:$0xff]
        %v751 = vld [vmem:[%s599 + $0xf8] sm:$0xff]
        %v752 = vld [vmem:[%s599 + $0x100] sm:$0xff]
        %v753 = vld [vmem:[%s599 + $0x108] sm:$0xff]
        %v754 = vld [vmem:[%s599 + $0x110] sm:$0xff]
        %v755 = vld [vmem:[%s599 + $0x118] sm:$0xff]
        %v756 = vld [vmem:[%s599 + $0x120] sm:$0xff]
        %v757 = vld [vmem:[%s599 + $0x128] sm:$0xff]
        %v758 = vld [vmem:[%s599 + $0x130] sm:$0xff]
        %v759 = vld [vmem:[%s599 + $0x138] sm:$0xff]
        %v760 = vld [vmem:[%s599 + $0x140] sm:$0xff]
        %v761 = vld [vmem:[%s599 + $0x148] sm:$0xff]
        %v762 = vld [vmem:[%s599 + $0x150] sm:$0xff]
        %v763 = vld [vmem:[%s599 + $0x158] sm:$0xff]
        %v764 = vld [vmem:[%s599 + $0x160] sm:$0xff]
        %v765 = vld [vmem:[%s599 + $0x168] sm:$0xff]
        %v766 = vld [vmem:[%s599 + $0x170] sm:$0xff]
        %v767 = vld [vmem:[%s599 + $0x178] sm:$0xff]
        %v768 = vld [vmem:[%s599 + $0x180] sm:$0xff]
        %v769 = vld [vmem:[%s599 + $0x188] sm:$0xff]
        %v770 = vld [vmem:[%s599 + $0x190] sm:$0xff]
        %v771 = vld [vmem:[%s599 + $0x198] sm:$0xff]
        %v772 = vld [vmem:[%s599 + $0x1a0] sm:$0xff]
        %v773 = vld [vmem:[%s599 + $0x1a8] sm:$0xff]
        %v774 = vld [vmem:[%s599 + $0x1b0] sm:$0xff]
        %v775 = vld [vmem:[%s599 + $0x1b8] sm:$0xff]
        %v776 = vld [vmem:[%s599 + $0x1c0] sm:$0xff]
        %v777 = vld [vmem:[%s599 + $0x1c8] sm:$0xff]
        %v778 = vld [vmem:[%s599 + $0x1d0] sm:$0xff]
        %v779 = vld [vmem:[%s599 + $0x1d8] sm:$0xff]
        %v780 = vld [vmem:[%s599 + $0x1e0] sm:$0xff]
        %v781 = vld [vmem:[%s599 + $0x1e8] sm:$0xff]
        %v782 = vld [vmem:[%s599 + $0x1f0] sm:$0xff]
        %v783 = vld [vmem:[%s599 + $0x1f8] sm:$0xff]
        %v784 = vld [vmem:[%s599 + $0x200] sm:$0xff]
        %v785 = vld [vmem:[%s599 + $0x208] sm:$0xff]
        %v786 = vld [vmem:[%s599 + $0x210] sm:$0xff]
        %v787 = vld [vmem:[%s599 + $0x218] sm:$0xff]
        %v788 = vld [vmem:[%s599 + $0x220] sm:$0xff]
        %v789 = vld [vmem:[%s599 + $0x228] sm:$0xff]
        %v790 = vld [vmem:[%s599 + $0x230] sm:$0xff]
        %v791 = vld [vmem:[%s599 + $0x238] sm:$0xff]
        %v792 = vld [vmem:[%s599 + $0x240] sm:$0xff]
        %v793 = vld [vmem:[%s599 + $0x248] sm:$0xff]
        %v794 = vld [vmem:[%s599 + $0x250] sm:$0xff]
        %v795 = vld [vmem:[%s599 + $0x258] sm:$0xff]
        %v796 = vld [vmem:[%s599 + $0x260] sm:$0xff]
        %v797 = vld [vmem:[%s599 + $0x268] sm:$0xff]
        %v798 = vld [vmem:[%s599 + $0x270] sm:$0xff]
        %v799 = vld [vmem:[%s599 + $0x278] sm:$0xff]
        %v800 = vld [vmem:[%s599 + $0x280] sm:$0xff]
        %v801 = vld [vmem:[%s599 + $0x288] sm:$0xff]
        %v802 = vld [vmem:[%s599 + $0x290] sm:$0xff]
        %v803 = vld [vmem:[%s599 + $0x298] sm:$0xff]
        %v804 = vld [vmem:[%s599 + $0x2a0] sm:$0xff]
        %v805 = vld [vmem:[%s599 + $0x2a8] sm:$0xff]
        %v806 = vld [vmem:[%s599 + $0x2b0] sm:$0xff]
        %v807 = vld [vmem:[%s599 + $0x2b8] sm:$0xff]
        %v808 = vld [vmem:[%s599 + $0x2c0] sm:$0xff]
        %v809 = vld [vmem:[%s599 + $0x2c8] sm:$0xff]
        %v810 = vld [vmem:[%s599 + $0x2d0] sm:$0xff]
        %v811 = vld [vmem:[%s599 + $0x2d8] sm:$0xff]
        %v812 = vld [vmem:[%s599 + $0x2e0] sm:$0xff]
        %v813 = vld [vmem:[%s599 + $0x2e8] sm:$0xff]
        %v814 = vld [vmem:[%s599 + $0x2f0] sm:$0xff]
        %v815 = vld [vmem:[%s599 + $0x2f8] sm:$0xff]
        %v816 = vld [vmem:[%s599 + $0x300] sm:$0xff]
        %v817 = vld [vmem:[%s599 + $0x308] sm:$0xff]
        %v818 = vld [vmem:[%s599 + $0x310] sm:$0xff]
        %v819 = vld [vmem:[%s599 + $0x318] sm:$0xff]
        %v820 = vld [vmem:[%s599 + $0x320] sm:$0xff]
        %v821 = vld [vmem:[%s599 + $0x328] sm:$0xff]
        %v822 = vld [vmem:[%s599 + $0x330] sm:$0xff]
        %v823 = vld [vmem:[%s599 + $0x338] sm:$0xff]
        %v824 = vld [vmem:[%s599 + $0x340] sm:$0xff]
        %v825 = vld [vmem:[%s599 + $0x348] sm:$0xff]
        %v826 = vld [vmem:[%s599 + $0x350] sm:$0xff]
        %v827 = vld [vmem:[%s599 + $0x358] sm:$0xff]
        %v828 = vld [vmem:[%s599 + $0x360] sm:$0xff]
        %v829 = vld [vmem:[%s599 + $0x368] sm:$0xff]
        %v830 = vld [vmem:[%s599 + $0x370] sm:$0xff]
        %v831 = vld [vmem:[%s599 + $0x378] sm:$0xff]
        %v832 = vld [vmem:[%s599 + $0x380] sm:$0xff]
        %v833 = vld [vmem:[%s599 + $0x388] sm:$0xff]
        %v834 = vld [vmem:[%s599 + $0x390] sm:$0xff]
        %v835 = vld [vmem:[%s599 + $0x398] sm:$0xff]
        %v836 = vld [vmem:[%s599 + $0x3a0] sm:$0xff]
        %v837 = vld [vmem:[%s599 + $0x3a8] sm:$0xff]
        %v838 = vld [vmem:[%s599 + $0x3b0] sm:$0xff]
        %v839 = vld [vmem:[%s599 + $0x3b8] sm:$0xff]
        %v840 = vld [vmem:[%s599 + $0x3c0] sm:$0xff]
        %v841 = vld [vmem:[%s599 + $0x3c8] sm:$0xff]
        %v842 = vld [vmem:[%s599 + $0x3d0] sm:$0xff]
        %v843 = vld [vmem:[%s599 + $0x3d8] sm:$0xff]
        %v844 = vld [vmem:[%s599 + $0x3e0] sm:$0xff]
        %v845 = vld [vmem:[%s599 + $0x3e8] sm:$0xff]
        %v846 = vld [vmem:[%s599 + $0x3f0] sm:$0xff]
        %v847 = vld [vmem:[%s599 + $0x3f8] sm:$0xff]
        %v848 = vld [vmem:[%s599 + $0x400] sm:$0xff]
        %v849 = vld [vmem:[%s599 + $0x408] sm:$0xff]
        %v850 = vld [vmem:[%s599 + $0x410] sm:$0xff]
        %v851 = vld [vmem:[%s599 + $0x418] sm:$0xff]
        %v852 = vld [vmem:[%s599 + $0x420] sm:$0xff]
        %v853 = vld [vmem:[%s599 + $0x428] sm:$0xff]
        %v854 = vld [vmem:[%s599 + $0x430] sm:$0xff]
        %v855 = vld [vmem:[%s599 + $0x438] sm:$0xff]
        %v856 = vld [vmem:[%s599 + $0x440] sm:$0xff]
        %v857 = vld [vmem:[%s599 + $0x448] sm:$0xff]
        %v858 = vld [vmem:[%s599 + $0x450] sm:$0xff]
        %v859 = vld [vmem:[%s599 + $0x458] sm:$0xff]
        %v860 = vld [vmem:[%s599 + $0x460] sm:$0xff]
        %v861 = vld [vmem:[%s599 + $0x468] sm:$0xff]
        %v862 = vld [vmem:[%s599 + $0x470] sm:$0xff]
        %v863 = vld [vmem:[%s599 + $0x478] sm:$0xff]
        %v864 = vld [vmem:[%s599 + $0x480] sm:$0xff]
        %v865 = vld [vmem:[%s599 + $0x488] sm:$0xff]
        %v866 = vld [vmem:[%s599 + $0x490] sm:$0xff]
        %v867 = vld [vmem:[%s599 + $0x498] sm:$0xff]
        %v868 = vld [vmem:[%s599 + $0x4a0] sm:$0xff]
        %v869 = vld [vmem:[%s599 + $0x4a8] sm:$0xff]
        %v870 = vld [vmem:[%s599 + $0x4b0] sm:$0xff]
        %v871 = vld [vmem:[%s599 + $0x4b8] sm:$0xff]
        %v872 = vld [vmem:[%s599 + $0x4c0] sm:$0xff]
        %v873 = vld [vmem:[%s599 + $0x4c8] sm:$0xff]
        %v874 = vld [vmem:[%s599 + $0x4d0] sm:$0xff]
        %v875 = vld [vmem:[%s599 + $0x4d8] sm:$0xff]
        %v876 = vld [vmem:[%s599 + $0x4e0] sm:$0xff]
        %v877 = vld [vmem:[%s599 + $0x4e8] sm:$0xff]
        %v878 = vld [vmem:[%s599 + $0x4f0] sm:$0xff]
        %v879 = vld [vmem:[%s599 + $0x4f8] sm:$0xff]
        %v880 = vld [vmem:[%s599 + $0x500] sm:$0xff]
        %v881 = vld [vmem:[%s599 + $0x508] sm:$0xff]
        %v882 = vld [vmem:[%s599 + $0x510] sm:$0xff]
        %v883 = vld [vmem:[%s599 + $0x518] sm:$0xff]
        %v884 = vld [vmem:[%s599 + $0x520] sm:$0xff]
        %v885 = vld [vmem:[%s599 + $0x528] sm:$0xff]
        %v886 = vld [vmem:[%s599 + $0x530] sm:$0xff]
        %v887 = vld [vmem:[%s599 + $0x538] sm:$0xff]
        %v888 = vld [vmem:[%s599 + $0x540] sm:$0xff]
        %v889 = vld [vmem:[%s599 + $0x548] sm:$0xff]
        %v890 = vld [vmem:[%s599 + $0x550] sm:$0xff]
        %v891 = vld [vmem:[%s599 + $0x558] sm:$0xff]
        %v892 = vld [vmem:[%s599 + $0x560] sm:$0xff]
        %v893 = vld [vmem:[%s599 + $0x568] sm:$0xff]
        %v894 = vld [vmem:[%s599 + $0x570] sm:$0xff]
        %v895 = vld [vmem:[%s599 + $0x578] sm:$0xff]
        %v896 = vld [vmem:[%s599 + $0x580] sm:$0xff]
        %v897 = vld [vmem:[%s599 + $0x588] sm:$0xff]
        %v898 = vld [vmem:[%s599 + $0x590] sm:$0xff]
        %v899 = vld [vmem:[%s599 + $0x598] sm:$0xff]
        %v900 = vld [vmem:[%s599 + $0x5a0] sm:$0xff]
        %v901 = vld [vmem:[%s599 + $0x5a8] sm:$0xff]
        %v902 = vld [vmem:[%s599 + $0x5b0] sm:$0xff]
        %v903 = vld [vmem:[%s599 + $0x5b8] sm:$0xff]
        %v904 = vld [vmem:[%s599 + $0x5c0] sm:$0xff]
        %v905 = vld [vmem:[%s599 + $0x5c8] sm:$0xff]
        %v906 = vld [vmem:[%s599 + $0x5d0] sm:$0xff]
        %v907 = vld [vmem:[%s599 + $0x5d8] sm:$0xff]
        %v908 = vld [vmem:[%s599 + $0x5e0] sm:$0xff]
        %v909 = vld [vmem:[%s599 + $0x5e8] sm:$0xff]
        %v910 = vld [vmem:[%s599 + $0x5f0] sm:$0xff]
        %v911 = vld [vmem:[%s599 + $0x5f8] sm:$0xff]
        %v912 = vld [vmem:[%s599 + $0x600] sm:$0xff]
        %v913 = vld [vmem:[%s599 + $0x608] sm:$0xff]
        %v914 = vld [vmem:[%s599 + $0x610] sm:$0xff]
        %v915 = vld [vmem:[%s599 + $0x618] sm:$0xff]
        %v916 = vld [vmem:[%s599 + $0x620] sm:$0xff]
        %v917 = vld [vmem:[%s599 + $0x628] sm:$0xff]
        %v918 = vld [vmem:[%s599 + $0x630] sm:$0xff]
        %v919 = vld [vmem:[%s599 + $0x638] sm:$0xff]
        %v920 = vld [vmem:[%s599 + $0x640] sm:$0xff]
        %v921 = vld [vmem:[%s599 + $0x648] sm:$0xff]
        %v922 = vld [vmem:[%s599 + $0x650] sm:$0xff]
        %v923 = vld [vmem:[%s599 + $0x658] sm:$0xff]
        %v924 = vld [vmem:[%s599 + $0x660] sm:$0xff]
        %v925 = vld [vmem:[%s599 + $0x668] sm:$0xff]
        %v926 = vld [vmem:[%s599 + $0x670] sm:$0xff]
        %v927 = vld [vmem:[%s599 + $0x678] sm:$0xff]
        %v928 = vld [vmem:[%s599 + $0x680] sm:$0xff]
        %v929 = vld [vmem:[%s599 + $0x688] sm:$0xff]
        %v930 = vld [vmem:[%s599 + $0x690] sm:$0xff]
        %v931 = vld [vmem:[%s599 + $0x698] sm:$0xff]
        %v932 = vld [vmem:[%s599 + $0x6a0] sm:$0xff]
        %v933 = vld [vmem:[%s599 + $0x6a8] sm:$0xff]
        %v934 = vld [vmem:[%s599 + $0x6b0] sm:$0xff]
        %v935 = vld [vmem:[%s599 + $0x6b8] sm:$0xff]
        %v936 = vld [vmem:[%s599 + $0x6c0] sm:$0xff]
        %v937 = vld [vmem:[%s599 + $0x6c8] sm:$0xff]
        %v938 = vld [vmem:[%s599 + $0x6d0] sm:$0xff]
        %v939 = vld [vmem:[%s599 + $0x6d8] sm:$0xff]
        %v940 = vld [vmem:[%s599 + $0x6e0] sm:$0xff]
        %v941 = vld [vmem:[%s599 + $0x6e8] sm:$0xff]
        %v942 = vld [vmem:[%s599 + $0x6f0] sm:$0xff]
        %v943 = vld [vmem:[%s599 + $0x6f8] sm:$0xff]
        %v944 = vld [vmem:[%s599 + $0x700] sm:$0xff]
        %v945 = vld [vmem:[%s599 + $0x708] sm:$0xff]
        %v946 = vld [vmem:[%s599 + $0x710] sm:$0xff]
        %v947 = vld [vmem:[%s599 + $0x718] sm:$0xff]
        %v948 = vld [vmem:[%s599 + $0x720] sm:$0xff]
        %v949 = vld [vmem:[%s599 + $0x728] sm:$0xff]
        %v950 = vld [vmem:[%s599 + $0x730] sm:$0xff]
        %v951 = vld [vmem:[%s599 + $0x738] sm:$0xff]
        %v952 = vld [vmem:[%s599 + $0x740] sm:$0xff]
        %v953 = vld [vmem:[%s599 + $0x748] sm:$0xff]
        %v954 = vld [vmem:[%s599 + $0x750] sm:$0xff]
        %v955 = vld [vmem:[%s599 + $0x758] sm:$0xff]
        %v956 = vld [vmem:[%s599 + $0x760] sm:$0xff]
        %v957 = vld [vmem:[%s599 + $0x768] sm:$0xff]
        %v958 = vld [vmem:[%s599 + $0x770] sm:$0xff]
        %v959 = vld [vmem:[%s599 + $0x778] sm:$0xff]
        %v960 = vld [vmem:[%s599 + $0x780] sm:$0xff]
        %v961 = vld [vmem:[%s599 + $0x788] sm:$0xff]
        %v962 = vld [vmem:[%s599 + $0x790] sm:$0xff]
        %v963 = vld [vmem:[%s599 + $0x798] sm:$0xff]
        %v964 = vld [vmem:[%s599 + $0x7a0] sm:$0xff]
        %v965 = vld [vmem:[%s599 + $0x7a8] sm:$0xff]
        %v966 = vld [vmem:[%s599 + $0x7b0] sm:$0xff]
        %v967 = vld [vmem:[%s599 + $0x7b8] sm:$0xff]
        %v968 = vld [vmem:[%s599 + $0x7c0] sm:$0xff]
        %v969 = vld [vmem:[%s599 + $0x7c8] sm:$0xff]
        %v970 = vld [vmem:[%s599 + $0x7d0] sm:$0xff]
        %v971 = vld [vmem:[%s599 + $0x7d8] sm:$0xff]
        %v972 = vld [vmem:[%s599 + $0x7e0] sm:$0xff]
        %v973 = vld [vmem:[%s599 + $0x7e8] sm:$0xff]
        %v974 = vld [vmem:[%s599 + $0x7f0] sm:$0xff]
        %v975 = vld [vmem:[%s599 + $0x7f8] sm:$0xff]
        %v976 = vld [vmem:[%s599 + $0x800] sm:$0xff]
        %v977 = vld [vmem:[%s599 + $0x808] sm:$0xff]
        %v978 = vld [vmem:[%s599 + $0x810] sm:$0xff]
        %v979 = vld [vmem:[%s599 + $0x818] sm:$0xff]
        %v980 = vld [vmem:[%s599 + $0x820] sm:$0xff]
        %v981 = vld [vmem:[%s599 + $0x828] sm:$0xff]
        %v982 = vld [vmem:[%s599 + $0x830] sm:$0xff]
        %v983 = vld [vmem:[%s599 + $0x838] sm:$0xff]
        %v984 = vld [vmem:[%s599 + $0x840] sm:$0xff]
        %v985 = vld [vmem:[%s599 + $0x848] sm:$0xff]
        %v986 = vld [vmem:[%s599 + $0x850] sm:$0xff]
        %v987 = vld [vmem:[%s599 + $0x858] sm:$0xff]
        %v988 = vld [vmem:[%s599 + $0x860] sm:$0xff]
        %v989 = vld [vmem:[%s599 + $0x868] sm:$0xff]
        %v990 = vld [vmem:[%s599 + $0x870] sm:$0xff]
        %v991 = vld [vmem:[%s599 + $0x878] sm:$0xff]
        %v992 = vld [vmem:[%s599 + $0x880] sm:$0xff]
        %v993 = vld [vmem:[%s599 + $0x888] sm:$0xff]
        %v994 = vld [vmem:[%s599 + $0x890] sm:$0xff]
        %v995 = vld [vmem:[%s599 + $0x898] sm:$0xff]
        %v996 = vld [vmem:[%s599 + $0x8a0] sm:$0xff]
        %v997 = vld [vmem:[%s599 + $0x8a8] sm:$0xff]
        %v998 = vld [vmem:[%s599 + $0x8b0] sm:$0xff]
        %v999 = vld [vmem:[%s599 + $0x8b8] sm:$0xff]
        %v1000 = vld [vmem:[%s599 + $0x8c0] sm:$0xff]
        %v1001 = vld [vmem:[%s599 + $0x8c8] sm:$0xff]
        %v1002 = vld [vmem:[%s599 + $0x8d0] sm:$0xff]
        %v1003 = vld [vmem:[%s599 + $0x8d8] sm:$0xff]
        %v1004 = vld [vmem:[%s599 + $0x8e0] sm:$0xff]
        %v1005 = vld [vmem:[%s599 + $0x8e8] sm:$0xff]
        %v1006 = vld [vmem:[%s599 + $0x8f0] sm:$0xff]
        %v1007 = vld [vmem:[%s599 + $0x8f8] sm:$0xff]
        %v1008 = vld [vmem:[%s599 + $0x900] sm:$0xff]
        %v1009 = vld [vmem:[%s599 + $0x908] sm:$0xff]
        %v1010 = vld [vmem:[%s599 + $0x910] sm:$0xff]
        %v1011 = vld [vmem:[%s599 + $0x918] sm:$0xff]
        %v1012 = vld [vmem:[%s599 + $0x920] sm:$0xff]
        %v1013 = vld [vmem:[%s599 + $0x928] sm:$0xff]
        %v1014 = vld [vmem:[%s599 + $0x930] sm:$0xff]
        %v1015 = vld [vmem:[%s599 + $0x938] sm:$0xff]
        %v1016 = vld [vmem:[%s599 + $0x940] sm:$0xff]
        %v1017 = vld [vmem:[%s599 + $0x948] sm:$0xff]
        %v1018 = vld [vmem:[%s599 + $0x950] sm:$0xff]
        %v1019 = vld [vmem:[%s599 + $0x958] sm:$0xff]
        %v1020 = vld [vmem:[%s599 + $0x960] sm:$0xff]
        %v1021 = vld [vmem:[%s599 + $0x968] sm:$0xff]
        %v1022 = vld [vmem:[%s599 + $0x970] sm:$0xff]
        %v1023 = vld [vmem:[%s599 + $0x978] sm:$0xff]
        %v1024 = vld [vmem:[%s599 + $0x980] sm:$0xff]
        %v1025 = vld [vmem:[%s599 + $0x988] sm:$0xff]
        %v1026 = vld [vmem:[%s599 + $0x990] sm:$0xff]
        %v1027 = vld [vmem:[%s599 + $0x998] sm:$0xff]
        %v1028 = vld [vmem:[%s599 + $0x9a0] sm:$0xff]
        %v1029 = vld [vmem:[%s599 + $0x9a8] sm:$0xff]
        %v1030 = vld [vmem:[%s599 + $0x9b0] sm:$0xff]
        %v1031 = vld [vmem:[%s599 + $0x9b8] sm:$0xff]
        %v1032 = vld [vmem:[%s599 + $0x9c0] sm:$0xff]
        %v1033 = vld [vmem:[%s599 + $0x9c8] sm:$0xff]
        %v1034 = vld [vmem:[%s599 + $0x9d0] sm:$0xff]
        %v1035 = vld [vmem:[%s599 + $0x9d8] sm:$0xff]
        %v1036 = vld [vmem:[%s599 + $0x9e0] sm:$0xff]
        %v1037 = vld [vmem:[%s599 + $0x9e8] sm:$0xff]
        %v1038 = vld [vmem:[%s599 + $0x9f0] sm:$0xff]
        %v1039 = vld [vmem:[%s599 + $0x9f8] sm:$0xff]
        %v1040 = vld [vmem:[%s599 + $0xa00] sm:$0xff]
        %v1041 = vld [vmem:[%s599 + $0xa08] sm:$0xff]
        %v1042 = vld [vmem:[%s599 + $0xa10] sm:$0xff]
        %v1043 = vld [vmem:[%s599 + $0xa18] sm:$0xff]
        %v1044 = vld [vmem:[%s599 + $0xa20] sm:$0xff]
        %v1045 = vld [vmem:[%s599 + $0xa28] sm:$0xff]
        %v1046 = vld [vmem:[%s599 + $0xa30] sm:$0xff]
        %v1047 = vld [vmem:[%s599 + $0xa38] sm:$0xff]
        %v1048 = vld [vmem:[%s599 + $0xa40] sm:$0xff]
        %v1049 = vld [vmem:[%s599 + $0xa48] sm:$0xff]
        %v1050 = vld [vmem:[%s599 + $0xa50] sm:$0xff]
        %v1051 = vld [vmem:[%s599 + $0xa58] sm:$0xff]
        %v1052 = vld [vmem:[%s599 + $0xa60] sm:$0xff]
        %v1053 = vld [vmem:[%s599 + $0xa68] sm:$0xff]
        %v1054 = vld [vmem:[%s599 + $0xa70] sm:$0xff]
        %v1055 = vld [vmem:[%s599 + $0xa78] sm:$0xff]
        %v1056 = vld [vmem:[%s599 + $0xa80] sm:$0xff]
        %v1057 = vld [vmem:[%s599 + $0xa88] sm:$0xff]
        %v1058 = vld [vmem:[%s599 + $0xa90] sm:$0xff]
        %v1059 = vld [vmem:[%s599 + $0xa98] sm:$0xff]
        %v1060 = vld [vmem:[%s599 + $0xaa0] sm:$0xff]
        %v1061 = vld [vmem:[%s599 + $0xaa8] sm:$0xff]
        %v1062 = vld [vmem:[%s599 + $0xab0] sm:$0xff]
        %v1063 = vld [vmem:[%s599 + $0xab8] sm:$0xff]
        %v1064 = vld [vmem:[%s599 + $0xac0] sm:$0xff]
        %v1065 = vld [vmem:[%s599 + $0xac8] sm:$0xff]
        %v1066 = vld [vmem:[%s599 + $0xad0] sm:$0xff]
        %v1067 = vld [vmem:[%s599 + $0xad8] sm:$0xff]
        %v1068 = vld [vmem:[%s599 + $0xae0] sm:$0xff]
        %v1069 = vld [vmem:[%s599 + $0xae8] sm:$0xff]
        %v1070 = vld [vmem:[%s599 + $0xaf0] sm:$0xff]
        %v1071 = vld [vmem:[%s599 + $0xaf8] sm:$0xff]
        %v1072 = vld [vmem:[%s599 + $0xb00] sm:$0xff]
        %v1073 = vld [vmem:[%s599 + $0xb08] sm:$0xff]
        %v1074 = vld [vmem:[%s599 + $0xb10] sm:$0xff]
        %v1075 = vld [vmem:[%s599 + $0xb18] sm:$0xff]
        %v1076 = vld [vmem:[%s599 + $0xb20] sm:$0xff]
        %v1077 = vld [vmem:[%s599 + $0xb28] sm:$0xff]
        %v1078 = vld [vmem:[%s599 + $0xb30] sm:$0xff]
        %v1079 = vld [vmem:[%s599 + $0xb38] sm:$0xff]
        %v1080 = vld [vmem:[%s599 + $0xb40] sm:$0xff]
        %v1081 = vld [vmem:[%s599 + $0xb48] sm:$0xff]
        %v1082 = vld [vmem:[%s599 + $0xb50] sm:$0xff]
        %v1083 = vld [vmem:[%s599 + $0xb58] sm:$0xff]
        %v1084 = vld [vmem:[%s599 + $0xb60] sm:$0xff]
        %v1085 = vld [vmem:[%s599 + $0xb68] sm:$0xff]
        %v1086 = vld [vmem:[%s599 + $0xb70] sm:$0xff]
        %v1087 = vld [vmem:[%s599 + $0xb78] sm:$0xff]
        %v1088 = vld [vmem:[%s599 + $0xb80] sm:$0xff]
        %v1089 = vld [vmem:[%s599 + $0xb88] sm:$0xff]
        %v1090 = vld [vmem:[%s599 + $0xb90] sm:$0xff]
        %v1091 = vld [vmem:[%s599 + $0xb98] sm:$0xff]
        %v1092 = vld [vmem:[%s599 + $0xba0] sm:$0xff]
        %v1093 = vld [vmem:[%s599 + $0xba8] sm:$0xff]
        %v1094 = vld [vmem:[%s599 + $0xbb0] sm:$0xff]
        %v1095 = vld [vmem:[%s599 + $0xbb8] sm:$0xff]
        %v1096 = vld [vmem:[%s599 + $0xbc0] sm:$0xff]
        %v1097 = vld [vmem:[%s599 + $0xbc8] sm:$0xff]
        %v1098 = vld [vmem:[%s599 + $0xbd0] sm:$0xff]
        %v1099 = vld [vmem:[%s599 + $0xbd8] sm:$0xff]
        %v1100 = vld [vmem:[%s599 + $0xbe0] sm:$0xff]
        %v1101 = vld [vmem:[%s599 + $0xbe8] sm:$0xff]
        %v1102 = vld [vmem:[%s599 + $0xbf0] sm:$0xff]
        %v1103 = vld [vmem:[%s599 + $0xbf8] sm:$0xff]
        %v1107 = vunpack.c.l.b16 %v717
        %v1108 = vunpack.c.h.b16 %v717
        %v1109 = vunpack.c.l.b16 %v718
        %v1110 = vunpack.c.h.b16 %v718
        %v1111 = vunpack.c.l.b16 %v719
        %v1112 = vunpack.c.h.b16 %v719
        %v1113 = vpack.c.b16 %v1107, %v1107
        %v1114 = vpack.c.b16 %v1108, %v1108
        %v1115 = vpack.c.b16 %v1109, %v1109
        %v1116 = vpack.c.b16 %v1110, %v1110
        %v1117 = vpack.c.b16 %v1111, %v1111
        %v1118 = vpack.c.b16 %v1112, %v1112
        %v1509 = vunpack.c.l.b16 %v720
        %v1510 = vunpack.c.h.b16 %v720
        %v1511 = vunpack.c.l.b16 %v721
        %v1512 = vunpack.c.h.b16 %v721
        %v1513 = vunpack.c.l.b16 %v722
        %v1514 = vunpack.c.h.b16 %v722
        %v1515 = vunpack.c.l.b16 %v723
        %v1516 = vunpack.c.h.b16 %v723
        %v1517 = vunpack.c.l.b16 %v724
        %v1518 = vunpack.c.h.b16 %v724
        %v1519 = vunpack.c.l.b16 %v725
        %v1520 = vunpack.c.h.b16 %v725
        %v1521 = vunpack.c.l.b16 %v726
        %v1522 = vunpack.c.h.b16 %v726
        %v1523 = vunpack.c.l.b16 %v727
        %v1524 = vunpack.c.h.b16 %v727
        %v1525 = vunpack.c.l.b16 %v728
        %v1526 = vunpack.c.h.b16 %v728
        %v1527 = vunpack.c.l.b16 %v729
        %v1528 = vunpack.c.h.b16 %v729
        %v1529 = vunpack.c.l.b16 %v730
        %v1530 = vunpack.c.h.b16 %v730
        %v1531 = vunpack.c.l.b16 %v731
        %v1532 = vunpack.c.h.b16 %v731
        %v1533 = vunpack.c.l.b16 %v732
        %v1534 = vunpack.c.h.b16 %v732
        %v1535 = vunpack.c.l.b16 %v733
        %v1536 = vunpack.c.h.b16 %v733
        %v1537 = vunpack.c.l.b16 %v734
        %v1538 = vunpack.c.h.b16 %v734
        %v1539 = vunpack.c.l.b16 %v735
        %v1540 = vunpack.c.h.b16 %v735
        %v1541 = vunpack.c.l.b16 %v736
        %v1542 = vunpack.c.h.b16 %v736
        %v1543 = vunpack.c.l.b16 %v737
        %v1544 = vunpack.c.h.b16 %v737
        %v1545 = vunpack.c.l.b16 %v738
        %v1546 = vunpack.c.h.b16 %v738
        %v1547 = vunpack.c.l.b16 %v739
        %v1548 = vunpack.c.h.b16 %v739
        %v1549 = vunpack.c.l.b16 %v740
        %v1550 = vunpack.c.h.b16 %v740
        %v1551 = vunpack.c.l.b16 %v741
        %v1552 = vunpack.c.h.b16 %v741
        %v1553 = vunpack.c.l.b16 %v742
        %v1554 = vunpack.c.h.b16 %v742
        %v1555 = vunpack.c.l.b16 %v743
        %v1556 = vunpack.c.h.b16 %v743
        %v1557 = vunpack.c.l.b16 %v744
        %v1558 = vunpack.c.h.b16 %v744
        %v1559 = vunpack.c.l.b16 %v745
        %v1560 = vunpack.c.h.b16 %v745
        %v1561 = vunpack.c.l.b16 %v746
        %v1562 = vunpack.c.h.b16 %v746
        %v1563 = vunpack.c.l.b16 %v747
        %v1564 = vunpack.c.h.b16 %v747
        %v1565 = vunpack.c.l.b16 %v748
        %v1566 = vunpack.c.h.b16 %v748
        %v1567 = vunpack.c.l.b16 %v749
        %v1568 = vunpack.c.h.b16 %v749
        %v1569 = vunpack.c.l.b16 %v750
        %v1570 = vunpack.c.h.b16 %v750
        %v1571 = vunpack.c.l.b16 %v751
        %v1572 = vunpack.c.h.b16 %v751
        %v1573 = vunpack.c.l.b16 %v752
        %v1574 = vunpack.c.h.b16 %v752
        %v1575 = vunpack.c.l.b16 %v753
        %v1576 = vunpack.c.h.b16 %v753
        %v1577 = vunpack.c.l.b16 %v754
        %v1578 = vunpack.c.h.b16 %v754
        %v1579 = vunpack.c.l.b16 %v755
        %v1580 = vunpack.c.h.b16 %v755
        %v1581 = vunpack.c.l.b16 %v756
        %v1582 = vunpack.c.h.b16 %v756
        %v1583 = vunpack.c.l.b16 %v757
        %v1584 = vunpack.c.h.b16 %v757
        %v1585 = vunpack.c.l.b16 %v758
        %v1586 = vunpack.c.h.b16 %v758
        %v1587 = vunpack.c.l.b16 %v759
        %v1588 = vunpack.c.h.b16 %v759
        %v1589 = vunpack.c.l.b16 %v760
        %v1590 = vunpack.c.h.b16 %v760
        %v1591 = vunpack.c.l.b16 %v761
        %v1592 = vunpack.c.h.b16 %v761
        %v1593 = vunpack.c.l.b16 %v762
        %v1594 = vunpack.c.h.b16 %v762
        %v1595 = vunpack.c.l.b16 %v763
        %v1596 = vunpack.c.h.b16 %v763
        %v1597 = vunpack.c.l.b16 %v764
        %v1598 = vunpack.c.h.b16 %v764
        %v1599 = vunpack.c.l.b16 %v765
        %v1600 = vunpack.c.h.b16 %v765
        %v1601 = vunpack.c.l.b16 %v766
        %v1602 = vunpack.c.h.b16 %v766
        %v1603 = vunpack.c.l.b16 %v767
        %v1604 = vunpack.c.h.b16 %v767
        %v1605 = vunpack.c.l.b16 %v768
        %v1606 = vunpack.c.h.b16 %v768
        %v1607 = vunpack.c.l.b16 %v769
        %v1608 = vunpack.c.h.b16 %v769
        %v1609 = vunpack.c.l.b16 %v770
        %v1610 = vunpack.c.h.b16 %v770
        %v1611 = vunpack.c.l.b16 %v771
        %v1612 = vunpack.c.h.b16 %v771
        %v1613 = vunpack.c.l.b16 %v772
        %v1614 = vunpack.c.h.b16 %v772
        %v1615 = vunpack.c.l.b16 %v773
        %v1616 = vunpack.c.h.b16 %v773
        %v1617 = vunpack.c.l.b16 %v774
        %v1618 = vunpack.c.h.b16 %v774
        %v1619 = vunpack.c.l.b16 %v775
        %v1620 = vunpack.c.h.b16 %v775
        %v1621 = vunpack.c.l.b16 %v776
        %v1622 = vunpack.c.h.b16 %v776
        %v1623 = vunpack.c.l.b16 %v777
        %v1624 = vunpack.c.h.b16 %v777
        %v1625 = vunpack.c.l.b16 %v778
        %v1626 = vunpack.c.h.b16 %v778
        %v1627 = vunpack.c.l.b16 %v779
        %v1628 = vunpack.c.h.b16 %v779
        %v1629 = vunpack.c.l.b16 %v780
        %v1630 = vunpack.c.h.b16 %v780
        %v1631 = vunpack.c.l.b16 %v781
        %v1632 = vunpack.c.h.b16 %v781
        %v1633 = vunpack.c.l.b16 %v782
        %v1634 = vunpack.c.h.b16 %v782
        %v1635 = vunpack.c.l.b16 %v783
        %v1636 = vunpack.c.h.b16 %v783
        %v1637 = vunpack.c.l.b16 %v784
        %v1638 = vunpack.c.h.b16 %v784
        %v1639 = vunpack.c.l.b16 %v785
        %v1640 = vunpack.c.h.b16 %v785
        %v1641 = vunpack.c.l.b16 %v786
        %v1642 = vunpack.c.h.b16 %v786
        %v1643 = vunpack.c.l.b16 %v787
        %v1644 = vunpack.c.h.b16 %v787
        %v1645 = vunpack.c.l.b16 %v788
        %v1646 = vunpack.c.h.b16 %v788
        %v1647 = vunpack.c.l.b16 %v789
        %v1648 = vunpack.c.h.b16 %v789
        %v1649 = vunpack.c.l.b16 %v790
        %v1650 = vunpack.c.h.b16 %v790
        %v1651 = vunpack.c.l.b16 %v791
        %v1652 = vunpack.c.h.b16 %v791
        %v1653 = vunpack.c.l.b16 %v792
        %v1654 = vunpack.c.h.b16 %v792
        %v1655 = vunpack.c.l.b16 %v793
        %v1656 = vunpack.c.h.b16 %v793
        %v1657 = vunpack.c.l.b16 %v794
        %v1658 = vunpack.c.h.b16 %v794
        %v1659 = vunpack.c.l.b16 %v795
        %v1660 = vunpack.c.h.b16 %v795
        %v1661 = vunpack.c.l.b16 %v796
        %v1662 = vunpack.c.h.b16 %v796
        %v1663 = vunpack.c.l.b16 %v797
        %v1664 = vunpack.c.h.b16 %v797
        %v1665 = vunpack.c.l.b16 %v798
        %v1666 = vunpack.c.h.b16 %v798
        %v1667 = vunpack.c.l.b16 %v799
        %v1668 = vunpack.c.h.b16 %v799
        %v1669 = vunpack.c.l.b16 %v800
        %v1670 = vunpack.c.h.b16 %v800
        %v1671 = vunpack.c.l.b16 %v801
        %v1672 = vunpack.c.h.b16 %v801
        %v1673 = vunpack.c.l.b16 %v802
        %v1674 = vunpack.c.h.b16 %v802
        %v1675 = vunpack.c.l.b16 %v803
        %v1676 = vunpack.c.h.b16 %v803
        %v1677 = vunpack.c.l.b16 %v804
        %v1678 = vunpack.c.h.b16 %v804
        %v1679 = vunpack.c.l.b16 %v805
        %v1680 = vunpack.c.h.b16 %v805
        %v1681 = vunpack.c.l.b16 %v806
        %v1682 = vunpack.c.h.b16 %v806
        %v1683 = vunpack.c.l.b16 %v807
        %v1684 = vunpack.c.h.b16 %v807
        %v1685 = vunpack.c.l.b16 %v808
        %v1686 = vunpack.c.h.b16 %v808
        %v1687 = vunpack.c.l.b16 %v809
        %v1688 = vunpack.c.h.b16 %v809
        %v1689 = vunpack.c.l.b16 %v810
        %v1690 = vunpack.c.h.b16 %v810
        %v1691 = vunpack.c.l.b16 %v811
        %v1692 = vunpack.c.h.b16 %v811
        %v1693 = vunpack.c.l.b16 %v812
        %v1694 = vunpack.c.h.b16 %v812
        %v1695 = vunpack.c.l.b16 %v813
        %v1696 = vunpack.c.h.b16 %v813
        %v1697 = vunpack.c.l.b16 %v814
        %v1698 = vunpack.c.h.b16 %v814
        %v1699 = vunpack.c.l.b16 %v815
        %v1700 = vunpack.c.h.b16 %v815
        %v1701 = vunpack.c.l.b16 %v816
        %v1702 = vunpack.c.h.b16 %v816
        %v1703 = vunpack.c.l.b16 %v817
        %v1704 = vunpack.c.h.b16 %v817
        %v1705 = vunpack.c.l.b16 %v818
        %v1706 = vunpack.c.h.b16 %v818
        %v1707 = vunpack.c.l.b16 %v819
        %v1708 = vunpack.c.h.b16 %v819
        %v1709 = vunpack.c.l.b16 %v820
        %v1710 = vunpack.c.h.b16 %v820
        %v1711 = vunpack.c.l.b16 %v821
        %v1712 = vunpack.c.h.b16 %v821
        %v1713 = vunpack.c.l.b16 %v822
        %v1714 = vunpack.c.h.b16 %v822
        %v1715 = vunpack.c.l.b16 %v823
        %v1716 = vunpack.c.h.b16 %v823
        %v1717 = vunpack.c.l.b16 %v824
        %v1718 = vunpack.c.h.b16 %v824
        %v1719 = vunpack.c.l.b16 %v825
        %v1720 = vunpack.c.h.b16 %v825
        %v1721 = vunpack.c.l.b16 %v826
        %v1722 = vunpack.c.h.b16 %v826
        %v1723 = vunpack.c.l.b16 %v827
        %v1724 = vunpack.c.h.b16 %v827
        %v1725 = vunpack.c.l.b16 %v828
        %v1726 = vunpack.c.h.b16 %v828
        %v1727 = vunpack.c.l.b16 %v829
        %v1728 = vunpack.c.h.b16 %v829
        %v1729 = vunpack.c.l.b16 %v830
        %v1730 = vunpack.c.h.b16 %v830
        %v1731 = vunpack.c.l.b16 %v831
        %v1732 = vunpack.c.h.b16 %v831
        %v1733 = vunpack.c.l.b16 %v832
        %v1734 = vunpack.c.h.b16 %v832
        %v1735 = vunpack.c.l.b16 %v833
        %v1736 = vunpack.c.h.b16 %v833
        %v1737 = vunpack.c.l.b16 %v834
        %v1738 = vunpack.c.h.b16 %v834
        %v1739 = vunpack.c.l.b16 %v835
        %v1740 = vunpack.c.h.b16 %v835
        %v1741 = vunpack.c.l.b16 %v836
        %v1742 = vunpack.c.h.b16 %v836
        %v1743 = vunpack.c.l.b16 %v837
        %v1744 = vunpack.c.h.b16 %v837
        %v1745 = vunpack.c.l.b16 %v838
        %v1746 = vunpack.c.h.b16 %v838
        %v1747 = vunpack.c.l.b16 %v839
        %v1748 = vunpack.c.h.b16 %v839
        %v1749 = vunpack.c.l.b16 %v840
        %v1750 = vunpack.c.h.b16 %v840
        %v1751 = vunpack.c.l.b16 %v841
        %v1752 = vunpack.c.h.b16 %v841
        %v1753 = vunpack.c.l.b16 %v842
        %v1754 = vunpack.c.h.b16 %v842
        %v1755 = vunpack.c.l.b16 %v843
        %v1756 = vunpack.c.h.b16 %v843
        %v1757 = vunpack.c.l.b16 %v844
        %v1758 = vunpack.c.h.b16 %v844
        %v1759 = vunpack.c.l.b16 %v845
        %v1760 = vunpack.c.h.b16 %v845
        %v1761 = vunpack.c.l.b16 %v846
        %v1762 = vunpack.c.h.b16 %v846
        %v1763 = vunpack.c.l.b16 %v847
        %v1764 = vunpack.c.h.b16 %v847
        %v1765 = vunpack.c.l.b16 %v848
        %v1766 = vunpack.c.h.b16 %v848
        %v1767 = vunpack.c.l.b16 %v849
        %v1768 = vunpack.c.h.b16 %v849
        %v1769 = vunpack.c.l.b16 %v850
        %v1770 = vunpack.c.h.b16 %v850
        %v1771 = vunpack.c.l.b16 %v851
        %v1772 = vunpack.c.h.b16 %v851
        %v1773 = vunpack.c.l.b16 %v852
        %v1774 = vunpack.c.h.b16 %v852
        %v1775 = vunpack.c.l.b16 %v853
        %v1776 = vunpack.c.h.b16 %v853
        %v1777 = vunpack.c.l.b16 %v854
        %v1778 = vunpack.c.h.b16 %v854
        %v1779 = vunpack.c.l.b16 %v855
        %v1780 = vunpack.c.h.b16 %v855
        %v1781 = vunpack.c.l.b16 %v856
        %v1782 = vunpack.c.h.b16 %v856
        %v1783 = vunpack.c.l.b16 %v857
        %v1784 = vunpack.c.h.b16 %v857
        %v1785 = vunpack.c.l.b16 %v858
        %v1786 = vunpack.c.h.b16 %v858
        %v1787 = vunpack.c.l.b16 %v859
        %v1788 = vunpack.c.h.b16 %v859
        %v1789 = vunpack.c.l.b16 %v860
        %v1790 = vunpack.c.h.b16 %v860
        %v1791 = vunpack.c.l.b16 %v861
        %v1792 = vunpack.c.h.b16 %v861
        %v1793 = vunpack.c.l.b16 %v862
        %v1794 = vunpack.c.h.b16 %v862
        %v1795 = vunpack.c.l.b16 %v863
        %v1796 = vunpack.c.h.b16 %v863
        %v1797 = vunpack.c.l.b16 %v864
        %v1798 = vunpack.c.h.b16 %v864
        %v1799 = vunpack.c.l.b16 %v865
        %v1800 = vunpack.c.h.b16 %v865
        %v1801 = vunpack.c.l.b16 %v866
        %v1802 = vunpack.c.h.b16 %v866
        %v1803 = vunpack.c.l.b16 %v867
        %v1804 = vunpack.c.h.b16 %v867
        %v1805 = vunpack.c.l.b16 %v868
        %v1806 = vunpack.c.h.b16 %v868
        %v1807 = vunpack.c.l.b16 %v869
        %v1808 = vunpack.c.h.b16 %v869
        %v1809 = vunpack.c.l.b16 %v870
        %v1810 = vunpack.c.h.b16 %v870
        %v1811 = vunpack.c.l.b16 %v871
        %v1812 = vunpack.c.h.b16 %v871
        %v1813 = vunpack.c.l.b16 %v872
        %v1814 = vunpack.c.h.b16 %v872
        %v1815 = vunpack.c.l.b16 %v873
        %v1816 = vunpack.c.h.b16 %v873
        %v1817 = vunpack.c.l.b16 %v874
        %v1818 = vunpack.c.h.b16 %v874
        %v1819 = vunpack.c.l.b16 %v875
        %v1820 = vunpack.c.h.b16 %v875
        %v1821 = vunpack.c.l.b16 %v876
        %v1822 = vunpack.c.h.b16 %v876
        %v1823 = vunpack.c.l.b16 %v877
        %v1824 = vunpack.c.h.b16 %v877
        %v1825 = vunpack.c.l.b16 %v878
        %v1826 = vunpack.c.h.b16 %v878
        %v1827 = vunpack.c.l.b16 %v879
        %v1828 = vunpack.c.h.b16 %v879
        %v1829 = vunpack.c.l.b16 %v880
        %v1830 = vunpack.c.h.b16 %v880
        %v1831 = vunpack.c.l.b16 %v881
        %v1832 = vunpack.c.h.b16 %v881
        %v1833 = vunpack.c.l.b16 %v882
        %v1834 = vunpack.c.h.b16 %v882
        %v1835 = vunpack.c.l.b16 %v883
        %v1836 = vunpack.c.h.b16 %v883
        %v1837 = vunpack.c.l.b16 %v884
        %v1838 = vunpack.c.h.b16 %v884
        %v1839 = vunpack.c.l.b16 %v885
        %v1840 = vunpack.c.h.b16 %v885
        %v1841 = vunpack.c.l.b16 %v886
        %v1842 = vunpack.c.h.b16 %v886
        %v1843 = vunpack.c.l.b16 %v887
        %v1844 = vunpack.c.h.b16 %v887
        %v1845 = vunpack.c.l.b16 %v888
        %v1846 = vunpack.c.h.b16 %v888
        %v1847 = vunpack.c.l.b16 %v889
        %v1848 = vunpack.c.h.b16 %v889
        %v1849 = vunpack.c.l.b16 %v890
        %v1850 = vunpack.c.h.b16 %v890
        %v1851 = vunpack.c.l.b16 %v891
        %v1852 = vunpack.c.h.b16 %v891
        %v1853 = vunpack.c.l.b16 %v892
        %v1854 = vunpack.c.h.b16 %v892
        %v1855 = vunpack.c.l.b16 %v893
        %v1856 = vunpack.c.h.b16 %v893
        %v1857 = vunpack.c.l.b16 %v894
        %v1858 = vunpack.c.h.b16 %v894
        %v1859 = vunpack.c.l.b16 %v895
        %v1860 = vunpack.c.h.b16 %v895
        %v1861 = vunpack.c.l.b16 %v896
        %v1862 = vunpack.c.h.b16 %v896
        %v1863 = vunpack.c.l.b16 %v897
        %v1864 = vunpack.c.h.b16 %v897
        %v1865 = vunpack.c.l.b16 %v898
        %v1866 = vunpack.c.h.b16 %v898
        %v1867 = vunpack.c.l.b16 %v899
        %v1868 = vunpack.c.h.b16 %v899
        %v1869 = vunpack.c.l.b16 %v900
        %v1870 = vunpack.c.h.b16 %v900
        %v1871 = vunpack.c.l.b16 %v901
        %v1872 = vunpack.c.h.b16 %v901
        %v1873 = vunpack.c.l.b16 %v902
        %v1874 = vunpack.c.h.b16 %v902
        %v1875 = vunpack.c.l.b16 %v903
        %v1876 = vunpack.c.h.b16 %v903
        %v1877 = vunpack.c.l.b16 %v904
        %v1878 = vunpack.c.h.b16 %v904
        %v1879 = vunpack.c.l.b16 %v905
        %v1880 = vunpack.c.h.b16 %v905
        %v1881 = vunpack.c.l.b16 %v906
        %v1882 = vunpack.c.h.b16 %v906
        %v1883 = vunpack.c.l.b16 %v907
        %v1884 = vunpack.c.h.b16 %v907
        %v1885 = vunpack.c.l.b16 %v908
        %v1886 = vunpack.c.h.b16 %v908
        %v1887 = vunpack.c.l.b16 %v909
        %v1888 = vunpack.c.h.b16 %v909
        %v1889 = vunpack.c.l.b16 %v910
        %v1890 = vunpack.c.h.b16 %v910
        %v1891 = vunpack.c.l.b16 %v911
        %v1892 = vunpack.c.h.b16 %v911
        %v1893 = vunpack.c.l.b16 %v912
        %v1894 = vunpack.c.h.b16 %v912
        %v1895 = vunpack.c.l.b16 %v913
        %v1896 = vunpack.c.h.b16 %v913
        %v1897 = vunpack.c.l.b16 %v914
        %v1898 = vunpack.c.h.b16 %v914
        %v1899 = vunpack.c.l.b16 %v915
        %v1900 = vunpack.c.h.b16 %v915
        %v1901 = vunpack.c.l.b16 %v916
        %v1902 = vunpack.c.h.b16 %v916
        %v1903 = vunpack.c.l.b16 %v917
        %v1904 = vunpack.c.h.b16 %v917
        %v1905 = vunpack.c.l.b16 %v918
        %v1906 = vunpack.c.h.b16 %v918
        %v1907 = vunpack.c.l.b16 %v919
        %v1908 = vunpack.c.h.b16 %v919
        %v1909 = vunpack.c.l.b16 %v920
        %v1910 = vunpack.c.h.b16 %v920
        %v1911 = vunpack.c.l.b16 %v921
        %v1912 = vunpack.c.h.b16 %v921
        %v1913 = vunpack.c.l.b16 %v922
        %v1914 = vunpack.c.h.b16 %v922
        %v1915 = vunpack.c.l.b16 %v923
        %v1916 = vunpack.c.h.b16 %v923
        %v1917 = vunpack.c.l.b16 %v924
        %v1918 = vunpack.c.h.b16 %v924
        %v1919 = vunpack.c.l.b16 %v925
        %v1920 = vunpack.c.h.b16 %v925
        %v1921 = vunpack.c.l.b16 %v926
        %v1922 = vunpack.c.h.b16 %v926
        %v1923 = vunpack.c.l.b16 %v927
        %v1924 = vunpack.c.h.b16 %v927
        %v1925 = vunpack.c.l.b16 %v928
        %v1926 = vunpack.c.h.b16 %v928
        %v1927 = vunpack.c.l.b16 %v929
        %v1928 = vunpack.c.h.b16 %v929
        %v1929 = vunpack.c.l.b16 %v930
        %v1930 = vunpack.c.h.b16 %v930
        %v1931 = vunpack.c.l.b16 %v931
        %v1932 = vunpack.c.h.b16 %v931
        %v1933 = vunpack.c.l.b16 %v932
        %v1934 = vunpack.c.h.b16 %v932
        %v1935 = vunpack.c.l.b16 %v933
        %v1936 = vunpack.c.h.b16 %v933
        %v1937 = vunpack.c.l.b16 %v934
        %v1938 = vunpack.c.h.b16 %v934
        %v1939 = vunpack.c.l.b16 %v935
        %v1940 = vunpack.c.h.b16 %v935
        %v1941 = vunpack.c.l.b16 %v936
        %v1942 = vunpack.c.h.b16 %v936
        %v1943 = vunpack.c.l.b16 %v937
        %v1944 = vunpack.c.h.b16 %v937
        %v1945 = vunpack.c.l.b16 %v938
        %v1946 = vunpack.c.h.b16 %v938
        %v1947 = vunpack.c.l.b16 %v939
        %v1948 = vunpack.c.h.b16 %v939
        %v1949 = vunpack.c.l.b16 %v940
        %v1950 = vunpack.c.h.b16 %v940
        %v1951 = vunpack.c.l.b16 %v941
        %v1952 = vunpack.c.h.b16 %v941
        %v1953 = vunpack.c.l.b16 %v942
        %v1954 = vunpack.c.h.b16 %v942
        %v1955 = vunpack.c.l.b16 %v943
        %v1956 = vunpack.c.h.b16 %v943
        %v1957 = vunpack.c.l.b16 %v944
        %v1958 = vunpack.c.h.b16 %v944
        %v1959 = vunpack.c.l.b16 %v945
        %v1960 = vunpack.c.h.b16 %v945
        %v1961 = vunpack.c.l.b16 %v946
        %v1962 = vunpack.c.h.b16 %v946
        %v1963 = vunpack.c.l.b16 %v947
        %v1964 = vunpack.c.h.b16 %v947
        %v1965 = vunpack.c.l.b16 %v948
        %v1966 = vunpack.c.h.b16 %v948
        %v1967 = vunpack.c.l.b16 %v949
        %v1968 = vunpack.c.h.b16 %v949
        %v1969 = vunpack.c.l.b16 %v950
        %v1970 = vunpack.c.h.b16 %v950
        %v1971 = vunpack.c.l.b16 %v951
        %v1972 = vunpack.c.h.b16 %v951
        %v1973 = vunpack.c.l.b16 %v952
        %v1974 = vunpack.c.h.b16 %v952
        %v1975 = vunpack.c.l.b16 %v953
        %v1976 = vunpack.c.h.b16 %v953
        %v1977 = vunpack.c.l.b16 %v954
        %v1978 = vunpack.c.h.b16 %v954
        %v1979 = vunpack.c.l.b16 %v955
        %v1980 = vunpack.c.h.b16 %v955
        %v1981 = vunpack.c.l.b16 %v956
        %v1982 = vunpack.c.h.b16 %v956
        %v1983 = vunpack.c.l.b16 %v957
        %v1984 = vunpack.c.h.b16 %v957
        %v1985 = vunpack.c.l.b16 %v958
        %v1986 = vunpack.c.h.b16 %v958
        %v1987 = vunpack.c.l.b16 %v959
        %v1988 = vunpack.c.h.b16 %v959
        %v1989 = vunpack.c.l.b16 %v960
        %v1990 = vunpack.c.h.b16 %v960
        %v1991 = vunpack.c.l.b16 %v961
        %v1992 = vunpack.c.h.b16 %v961
        %v1993 = vunpack.c.l.b16 %v962
        %v1994 = vunpack.c.h.b16 %v962
        %v1995 = vunpack.c.l.b16 %v963
        %v1996 = vunpack.c.h.b16 %v963
        %v1997 = vunpack.c.l.b16 %v964
        %v1998 = vunpack.c.h.b16 %v964
        %v1999 = vunpack.c.l.b16 %v965
        %v2000 = vunpack.c.h.b16 %v965
        %v2001 = vunpack.c.l.b16 %v966
        %v2002 = vunpack.c.h.b16 %v966
        %v2003 = vunpack.c.l.b16 %v967
        %v2004 = vunpack.c.h.b16 %v967
        %v2005 = vunpack.c.l.b16 %v968
        %v2006 = vunpack.c.h.b16 %v968
        %v2007 = vunpack.c.l.b16 %v969
        %v2008 = vunpack.c.h.b16 %v969
        %v2009 = vunpack.c.l.b16 %v970
        %v2010 = vunpack.c.h.b16 %v970
        %v2011 = vunpack.c.l.b16 %v971
        %v2012 = vunpack.c.h.b16 %v971
        %v2013 = vunpack.c.l.b16 %v972
        %v2014 = vunpack.c.h.b16 %v972
        %v2015 = vunpack.c.l.b16 %v973
        %v2016 = vunpack.c.h.b16 %v973
        %v2017 = vunpack.c.l.b16 %v974
        %v2018 = vunpack.c.h.b16 %v974
        %v2019 = vunpack.c.l.b16 %v975
        %v2020 = vunpack.c.h.b16 %v975
        %v2021 = vunpack.c.l.b16 %v976
        %v2022 = vunpack.c.h.b16 %v976
        %v2023 = vunpack.c.l.b16 %v977
        %v2024 = vunpack.c.h.b16 %v977
        %v2025 = vunpack.c.l.b16 %v978
        %v2026 = vunpack.c.h.b16 %v978
        %v2027 = vunpack.c.l.b16 %v979
        %v2028 = vunpack.c.h.b16 %v979
        %v2029 = vunpack.c.l.b16 %v980
        %v2030 = vunpack.c.h.b16 %v980
        %v2031 = vunpack.c.l.b16 %v981
        %v2032 = vunpack.c.h.b16 %v981
        %v2033 = vunpack.c.l.b16 %v982
        %v2034 = vunpack.c.h.b16 %v982
        %v2035 = vunpack.c.l.b16 %v983
        %v2036 = vunpack.c.h.b16 %v983
        %v2037 = vunpack.c.l.b16 %v984
        %v2038 = vunpack.c.h.b16 %v984
        %v2039 = vunpack.c.l.b16 %v985
        %v2040 = vunpack.c.h.b16 %v985
        %v2041 = vunpack.c.l.b16 %v986
        %v2042 = vunpack.c.h.b16 %v986
        %v2043 = vunpack.c.l.b16 %v987
        %v2044 = vunpack.c.h.b16 %v987
        %v2045 = vunpack.c.l.b16 %v988
        %v2046 = vunpack.c.h.b16 %v988
        %v2047 = vunpack.c.l.b16 %v989
        %v2048 = vunpack.c.h.b16 %v989
        %v2049 = vunpack.c.l.b16 %v990
        %v2050 = vunpack.c.h.b16 %v990
        %v2051 = vunpack.c.l.b16 %v991
        %v2052 = vunpack.c.h.b16 %v991
        %v2053 = vunpack.c.l.b16 %v992
        %v2054 = vunpack.c.h.b16 %v992
        %v2055 = vunpack.c.l.b16 %v993
        %v2056 = vunpack.c.h.b16 %v993
        %v2057 = vunpack.c.l.b16 %v994
        %v2058 = vunpack.c.h.b16 %v994
        %v2059 = vunpack.c.l.b16 %v995
        %v2060 = vunpack.c.h.b16 %v995
        %v2061 = vunpack.c.l.b16 %v996
        %v2062 = vunpack.c.h.b16 %v996
        %v2063 = vunpack.c.l.b16 %v997
        %v2064 = vunpack.c.h.b16 %v997
        %v2065 = vunpack.c.l.b16 %v998
        %v2066 = vunpack.c.h.b16 %v998
        %v2067 = vunpack.c.l.b16 %v999
        %v2068 = vunpack.c.h.b16 %v999
        %v2069 = vunpack.c.l.b16 %v1000
        %v2070 = vunpack.c.h.b16 %v1000
        %v2071 = vunpack.c.l.b16 %v1001
        %v2072 = vunpack.c.h.b16 %v1001
        %v2073 = vunpack.c.l.b16 %v1002
        %v2074 = vunpack.c.h.b16 %v1002
        %v2075 = vunpack.c.l.b16 %v1003
        %v2076 = vunpack.c.h.b16 %v1003
        %v2077 = vunpack.c.l.b16 %v1004
        %v2078 = vunpack.c.h.b16 %v1004
        %v2079 = vunpack.c.l.b16 %v1005
        %v2080 = vunpack.c.h.b16 %v1005
        %v2081 = vunpack.c.l.b16 %v1006
        %v2082 = vunpack.c.h.b16 %v1006
        %v2083 = vunpack.c.l.b16 %v1007
        %v2084 = vunpack.c.h.b16 %v1007
        %v2085 = vunpack.c.l.b16 %v1008
        %v2086 = vunpack.c.h.b16 %v1008
        %v2087 = vunpack.c.l.b16 %v1009
        %v2088 = vunpack.c.h.b16 %v1009
        %v2089 = vunpack.c.l.b16 %v1010
        %v2090 = vunpack.c.h.b16 %v1010
        %v2091 = vunpack.c.l.b16 %v1011
        %v2092 = vunpack.c.h.b16 %v1011
        %v2093 = vunpack.c.l.b16 %v1012
        %v2094 = vunpack.c.h.b16 %v1012
        %v2095 = vunpack.c.l.b16 %v1013
        %v2096 = vunpack.c.h.b16 %v1013
        %v2097 = vunpack.c.l.b16 %v1014
        %v2098 = vunpack.c.h.b16 %v1014
        %v2099 = vunpack.c.l.b16 %v1015
        %v2100 = vunpack.c.h.b16 %v1015
        %v2101 = vunpack.c.l.b16 %v1016
        %v2102 = vunpack.c.h.b16 %v1016
        %v2103 = vunpack.c.l.b16 %v1017
        %v2104 = vunpack.c.h.b16 %v1017
        %v2105 = vunpack.c.l.b16 %v1018
        %v2106 = vunpack.c.h.b16 %v1018
        %v2107 = vunpack.c.l.b16 %v1019
        %v2108 = vunpack.c.h.b16 %v1019
        %v2109 = vunpack.c.l.b16 %v1020
        %v2110 = vunpack.c.h.b16 %v1020
        %v2111 = vunpack.c.l.b16 %v1021
        %v2112 = vunpack.c.h.b16 %v1021
        %v2113 = vunpack.c.l.b16 %v1022
        %v2114 = vunpack.c.h.b16 %v1022
        %v2115 = vunpack.c.l.b16 %v1023
        %v2116 = vunpack.c.h.b16 %v1023
        %v2117 = vunpack.c.l.b16 %v1024
        %v2118 = vunpack.c.h.b16 %v1024
        %v2119 = vunpack.c.l.b16 %v1025
        %v2120 = vunpack.c.h.b16 %v1025
        %v2121 = vunpack.c.l.b16 %v1026
        %v2122 = vunpack.c.h.b16 %v1026
        %v2123 = vunpack.c.l.b16 %v1027
        %v2124 = vunpack.c.h.b16 %v1027
        %v2125 = vunpack.c.l.b16 %v1028
        %v2126 = vunpack.c.h.b16 %v1028
        %v2127 = vunpack.c.l.b16 %v1029
        %v2128 = vunpack.c.h.b16 %v1029
        %v2129 = vunpack.c.l.b16 %v1030
        %v2130 = vunpack.c.h.b16 %v1030
        %v2131 = vunpack.c.l.b16 %v1031
        %v2132 = vunpack.c.h.b16 %v1031
        %v2133 = vunpack.c.l.b16 %v1032
        %v2134 = vunpack.c.h.b16 %v1032
        %v2135 = vunpack.c.l.b16 %v1033
        %v2136 = vunpack.c.h.b16 %v1033
        %v2137 = vunpack.c.l.b16 %v1034
        %v2138 = vunpack.c.h.b16 %v1034
        %v2139 = vunpack.c.l.b16 %v1035
        %v2140 = vunpack.c.h.b16 %v1035
        %v2141 = vunpack.c.l.b16 %v1036
        %v2142 = vunpack.c.h.b16 %v1036
        %v2143 = vunpack.c.l.b16 %v1037
        %v2144 = vunpack.c.h.b16 %v1037
        %v2145 = vunpack.c.l.b16 %v1038
        %v2146 = vunpack.c.h.b16 %v1038
        %v2147 = vunpack.c.l.b16 %v1039
        %v2148 = vunpack.c.h.b16 %v1039
        %v2149 = vunpack.c.l.b16 %v1040
        %v2150 = vunpack.c.h.b16 %v1040
        %v2151 = vunpack.c.l.b16 %v1041
        %v2152 = vunpack.c.h.b16 %v1041
        %v2153 = vunpack.c.l.b16 %v1042
        %v2154 = vunpack.c.h.b16 %v1042
        %v2155 = vunpack.c.l.b16 %v1043
        %v2156 = vunpack.c.h.b16 %v1043
        %v2157 = vunpack.c.l.b16 %v1044
        %v2158 = vunpack.c.h.b16 %v1044
        %v2159 = vunpack.c.l.b16 %v1045
        %v2160 = vunpack.c.h.b16 %v1045
        %v2161 = vunpack.c.l.b16 %v1046
        %v2162 = vunpack.c.h.b16 %v1046
        %v2163 = vunpack.c.l.b16 %v1047
        %v2164 = vunpack.c.h.b16 %v1047
        %v2165 = vunpack.c.l.b16 %v1048
        %v2166 = vunpack.c.h.b16 %v1048
        %v2167 = vunpack.c.l.b16 %v1049
        %v2168 = vunpack.c.h.b16 %v1049
        %v2169 = vunpack.c.l.b16 %v1050
        %v2170 = vunpack.c.h.b16 %v1050
        %v2171 = vunpack.c.l.b16 %v1051
        %v2172 = vunpack.c.h.b16 %v1051
        %v2173 = vunpack.c.l.b16 %v1052
        %v2174 = vunpack.c.h.b16 %v1052
        %v2175 = vunpack.c.l.b16 %v1053
        %v2176 = vunpack.c.h.b16 %v1053
        %v2177 = vunpack.c.l.b16 %v1054
        %v2178 = vunpack.c.h.b16 %v1054
        %v2179 = vunpack.c.l.b16 %v1055
        %v2180 = vunpack.c.h.b16 %v1055
        %v2181 = vunpack.c.l.b16 %v1056
        %v2182 = vunpack.c.h.b16 %v1056
        %v2183 = vunpack.c.l.b16 %v1057
        %v2184 = vunpack.c.h.b16 %v1057
        %v2185 = vunpack.c.l.b16 %v1058
        %v2186 = vunpack.c.h.b16 %v1058
        %v2187 = vunpack.c.l.b16 %v1059
        %v2188 = vunpack.c.h.b16 %v1059
        %v2189 = vunpack.c.l.b16 %v1060
        %v2190 = vunpack.c.h.b16 %v1060
        %v2191 = vunpack.c.l.b16 %v1061
        %v2192 = vunpack.c.h.b16 %v1061
        %v2193 = vunpack.c.l.b16 %v1062
        %v2194 = vunpack.c.h.b16 %v1062
        %v2195 = vunpack.c.l.b16 %v1063
        %v2196 = vunpack.c.h.b16 %v1063
        %v2197 = vunpack.c.l.b16 %v1064
        %v2198 = vunpack.c.h.b16 %v1064
        %v2199 = vunpack.c.l.b16 %v1065
        %v2200 = vunpack.c.h.b16 %v1065
        %v2201 = vunpack.c.l.b16 %v1066
        %v2202 = vunpack.c.h.b16 %v1066
        %v2203 = vunpack.c.l.b16 %v1067
        %v2204 = vunpack.c.h.b16 %v1067
        %v2205 = vunpack.c.l.b16 %v1068
        %v2206 = vunpack.c.h.b16 %v1068
        %v2207 = vunpack.c.l.b16 %v1069
        %v2208 = vunpack.c.h.b16 %v1069
        %v2209 = vunpack.c.l.b16 %v1070
        %v2210 = vunpack.c.h.b16 %v1070
        %v2211 = vunpack.c.l.b16 %v1071
        %v2212 = vunpack.c.h.b16 %v1071
        %v2213 = vunpack.c.l.b16 %v1072
        %v2214 = vunpack.c.h.b16 %v1072
        %v2215 = vunpack.c.l.b16 %v1073
        %v2216 = vunpack.c.h.b16 %v1073
        %v2217 = vunpack.c.l.b16 %v1074
        %v2218 = vunpack.c.h.b16 %v1074
        %v2219 = vunpack.c.l.b16 %v1075
        %v2220 = vunpack.c.h.b16 %v1075
        %v2221 = vunpack.c.l.b16 %v1076
        %v2222 = vunpack.c.h.b16 %v1076
        %v2223 = vunpack.c.l.b16 %v1077
        %v2224 = vunpack.c.h.b16 %v1077
        %v2225 = vunpack.c.l.b16 %v1078
        %v2226 = vunpack.c.h.b16 %v1078
        %v2227 = vunpack.c.l.b16 %v1079
        %v2228 = vunpack.c.h.b16 %v1079
        %v2229 = vunpack.c.l.b16 %v1080
        %v2230 = vunpack.c.h.b16 %v1080
        %v2231 = vunpack.c.l.b16 %v1081
        %v2232 = vunpack.c.h.b16 %v1081
        %v2233 = vunpack.c.l.b16 %v1082
        %v2234 = vunpack.c.h.b16 %v1082
        %v2235 = vunpack.c.l.b16 %v1083
        %v2236 = vunpack.c.h.b16 %v1083
        %v2237 = vunpack.c.l.b16 %v1084
        %v2238 = vunpack.c.h.b16 %v1084
        %v2239 = vunpack.c.l.b16 %v1085
        %v2240 = vunpack.c.h.b16 %v1085
        %v2241 = vunpack.c.l.b16 %v1086
        %v2242 = vunpack.c.h.b16 %v1086
        %v2243 = vunpack.c.l.b16 %v1087
        %v2244 = vunpack.c.h.b16 %v1087
        %v2245 = vunpack.c.l.b16 %v1088
        %v2246 = vunpack.c.h.b16 %v1088
        %v2247 = vunpack.c.l.b16 %v1089
        %v2248 = vunpack.c.h.b16 %v1089
        %v2249 = vunpack.c.l.b16 %v1090
        %v2250 = vunpack.c.h.b16 %v1090
        %v2251 = vunpack.c.l.b16 %v1091
        %v2252 = vunpack.c.h.b16 %v1091
        %v2253 = vunpack.c.l.b16 %v1092
        %v2254 = vunpack.c.h.b16 %v1092
        %v2255 = vunpack.c.l.b16 %v1093
        %v2256 = vunpack.c.h.b16 %v1093
        %v2257 = vunpack.c.l.b16 %v1094
        %v2258 = vunpack.c.h.b16 %v1094
        %v2259 = vunpack.c.l.b16 %v1095
        %v2260 = vunpack.c.h.b16 %v1095
        %v2261 = vunpack.c.l.b16 %v1096
        %v2262 = vunpack.c.h.b16 %v1096
        %v2263 = vunpack.c.l.b16 %v1097
        %v2264 = vunpack.c.h.b16 %v1097
        %v2265 = vunpack.c.l.b16 %v1098
        %v2266 = vunpack.c.h.b16 %v1098
        %v2267 = vunpack.c.l.b16 %v1099
        %v2268 = vunpack.c.h.b16 %v1099
        %v2269 = vunpack.c.l.b16 %v1100
        %v2270 = vunpack.c.h.b16 %v1100
        %v2271 = vunpack.c.l.b16 %v1101
        %v2272 = vunpack.c.h.b16 %v1101
        %v2273 = vunpack.c.l.b16 %v1102
        %v2274 = vunpack.c.h.b16 %v1102
        %v2275 = vunpack.c.l.b16 %v1103
        %v2276 = vunpack.c.h.b16 %v1103
        %v2277 = vpack.c.b16 %v1517, %v1509
        %v2278 = vpack.c.b16 %v1518, %v1510
        %v2279 = vpack.c.b16 %v1519, %v1511
        %v2280 = vpack.c.b16 %v1520, %v1512
        %v2281 = vpack.c.b16 %v1521, %v1513
        %v2282 = vpack.c.b16 %v1522, %v1514
        %v2283 = vpack.c.b16 %v1523, %v1515
        %v2284 = vpack.c.b16 %v1524, %v1516
        %v2285 = vpack.c.b16 %v1533, %v1525
        %v2286 = vpack.c.b16 %v1534, %v1526
        %v2287 = vpack.c.b16 %v1535, %v1527
        %v2288 = vpack.c.b16 %v1536, %v1528
        %v2289 = vpack.c.b16 %v1537, %v1529
        %v2290 = vpack.c.b16 %v1538, %v1530
        %v2291 = vpack.c.b16 %v1539, %v1531
        %v2292 = vpack.c.b16 %v1540, %v1532
        %v2293 = vpack.c.b16 %v1549, %v1541
        %v2294 = vpack.c.b16 %v1550, %v1542
        %v2295 = vpack.c.b16 %v1551, %v1543
        %v2296 = vpack.c.b16 %v1552, %v1544
        %v2297 = vpack.c.b16 %v1553, %v1545
        %v2298 = vpack.c.b16 %v1554, %v1546
        %v2299 = vpack.c.b16 %v1555, %v1547
        %v2300 = vpack.c.b16 %v1556, %v1548
        %v2301 = vpack.c.b16 %v1565, %v1557
        %v2302 = vpack.c.b16 %v1566, %v1558
        %v2303 = vpack.c.b16 %v1567, %v1559
        %v2304 = vpack.c.b16 %v1568, %v1560
        %v2305 = vpack.c.b16 %v1569, %v1561
        %v2306 = vpack.c.b16 %v1570, %v1562
        %v2307 = vpack.c.b16 %v1571, %v1563
        %v2308 = vpack.c.b16 %v1572, %v1564
        %v2309 = vpack.c.b16 %v1581, %v1573
        %v2310 = vpack.c.b16 %v1582, %v1574
        %v2311 = vpack.c.b16 %v1583, %v1575
        %v2312 = vpack.c.b16 %v1584, %v1576
        %v2313 = vpack.c.b16 %v1585, %v1577
        %v2314 = vpack.c.b16 %v1586, %v1578
        %v2315 = vpack.c.b16 %v1587, %v1579
        %v2316 = vpack.c.b16 %v1588, %v1580
        %v2317 = vpack.c.b16 %v1597, %v1589
        %v2318 = vpack.c.b16 %v1598, %v1590
        %v2319 = vpack.c.b16 %v1599, %v1591
        %v2320 = vpack.c.b16 %v1600, %v1592
        %v2321 = vpack.c.b16 %v1601, %v1593
        %v2322 = vpack.c.b16 %v1602, %v1594
        %v2323 = vpack.c.b16 %v1603, %v1595
        %v2324 = vpack.c.b16 %v1604, %v1596
        %v2325 = vpack.c.b16 %v1613, %v1605
        %v2326 = vpack.c.b16 %v1614, %v1606
        %v2327 = vpack.c.b16 %v1615, %v1607
        %v2328 = vpack.c.b16 %v1616, %v1608
        %v2329 = vpack.c.b16 %v1617, %v1609
        %v2330 = vpack.c.b16 %v1618, %v1610
        %v2331 = vpack.c.b16 %v1619, %v1611
        %v2332 = vpack.c.b16 %v1620, %v1612
        %v2333 = vpack.c.b16 %v1629, %v1621
        %v2334 = vpack.c.b16 %v1630, %v1622
        %v2335 = vpack.c.b16 %v1631, %v1623
        %v2336 = vpack.c.b16 %v1632, %v1624
        %v2337 = vpack.c.b16 %v1633, %v1625
        %v2338 = vpack.c.b16 %v1634, %v1626
        %v2339 = vpack.c.b16 %v1635, %v1627
        %v2340 = vpack.c.b16 %v1636, %v1628
        %v2341 = vpack.c.b16 %v1645, %v1637
        %v2342 = vpack.c.b16 %v1646, %v1638
        %v2343 = vpack.c.b16 %v1647, %v1639
        %v2344 = vpack.c.b16 %v1648, %v1640
        %v2345 = vpack.c.b16 %v1649, %v1641
        %v2346 = vpack.c.b16 %v1650, %v1642
        %v2347 = vpack.c.b16 %v1651, %v1643
        %v2348 = vpack.c.b16 %v1652, %v1644
        %v2349 = vpack.c.b16 %v1661, %v1653
        %v2350 = vpack.c.b16 %v1662, %v1654
        %v2351 = vpack.c.b16 %v1663, %v1655
        %v2352 = vpack.c.b16 %v1664, %v1656
        %v2353 = vpack.c.b16 %v1665, %v1657
        %v2354 = vpack.c.b16 %v1666, %v1658
        %v2355 = vpack.c.b16 %v1667, %v1659
        %v2356 = vpack.c.b16 %v1668, %v1660
        %v2357 = vpack.c.b16 %v1677, %v1669
        %v2358 = vpack.c.b16 %v1678, %v1670
        %v2359 = vpack.c.b16 %v1679, %v1671
        %v2360 = vpack.c.b16 %v1680, %v1672
        %v2361 = vpack.c.b16 %v1681, %v1673
        %v2362 = vpack.c.b16 %v1682, %v1674
        %v2363 = vpack.c.b16 %v1683, %v1675
        %v2364 = vpack.c.b16 %v1684, %v1676
        %v2365 = vpack.c.b16 %v1693, %v1685
        %v2366 = vpack.c.b16 %v1694, %v1686
        %v2367 = vpack.c.b16 %v1695, %v1687
        %v2368 = vpack.c.b16 %v1696, %v1688
        %v2369 = vpack.c.b16 %v1697, %v1689
        %v2370 = vpack.c.b16 %v1698, %v1690
        %v2371 = vpack.c.b16 %v1699, %v1691
        %v2372 = vpack.c.b16 %v1700, %v1692
        %v2373 = vpack.c.b16 %v1709, %v1701
        %v2374 = vpack.c.b16 %v1710, %v1702
        %v2375 = vpack.c.b16 %v1711, %v1703
        %v2376 = vpack.c.b16 %v1712, %v1704
        %v2377 = vpack.c.b16 %v1713, %v1705
        %v2378 = vpack.c.b16 %v1714, %v1706
        %v2379 = vpack.c.b16 %v1715, %v1707
        %v2380 = vpack.c.b16 %v1716, %v1708
        %v2381 = vpack.c.b16 %v1725, %v1717
        %v2382 = vpack.c.b16 %v1726, %v1718
        %v2383 = vpack.c.b16 %v1727, %v1719
        %v2384 = vpack.c.b16 %v1728, %v1720
        %v2385 = vpack.c.b16 %v1729, %v1721
        %v2386 = vpack.c.b16 %v1730, %v1722
        %v2387 = vpack.c.b16 %v1731, %v1723
        %v2388 = vpack.c.b16 %v1732, %v1724
        %v2389 = vpack.c.b16 %v1741, %v1733
        %v2390 = vpack.c.b16 %v1742, %v1734
        %v2391 = vpack.c.b16 %v1743, %v1735
        %v2392 = vpack.c.b16 %v1744, %v1736
        %v2393 = vpack.c.b16 %v1745, %v1737
        %v2394 = vpack.c.b16 %v1746, %v1738
        %v2395 = vpack.c.b16 %v1747, %v1739
        %v2396 = vpack.c.b16 %v1748, %v1740
        %v2397 = vpack.c.b16 %v1757, %v1749
        %v2398 = vpack.c.b16 %v1758, %v1750
        %v2399 = vpack.c.b16 %v1759, %v1751
        %v2400 = vpack.c.b16 %v1760, %v1752
        %v2401 = vpack.c.b16 %v1761, %v1753
        %v2402 = vpack.c.b16 %v1762, %v1754
        %v2403 = vpack.c.b16 %v1763, %v1755
        %v2404 = vpack.c.b16 %v1764, %v1756
        %v2405 = vpack.c.b16 %v1773, %v1765
        %v2406 = vpack.c.b16 %v1774, %v1766
        %v2407 = vpack.c.b16 %v1775, %v1767
        %v2408 = vpack.c.b16 %v1776, %v1768
        %v2409 = vpack.c.b16 %v1777, %v1769
        %v2410 = vpack.c.b16 %v1778, %v1770
        %v2411 = vpack.c.b16 %v1779, %v1771
        %v2412 = vpack.c.b16 %v1780, %v1772
        %v2413 = vpack.c.b16 %v1789, %v1781
        %v2414 = vpack.c.b16 %v1790, %v1782
        %v2415 = vpack.c.b16 %v1791, %v1783
        %v2416 = vpack.c.b16 %v1792, %v1784
        %v2417 = vpack.c.b16 %v1793, %v1785
        %v2418 = vpack.c.b16 %v1794, %v1786
        %v2419 = vpack.c.b16 %v1795, %v1787
        %v2420 = vpack.c.b16 %v1796, %v1788
        %v2421 = vpack.c.b16 %v1805, %v1797
        %v2422 = vpack.c.b16 %v1806, %v1798
        %v2423 = vpack.c.b16 %v1807, %v1799
        %v2424 = vpack.c.b16 %v1808, %v1800
        %v2425 = vpack.c.b16 %v1809, %v1801
        %v2426 = vpack.c.b16 %v1810, %v1802
        %v2427 = vpack.c.b16 %v1811, %v1803
        %v2428 = vpack.c.b16 %v1812, %v1804
        %v2429 = vpack.c.b16 %v1821, %v1813
        %v2430 = vpack.c.b16 %v1822, %v1814
        %v2431 = vpack.c.b16 %v1823, %v1815
        %v2432 = vpack.c.b16 %v1824, %v1816
        %v2433 = vpack.c.b16 %v1825, %v1817
        %v2434 = vpack.c.b16 %v1826, %v1818
        %v2435 = vpack.c.b16 %v1827, %v1819
        %v2436 = vpack.c.b16 %v1828, %v1820
        %v2437 = vpack.c.b16 %v1837, %v1829
        %v2438 = vpack.c.b16 %v1838, %v1830
        %v2439 = vpack.c.b16 %v1839, %v1831
        %v2440 = vpack.c.b16 %v1840, %v1832
        %v2441 = vpack.c.b16 %v1841, %v1833
        %v2442 = vpack.c.b16 %v1842, %v1834
        %v2443 = vpack.c.b16 %v1843, %v1835
        %v2444 = vpack.c.b16 %v1844, %v1836
        %v2445 = vpack.c.b16 %v1853, %v1845
        %v2446 = vpack.c.b16 %v1854, %v1846
        %v2447 = vpack.c.b16 %v1855, %v1847
        %v2448 = vpack.c.b16 %v1856, %v1848
        %v2449 = vpack.c.b16 %v1857, %v1849
        %v2450 = vpack.c.b16 %v1858, %v1850
        %v2451 = vpack.c.b16 %v1859, %v1851
        %v2452 = vpack.c.b16 %v1860, %v1852
        %v2453 = vpack.c.b16 %v1869, %v1861
        %v2454 = vpack.c.b16 %v1870, %v1862
        %v2455 = vpack.c.b16 %v1871, %v1863
        %v2456 = vpack.c.b16 %v1872, %v1864
        %v2457 = vpack.c.b16 %v1873, %v1865
        %v2458 = vpack.c.b16 %v1874, %v1866
        %v2459 = vpack.c.b16 %v1875, %v1867
        %v2460 = vpack.c.b16 %v1876, %v1868
        %v2461 = vpack.c.b16 %v1885, %v1877
        %v2462 = vpack.c.b16 %v1886, %v1878
        %v2463 = vpack.c.b16 %v1887, %v1879
        %v2464 = vpack.c.b16 %v1888, %v1880
        %v2465 = vpack.c.b16 %v1889, %v1881
        %v2466 = vpack.c.b16 %v1890, %v1882
        %v2467 = vpack.c.b16 %v1891, %v1883
        %v2468 = vpack.c.b16 %v1892, %v1884
        %v2469 = vpack.c.b16 %v1901, %v1893
        %v2470 = vpack.c.b16 %v1902, %v1894
        %v2471 = vpack.c.b16 %v1903, %v1895
        %v2472 = vpack.c.b16 %v1904, %v1896
        %v2473 = vpack.c.b16 %v1905, %v1897
        %v2474 = vpack.c.b16 %v1906, %v1898
        %v2475 = vpack.c.b16 %v1907, %v1899
        %v2476 = vpack.c.b16 %v1908, %v1900
        %v2477 = vpack.c.b16 %v1917, %v1909
        %v2478 = vpack.c.b16 %v1918, %v1910
        %v2479 = vpack.c.b16 %v1919, %v1911
        %v2480 = vpack.c.b16 %v1920, %v1912
        %v2481 = vpack.c.b16 %v1921, %v1913
        %v2482 = vpack.c.b16 %v1922, %v1914
        %v2483 = vpack.c.b16 %v1923, %v1915
        %v2484 = vpack.c.b16 %v1924, %v1916
        %v2485 = vpack.c.b16 %v1933, %v1925
        %v2486 = vpack.c.b16 %v1934, %v1926
        %v2487 = vpack.c.b16 %v1935, %v1927
        %v2488 = vpack.c.b16 %v1936, %v1928
        %v2489 = vpack.c.b16 %v1937, %v1929
        %v2490 = vpack.c.b16 %v1938, %v1930
        %v2491 = vpack.c.b16 %v1939, %v1931
        %v2492 = vpack.c.b16 %v1940, %v1932
        %v2493 = vpack.c.b16 %v1949, %v1941
        %v2494 = vpack.c.b16 %v1950, %v1942
        %v2495 = vpack.c.b16 %v1951, %v1943
        %v2496 = vpack.c.b16 %v1952, %v1944
        %v2497 = vpack.c.b16 %v1953, %v1945
        %v2498 = vpack.c.b16 %v1954, %v1946
        %v2499 = vpack.c.b16 %v1955, %v1947
        %v2500 = vpack.c.b16 %v1956, %v1948
        %v2501 = vpack.c.b16 %v1965, %v1957
        %v2502 = vpack.c.b16 %v1966, %v1958
        %v2503 = vpack.c.b16 %v1967, %v1959
        %v2504 = vpack.c.b16 %v1968, %v1960
        %v2505 = vpack.c.b16 %v1969, %v1961
        %v2506 = vpack.c.b16 %v1970, %v1962
        %v2507 = vpack.c.b16 %v1971, %v1963
        %v2508 = vpack.c.b16 %v1972, %v1964
        %v2509 = vpack.c.b16 %v1981, %v1973
        %v2510 = vpack.c.b16 %v1982, %v1974
        %v2511 = vpack.c.b16 %v1983, %v1975
        %v2512 = vpack.c.b16 %v1984, %v1976
        %v2513 = vpack.c.b16 %v1985, %v1977
        %v2514 = vpack.c.b16 %v1986, %v1978
        %v2515 = vpack.c.b16 %v1987, %v1979
        %v2516 = vpack.c.b16 %v1988, %v1980
        %v2517 = vpack.c.b16 %v1997, %v1989
        %v2518 = vpack.c.b16 %v1998, %v1990
        %v2519 = vpack.c.b16 %v1999, %v1991
        %v2520 = vpack.c.b16 %v2000, %v1992
        %v2521 = vpack.c.b16 %v2001, %v1993
        %v2522 = vpack.c.b16 %v2002, %v1994
        %v2523 = vpack.c.b16 %v2003, %v1995
        %v2524 = vpack.c.b16 %v2004, %v1996
        %v2525 = vpack.c.b16 %v2013, %v2005
        %v2526 = vpack.c.b16 %v2014, %v2006
        %v2527 = vpack.c.b16 %v2015, %v2007
        %v2528 = vpack.c.b16 %v2016, %v2008
        %v2529 = vpack.c.b16 %v2017, %v2009
        %v2530 = vpack.c.b16 %v2018, %v2010
        %v2531 = vpack.c.b16 %v2019, %v2011
        %v2532 = vpack.c.b16 %v2020, %v2012
        %v2533 = vpack.c.b16 %v2029, %v2021
        %v2534 = vpack.c.b16 %v2030, %v2022
        %v2535 = vpack.c.b16 %v2031, %v2023
        %v2536 = vpack.c.b16 %v2032, %v2024
        %v2537 = vpack.c.b16 %v2033, %v2025
        %v2538 = vpack.c.b16 %v2034, %v2026
        %v2539 = vpack.c.b16 %v2035, %v2027
        %v2540 = vpack.c.b16 %v2036, %v2028
        %v2541 = vpack.c.b16 %v2045, %v2037
        %v2542 = vpack.c.b16 %v2046, %v2038
        %v2543 = vpack.c.b16 %v2047, %v2039
        %v2544 = vpack.c.b16 %v2048, %v2040
        %v2545 = vpack.c.b16 %v2049, %v2041
        %v2546 = vpack.c.b16 %v2050, %v2042
        %v2547 = vpack.c.b16 %v2051, %v2043
        %v2548 = vpack.c.b16 %v2052, %v2044
        %v2549 = vpack.c.b16 %v2061, %v2053
        %v2550 = vpack.c.b16 %v2062, %v2054
        %v2551 = vpack.c.b16 %v2063, %v2055
        %v2552 = vpack.c.b16 %v2064, %v2056
        %v2553 = vpack.c.b16 %v2065, %v2057
        %v2554 = vpack.c.b16 %v2066, %v2058
        %v2555 = vpack.c.b16 %v2067, %v2059
        %v2556 = vpack.c.b16 %v2068, %v2060
        %v2557 = vpack.c.b16 %v2077, %v2069
        %v2558 = vpack.c.b16 %v2078, %v2070
        %v2559 = vpack.c.b16 %v2079, %v2071
        %v2560 = vpack.c.b16 %v2080, %v2072
        %v2561 = vpack.c.b16 %v2081, %v2073
        %v2562 = vpack.c.b16 %v2082, %v2074
        %v2563 = vpack.c.b16 %v2083, %v2075
        %v2564 = vpack.c.b16 %v2084, %v2076
        %v2565 = vpack.c.b16 %v2093, %v2085
        %v2566 = vpack.c.b16 %v2094, %v2086
        %v2567 = vpack.c.b16 %v2095, %v2087
        %v2568 = vpack.c.b16 %v2096, %v2088
        %v2569 = vpack.c.b16 %v2097, %v2089
        %v2570 = vpack.c.b16 %v2098, %v2090
        %v2571 = vpack.c.b16 %v2099, %v2091
        %v2572 = vpack.c.b16 %v2100, %v2092
        %v2573 = vpack.c.b16 %v2109, %v2101
        %v2574 = vpack.c.b16 %v2110, %v2102
        %v2575 = vpack.c.b16 %v2111, %v2103
        %v2576 = vpack.c.b16 %v2112, %v2104
        %v2577 = vpack.c.b16 %v2113, %v2105
        %v2578 = vpack.c.b16 %v2114, %v2106
        %v2579 = vpack.c.b16 %v2115, %v2107
        %v2580 = vpack.c.b16 %v2116, %v2108
        %v2581 = vpack.c.b16 %v2125, %v2117
        %v2582 = vpack.c.b16 %v2126, %v2118
        %v2583 = vpack.c.b16 %v2127, %v2119
        %v2584 = vpack.c.b16 %v2128, %v2120
        %v2585 = vpack.c.b16 %v2129, %v2121
        %v2586 = vpack.c.b16 %v2130, %v2122
        %v2587 = vpack.c.b16 %v2131, %v2123
        %v2588 = vpack.c.b16 %v2132, %v2124
        %v2589 = vpack.c.b16 %v2141, %v2133
        %v2590 = vpack.c.b16 %v2142, %v2134
        %v2591 = vpack.c.b16 %v2143, %v2135
        %v2592 = vpack.c.b16 %v2144, %v2136
        %v2593 = vpack.c.b16 %v2145, %v2137
        %v2594 = vpack.c.b16 %v2146, %v2138
        %v2595 = vpack.c.b16 %v2147, %v2139
        %v2596 = vpack.c.b16 %v2148, %v2140
        %v2597 = vpack.c.b16 %v2157, %v2149
        %v2598 = vpack.c.b16 %v2158, %v2150
        %v2599 = vpack.c.b16 %v2159, %v2151
        %v2600 = vpack.c.b16 %v2160, %v2152
        %v2601 = vpack.c.b16 %v2161, %v2153
        %v2602 = vpack.c.b16 %v2162, %v2154
        %v2603 = vpack.c.b16 %v2163, %v2155
        %v2604 = vpack.c.b16 %v2164, %v2156
        %v2605 = vpack.c.b16 %v2173, %v2165
        %v2606 = vpack.c.b16 %v2174, %v2166
        %v2607 = vpack.c.b16 %v2175, %v2167
        %v2608 = vpack.c.b16 %v2176, %v2168
        %v2609 = vpack.c.b16 %v2177, %v2169
        %v2610 = vpack.c.b16 %v2178, %v2170
        %v2611 = vpack.c.b16 %v2179, %v2171
        %v2612 = vpack.c.b16 %v2180, %v2172
        %v2613 = vpack.c.b16 %v2189, %v2181
        %v2614 = vpack.c.b16 %v2190, %v2182
        %v2615 = vpack.c.b16 %v2191, %v2183
        %v2616 = vpack.c.b16 %v2192, %v2184
        %v2617 = vpack.c.b16 %v2193, %v2185
        %v2618 = vpack.c.b16 %v2194, %v2186
        %v2619 = vpack.c.b16 %v2195, %v2187
        %v2620 = vpack.c.b16 %v2196, %v2188
        %v2621 = vpack.c.b16 %v2205, %v2197
        %v2622 = vpack.c.b16 %v2206, %v2198
        %v2623 = vpack.c.b16 %v2207, %v2199
        %v2624 = vpack.c.b16 %v2208, %v2200
        %v2625 = vpack.c.b16 %v2209, %v2201
        %v2626 = vpack.c.b16 %v2210, %v2202
        %v2627 = vpack.c.b16 %v2211, %v2203
        %v2628 = vpack.c.b16 %v2212, %v2204
        %v2629 = vpack.c.b16 %v2221, %v2213
        %v2630 = vpack.c.b16 %v2222, %v2214
        %v2631 = vpack.c.b16 %v2223, %v2215
        %v2632 = vpack.c.b16 %v2224, %v2216
        %v2633 = vpack.c.b16 %v2225, %v2217
        %v2634 = vpack.c.b16 %v2226, %v2218
        %v2635 = vpack.c.b16 %v2227, %v2219
        %v2636 = vpack.c.b16 %v2228, %v2220
        %v2637 = vpack.c.b16 %v2237, %v2229
        %v2638 = vpack.c.b16 %v2238, %v2230
        %v2639 = vpack.c.b16 %v2239, %v2231
        %v2640 = vpack.c.b16 %v2240, %v2232
        %v2641 = vpack.c.b16 %v2241, %v2233
        %v2642 = vpack.c.b16 %v2242, %v2234
        %v2643 = vpack.c.b16 %v2243, %v2235
        %v2644 = vpack.c.b16 %v2244, %v2236
        %v2645 = vpack.c.b16 %v2253, %v2245
        %v2646 = vpack.c.b16 %v2254, %v2246
        %v2647 = vpack.c.b16 %v2255, %v2247
        %v2648 = vpack.c.b16 %v2256, %v2248
        %v2649 = vpack.c.b16 %v2257, %v2249
        %v2650 = vpack.c.b16 %v2258, %v2250
        %v2651 = vpack.c.b16 %v2259, %v2251
        %v2652 = vpack.c.b16 %v2260, %v2252
        %v2653 = vpack.c.b16 %v2269, %v2261
        %v2654 = vpack.c.b16 %v2270, %v2262
        %v2655 = vpack.c.b16 %v2271, %v2263
        %v2656 = vpack.c.b16 %v2272, %v2264
        %v2657 = vpack.c.b16 %v2273, %v2265
        %v2658 = vpack.c.b16 %v2274, %v2266
        %v2659 = vpack.c.b16 %v2275, %v2267
        %v2660 = vpack.c.b16 %v2276, %v2268
        %3045 = vmatprep.subr.bf16.mxu0 %v2334
        %3046 = vmatpush1.bf16.msra.mxu0 %v2333
        %3047 = vmatprep.subr.bf16.mxu0 %v2326
        %3048 = vmatpush1.bf16.msra.mxu0 %v2325
        %3049 = vmatprep.subr.bf16.mxu0 %v2318
        %3050 = vmatpush1.bf16.msra.mxu0 %v2317
        %3051 = vmatprep.subr.bf16.mxu0 %v2310
        %3052 = vmatpush1.bf16.msra.mxu0 %v2309
        %3053 = vmatprep.subr.bf16.mxu0 %v2302
        %3054 = vmatpush1.bf16.msra.mxu0 %v2301
        %3055 = vmatprep.subr.bf16.mxu0 %v2294
        %3056 = vmatpush1.bf16.msra.mxu0 %v2293
        %3057 = vmatprep.subr.bf16.mxu0 %v2286
        %3058 = vmatpush1.bf16.msra.mxu0 %v2285
        %3059 = vmatprep.subr.bf16.mxu0 %v2278
        %3060 = vmatpush1.bf16.msra.mxu0 %v2277
        %3061 = vmatprep.subr.bf16.mxu0 %v2398
        %3062 = vmatpush2.bf16.msra.mxu0 %v2397
        %3063 = vmatprep.subr.bf16.mxu0 %v2390
        %3064 = vmatpush2.bf16.msra.mxu0 %v2389
        %3065 = vmatprep.subr.bf16.mxu0 %v2382
        %3066 = vmatpush2.bf16.msra.mxu0 %v2381
        %3067 = vmatprep.subr.bf16.mxu0 %v2374
        %3068 = vmatpush2.bf16.msra.mxu0 %v2373
        %3069 = vmatprep.subr.bf16.mxu0 %v2366
        %3070 = vmatpush2.bf16.msra.mxu0 %v2365
        %3071 = vmatprep.subr.bf16.mxu0 %v2358
        %3072 = vmatpush2.bf16.msra.mxu0 %v2357
        %3073 = vmatprep.subr.bf16.mxu0 %v2350
        %3074 = vmatpush2.bf16.msra.mxu0 %v2349
        %3075 = vmatprep.subr.bf16.mxu0 %v2342
        %3076 = vmatpush2.bf16.msra.mxu0 %v2341
        %3077 = vmatprep.mubr.bf16.mxu0 %v1114
        %3078 = vmatmul.mubr.bf16.gmra.mxu0 %v1113
        %v3079 = vpop.f32.mrf.mxu0
        %v3080 = vadd.f32 0.0, %v3079
        %v3081 = vpop.f32.mrf.mxu0
        %v3082 = vadd.f32 0.0, %v3081
        %v3083 = vpop.f32.mrf.mxu0
        %v3084 = vpop.f32.mrf.mxu0
        %3085 = vdwg.mxu0
        %3086 = vmatprep.subr.bf16.mxu0 %v2462
        %3087 = vmatpush1.bf16.msra.mxu0 %v2461
        %3088 = vmatprep.subr.bf16.mxu0 %v2454
        %3089 = vmatpush1.bf16.msra.mxu0 %v2453
        %3090 = vmatprep.subr.bf16.mxu0 %v2446
        %3091 = vmatpush1.bf16.msra.mxu0 %v2445
        %3092 = vmatprep.subr.bf16.mxu0 %v2438
        %3093 = vmatpush1.bf16.msra.mxu0 %v2437
        %3094 = vmatprep.subr.bf16.mxu0 %v2430
        %3095 = vmatpush1.bf16.msra.mxu0 %v2429
        %3096 = vmatprep.subr.bf16.mxu0 %v2422
        %3097 = vmatpush1.bf16.msra.mxu0 %v2421
        %3098 = vmatprep.subr.bf16.mxu0 %v2414
        %3099 = vmatpush1.bf16.msra.mxu0 %v2413
        %3100 = vmatprep.subr.bf16.mxu0 %v2406
        %3101 = vmatpush1.bf16.msra.mxu0 %v2405
        %3102 = vmatprep.subr.bf16.mxu0 %v2526
        %3103 = vmatpush2.bf16.msra.mxu0 %v2525
        %3104 = vmatprep.subr.bf16.mxu0 %v2518
        %3105 = vmatpush2.bf16.msra.mxu0 %v2517
        %3106 = vmatprep.subr.bf16.mxu0 %v2510
        %3107 = vmatpush2.bf16.msra.mxu0 %v2509
        %3108 = vmatprep.subr.bf16.mxu0 %v2502
        %3109 = vmatpush2.bf16.msra.mxu0 %v2501
        %3110 = vmatprep.subr.bf16.mxu0 %v2494
        %3111 = vmatpush2.bf16.msra.mxu0 %v2493
        %3112 = vmatprep.subr.bf16.mxu0 %v2486
        %3113 = vmatpush2.bf16.msra.mxu0 %v2485
        %3114 = vmatprep.subr.bf16.mxu0 %v2478
        %3115 = vmatpush2.bf16.msra.mxu0 %v2477
        %3116 = vmatprep.subr.bf16.mxu0 %v2470
        %3117 = vmatpush2.bf16.msra.mxu0 %v2469
        %3118 = vmatprep.mubr.bf16.mxu0 %v1116
        %3119 = vmatmul.mubr.bf16.gmra.mxu0 %v1115
        %v3120 = vpop.f32.mrf.mxu0
        %v3121 = vadd.f32 %v3080, %v3120
        %v3122 = vpop.f32.mrf.mxu0
        %v3123 = vadd.f32 %v3082, %v3122
        %v3124 = vpop.f32.mrf.mxu0
        %v3125 = vpop.f32.mrf.mxu0
        %3126 = vdwg.mxu0
        %3127 = vmatprep.subr.bf16.mxu0 %v2590
        %3128 = vmatpush1.bf16.msra.mxu0 %v2589
        %3129 = vmatprep.subr.bf16.mxu0 %v2582
        %3130 = vmatpush1.bf16.msra.mxu0 %v2581
        %3131 = vmatprep.subr.bf16.mxu0 %v2574
        %3132 = vmatpush1.bf16.msra.mxu0 %v2573
        %3133 = vmatprep.subr.bf16.mxu0 %v2566
        %3134 = vmatpush1.bf16.msra.mxu0 %v2565
        %3135 = vmatprep.subr.bf16.mxu0 %v2558
        %3136 = vmatpush1.bf16.msra.mxu0 %v2557
        %3137 = vmatprep.subr.bf16.mxu0 %v2550
        %3138 = vmatpush1.bf16.msra.mxu0 %v2549
        %3139 = vmatprep.subr.bf16.mxu0 %v2542
        %3140 = vmatpush1.bf16.msra.mxu0 %v2541
        %3141 = vmatprep.subr.bf16.mxu0 %v2534
        %3142 = vmatpush1.bf16.msra.mxu0 %v2533
        %3143 = vmatprep.subr.bf16.mxu0 %v2654
        %3144 = vmatpush2.bf16.msra.mxu0 %v2653
        %3145 = vmatprep.subr.bf16.mxu0 %v2646
        %3146 = vmatpush2.bf16.msra.mxu0 %v2645
        %3147 = vmatprep.subr.bf16.mxu0 %v2638
        %3148 = vmatpush2.bf16.msra.mxu0 %v2637
        %3149 = vmatprep.subr.bf16.mxu0 %v2630
        %3150 = vmatpush2.bf16.msra.mxu0 %v2629
        %3151 = vmatprep.subr.bf16.mxu0 %v2622
        %3152 = vmatpush2.bf16.msra.mxu0 %v2621
        %3153 = vmatprep.subr.bf16.mxu0 %v2614
        %3154 = vmatpush2.bf16.msra.mxu0 %v2613
        %3155 = vmatprep.subr.bf16.mxu0 %v2606
        %3156 = vmatpush2.bf16.msra.mxu0 %v2605
        %3157 = vmatprep.subr.bf16.mxu0 %v2598
        %3158 = vmatpush2.bf16.msra.mxu0 %v2597
        %3159 = vmatprep.mubr.bf16.mxu0 %v1118
        %3160 = vmatmul.mubr.bf16.gmra.mxu0 %v1117
        %v3161 = vpop.f32.mrf.mxu0
        %v3162 = vadd.f32 %v3121, %v3161
        %v3163 = vpop.f32.mrf.mxu0
        %v3164 = vadd.f32 %v3123, %v3163
        %v3165 = vpop.f32.mrf.mxu0
        %v3166 = vpop.f32.mrf.mxu0
        %3167 = vdwg.mxu0
        %3168 = vmatprep.subr.bf16.mxu0 %v2336
        %3169 = vmatpush1.bf16.msra.mxu0 %v2335
        %3170 = vmatprep.subr.bf16.mxu0 %v2328
        %3171 = vmatpush1.bf16.msra.mxu0 %v2327
        %3172 = vmatprep.subr.bf16.mxu0 %v2320
        %3173 = vmatpush1.bf16.msra.mxu0 %v2319
        %3174 = vmatprep.subr.bf16.mxu0 %v2312
        %3175 = vmatpush1.bf16.msra.mxu0 %v2311
        %3176 = vmatprep.subr.bf16.mxu0 %v2304
        %3177 = vmatpush1.bf16.msra.mxu0 %v2303
        %3178 = vmatprep.subr.bf16.mxu0 %v2296
        %3179 = vmatpush1.bf16.msra.mxu0 %v2295
        %3180 = vmatprep.subr.bf16.mxu0 %v2288
        %3181 = vmatpush1.bf16.msra.mxu0 %v2287
        %3182 = vmatprep.subr.bf16.mxu0 %v2280
        %3183 = vmatpush1.bf16.msra.mxu0 %v2279
        %3184 = vmatprep.subr.bf16.mxu0 %v2400
        %3185 = vmatpush2.bf16.msra.mxu0 %v2399
        %3186 = vmatprep.subr.bf16.mxu0 %v2392
        %3187 = vmatpush2.bf16.msra.mxu0 %v2391
        %3188 = vmatprep.subr.bf16.mxu0 %v2384
        %3189 = vmatpush2.bf16.msra.mxu0 %v2383
        %3190 = vmatprep.subr.bf16.mxu0 %v2376
        %3191 = vmatpush2.bf16.msra.mxu0 %v2375
        %3192 = vmatprep.subr.bf16.mxu0 %v2368
        %3193 = vmatpush2.bf16.msra.mxu0 %v2367
        %3194 = vmatprep.subr.bf16.mxu0 %v2360
        %3195 = vmatpush2.bf16.msra.mxu0 %v2359
        %3196 = vmatprep.subr.bf16.mxu0 %v2352
        %3197 = vmatpush2.bf16.msra.mxu0 %v2351
        %3198 = vmatprep.subr.bf16.mxu0 %v2344
        %3199 = vmatpush2.bf16.msra.mxu0 %v2343
        %3200 = vmatprep.mubr.bf16.mxu0 %v1114
        %3201 = vmatmul.mubr.bf16.gmra.mxu0 %v1113
        %v3202 = vpop.f32.mrf.mxu0
        %v3203 = vadd.f32 0.0, %v3202
        %v3204 = vpop.f32.mrf.mxu0
        %v3205 = vadd.f32 0.0, %v3204
        %v3206 = vpop.f32.mrf.mxu0
        %v3207 = vpop.f32.mrf.mxu0
        %3208 = vdwg.mxu0
        %3209 = vmatprep.subr.bf16.mxu0 %v2464
        %3210 = vmatpush1.bf16.msra.mxu0 %v2463
        %3211 = vmatprep.subr.bf16.mxu0 %v2456
        %3212 = vmatpush1.bf16.msra.mxu0 %v2455
        %3213 = vmatprep.subr.bf16.mxu0 %v2448
        %3214 = vmatpush1.bf16.msra.mxu0 %v2447
        %3215 = vmatprep.subr.bf16.mxu0 %v2440
        %3216 = vmatpush1.bf16.msra.mxu0 %v2439
        %3217 = vmatprep.subr.bf16.mxu0 %v2432
        %3218 = vmatpush1.bf16.msra.mxu0 %v2431
        %3219 = vmatprep.subr.bf16.mxu0 %v2424
        %3220 = vmatpush1.bf16.msra.mxu0 %v2423
        %3221 = vmatprep.subr.bf16.mxu0 %v2416
        %3222 = vmatpush1.bf16.msra.mxu0 %v2415
        %3223 = vmatprep.subr.bf16.mxu0 %v2408
        %3224 = vmatpush1.bf16.msra.mxu0 %v2407
        %3225 = vmatprep.subr.bf16.mxu0 %v2528
        %3226 = vmatpush2.bf16.msra.mxu0 %v2527
        %3227 = vmatprep.subr.bf16.mxu0 %v2520
        %3228 = vmatpush2.bf16.msra.mxu0 %v2519
        %3229 = vmatprep.subr.bf16.mxu0 %v2512
        %3230 = vmatpush2.bf16.msra.mxu0 %v2511
        %3231 = vmatprep.subr.bf16.mxu0 %v2504
        %3232 = vmatpush2.bf16.msra.mxu0 %v2503
        %3233 = vmatprep.subr.bf16.mxu0 %v2496
        %3234 = vmatpush2.bf16.msra.mxu0 %v2495
        %3235 = vmatprep.subr.bf16.mxu0 %v2488
        %3236 = vmatpush2.bf16.msra.mxu0 %v2487
        %3237 = vmatprep.subr.bf16.mxu0 %v2480
        %3238 = vmatpush2.bf16.msra.mxu0 %v2479
        %3239 = vmatprep.subr.bf16.mxu0 %v2472
        %3240 = vmatpush2.bf16.msra.mxu0 %v2471
        %3241 = vmatprep.mubr.bf16.mxu0 %v1116
        %3242 = vmatmul.mubr.bf16.gmra.mxu0 %v1115
        %v3243 = vpop.f32.mrf.mxu0
        %v3244 = vadd.f32 %v3203, %v3243
        %v3245 = vpop.f32.mrf.mxu0
        %v3246 = vadd.f32 %v3205, %v3245
        %v3247 = vpop.f32.mrf.mxu0
        %v3248 = vpop.f32.mrf.mxu0
        %3249 = vdwg.mxu0
        %3250 = vmatprep.subr.bf16.mxu0 %v2592
        %3251 = vmatpush1.bf16.msra.mxu0 %v2591
        %3252 = vmatprep.subr.bf16.mxu0 %v2584
        %3253 = vmatpush1.bf16.msra.mxu0 %v2583
        %3254 = vmatprep.subr.bf16.mxu0 %v2576
        %3255 = vmatpush1.bf16.msra.mxu0 %v2575
        %3256 = vmatprep.subr.bf16.mxu0 %v2568
        %3257 = vmatpush1.bf16.msra.mxu0 %v2567
        %3258 = vmatprep.subr.bf16.mxu0 %v2560
        %3259 = vmatpush1.bf16.msra.mxu0 %v2559
        %3260 = vmatprep.subr.bf16.mxu0 %v2552
        %3261 = vmatpush1.bf16.msra.mxu0 %v2551
        %3262 = vmatprep.subr.bf16.mxu0 %v2544
        %3263 = vmatpush1.bf16.msra.mxu0 %v2543
        %3264 = vmatprep.subr.bf16.mxu0 %v2536
        %3265 = vmatpush1.bf16.msra.mxu0 %v2535
        %3266 = vmatprep.subr.bf16.mxu0 %v2656
        %3267 = vmatpush2.bf16.msra.mxu0 %v2655
        %3268 = vmatprep.subr.bf16.mxu0 %v2648
        %3269 = vmatpush2.bf16.msra.mxu0 %v2647
        %3270 = vmatprep.subr.bf16.mxu0 %v2640
        %3271 = vmatpush2.bf16.msra.mxu0 %v2639
        %3272 = vmatprep.subr.bf16.mxu0 %v2632
        %3273 = vmatpush2.bf16.msra.mxu0 %v2631
        %3274 = vmatprep.subr.bf16.mxu0 %v2624
        %3275 = vmatpush2.bf16.msra.mxu0 %v2623
        %3276 = vmatprep.subr.bf16.mxu0 %v2616
        %3277 = vmatpush2.bf16.msra.mxu0 %v2615
        %3278 = vmatprep.subr.bf16.mxu0 %v2608
        %3279 = vmatpush2.bf16.msra.mxu0 %v2607
        %3280 = vmatprep.subr.bf16.mxu0 %v2600
        %3281 = vmatpush2.bf16.msra.mxu0 %v2599
        %3282 = vmatprep.mubr.bf16.mxu0 %v1118
        %3283 = vmatmul.mubr.bf16.gmra.mxu0 %v1117
        %v3284 = vpop.f32.mrf.mxu0
        %v3285 = vadd.f32 %v3244, %v3284
        %v3286 = vpop.f32.mrf.mxu0
        %v3287 = vadd.f32 %v3246, %v3286
        %v3288 = vpop.f32.mrf.mxu0
        %v3289 = vpop.f32.mrf.mxu0
        %3290 = vdwg.mxu0
        %3291 = vmatprep.subr.bf16.mxu0 %v2338
        %3292 = vmatpush1.bf16.msra.mxu0 %v2337
        %3293 = vmatprep.subr.bf16.mxu0 %v2330
        %3294 = vmatpush1.bf16.msra.mxu0 %v2329
        %3295 = vmatprep.subr.bf16.mxu0 %v2322
        %3296 = vmatpush1.bf16.msra.mxu0 %v2321
        %3297 = vmatprep.subr.bf16.mxu0 %v2314
        %3298 = vmatpush1.bf16.msra.mxu0 %v2313
        %3299 = vmatprep.subr.bf16.mxu0 %v2306
        %3300 = vmatpush1.bf16.msra.mxu0 %v2305
        %3301 = vmatprep.subr.bf16.mxu0 %v2298
        %3302 = vmatpush1.bf16.msra.mxu0 %v2297
        %3303 = vmatprep.subr.bf16.mxu0 %v2290
        %3304 = vmatpush1.bf16.msra.mxu0 %v2289
        %3305 = vmatprep.subr.bf16.mxu0 %v2282
        %3306 = vmatpush1.bf16.msra.mxu0 %v2281
        %3307 = vmatprep.subr.bf16.mxu0 %v2402
        %3308 = vmatpush2.bf16.msra.mxu0 %v2401
        %3309 = vmatprep.subr.bf16.mxu0 %v2394
        %3310 = vmatpush2.bf16.msra.mxu0 %v2393
        %3311 = vmatprep.subr.bf16.mxu0 %v2386
        %3312 = vmatpush2.bf16.msra.mxu0 %v2385
        %3313 = vmatprep.subr.bf16.mxu0 %v2378
        %3314 = vmatpush2.bf16.msra.mxu0 %v2377
        %3315 = vmatprep.subr.bf16.mxu0 %v2370
        %3316 = vmatpush2.bf16.msra.mxu0 %v2369
        %3317 = vmatprep.subr.bf16.mxu0 %v2362
        %3318 = vmatpush2.bf16.msra.mxu0 %v2361
        %3319 = vmatprep.subr.bf16.mxu0 %v2354
        %3320 = vmatpush2.bf16.msra.mxu0 %v2353
        %3321 = vmatprep.subr.bf16.mxu0 %v2346
        %3322 = vmatpush2.bf16.msra.mxu0 %v2345
        %3323 = vmatprep.mubr.bf16.mxu0 %v1114
        %3324 = vmatmul.mubr.bf16.gmra.mxu0 %v1113
        %v3325 = vpop.f32.mrf.mxu0
        %v3326 = vadd.f32 0.0, %v3325
        %v3327 = vpop.f32.mrf.mxu0
        %v3328 = vadd.f32 0.0, %v3327
        %v3329 = vpop.f32.mrf.mxu0
        %v3330 = vpop.f32.mrf.mxu0
        %3331 = vdwg.mxu0
        %3332 = vmatprep.subr.bf16.mxu0 %v2466
        %3333 = vmatpush1.bf16.msra.mxu0 %v2465
        %3334 = vmatprep.subr.bf16.mxu0 %v2458
        %3335 = vmatpush1.bf16.msra.mxu0 %v2457
        %3336 = vmatprep.subr.bf16.mxu0 %v2450
        %3337 = vmatpush1.bf16.msra.mxu0 %v2449
        %3338 = vmatprep.subr.bf16.mxu0 %v2442
        %3339 = vmatpush1.bf16.msra.mxu0 %v2441
        %3340 = vmatprep.subr.bf16.mxu0 %v2434
        %3341 = vmatpush1.bf16.msra.mxu0 %v2433
        %3342 = vmatprep.subr.bf16.mxu0 %v2426
        %3343 = vmatpush1.bf16.msra.mxu0 %v2425
        %3344 = vmatprep.subr.bf16.mxu0 %v2418
        %3345 = vmatpush1.bf16.msra.mxu0 %v2417
        %3346 = vmatprep.subr.bf16.mxu0 %v2410
        %3347 = vmatpush1.bf16.msra.mxu0 %v2409
        %3348 = vmatprep.subr.bf16.mxu0 %v2530
        %3349 = vmatpush2.bf16.msra.mxu0 %v2529
        %3350 = vmatprep.subr.bf16.mxu0 %v2522
        %3351 = vmatpush2.bf16.msra.mxu0 %v2521
        %3352 = vmatprep.subr.bf16.mxu0 %v2514
        %3353 = vmatpush2.bf16.msra.mxu0 %v2513
        %3354 = vmatprep.subr.bf16.mxu0 %v2506
        %3355 = vmatpush2.bf16.msra.mxu0 %v2505
        %3356 = vmatprep.subr.bf16.mxu0 %v2498
        %3357 = vmatpush2.bf16.msra.mxu0 %v2497
        %3358 = vmatprep.subr.bf16.mxu0 %v2490
        %3359 = vmatpush2.bf16.msra.mxu0 %v2489
        %3360 = vmatprep.subr.bf16.mxu0 %v2482
        %3361 = vmatpush2.bf16.msra.mxu0 %v2481
        %3362 = vmatprep.subr.bf16.mxu0 %v2474
        %3363 = vmatpush2.bf16.msra.mxu0 %v2473
        %3364 = vmatprep.mubr.bf16.mxu0 %v1116
        %3365 = vmatmul.mubr.bf16.gmra.mxu0 %v1115
        %v3366 = vpop.f32.mrf.mxu0
        %v3367 = vadd.f32 %v3326, %v3366
        %v3368 = vpop.f32.mrf.mxu0
        %v3369 = vadd.f32 %v3328, %v3368
        %v3370 = vpop.f32.mrf.mxu0
        %v3371 = vpop.f32.mrf.mxu0
        %3372 = vdwg.mxu0
        %3373 = vmatprep.subr.bf16.mxu0 %v2594
        %3374 = vmatpush1.bf16.msra.mxu0 %v2593
        %3375 = vmatprep.subr.bf16.mxu0 %v2586
        %3376 = vmatpush1.bf16.msra.mxu0 %v2585
        %3377 = vmatprep.subr.bf16.mxu0 %v2578
        %3378 = vmatpush1.bf16.msra.mxu0 %v2577
        %3379 = vmatprep.subr.bf16.mxu0 %v2570
        %3380 = vmatpush1.bf16.msra.mxu0 %v2569
        %3381 = vmatprep.subr.bf16.mxu0 %v2562
        %3382 = vmatpush1.bf16.msra.mxu0 %v2561
        %3383 = vmatprep.subr.bf16.mxu0 %v2554
        %3384 = vmatpush1.bf16.msra.mxu0 %v2553
        %3385 = vmatprep.subr.bf16.mxu0 %v2546
        %3386 = vmatpush1.bf16.msra.mxu0 %v2545
        %3387 = vmatprep.subr.bf16.mxu0 %v2538
        %3388 = vmatpush1.bf16.msra.mxu0 %v2537
        %3389 = vmatprep.subr.bf16.mxu0 %v2658
        %3390 = vmatpush2.bf16.msra.mxu0 %v2657
        %3391 = vmatprep.subr.bf16.mxu0 %v2650
        %3392 = vmatpush2.bf16.msra.mxu0 %v2649
        %3393 = vmatprep.subr.bf16.mxu0 %v2642
        %3394 = vmatpush2.bf16.msra.mxu0 %v2641
        %3395 = vmatprep.subr.bf16.mxu0 %v2634
        %3396 = vmatpush2.bf16.msra.mxu0 %v2633
        %3397 = vmatprep.subr.bf16.mxu0 %v2626
        %3398 = vmatpush2.bf16.msra.mxu0 %v2625
        %3399 = vmatprep.subr.bf16.mxu0 %v2618
        %3400 = vmatpush2.bf16.msra.mxu0 %v2617
        %3401 = vmatprep.subr.bf16.mxu0 %v2610
        %3402 = vmatpush2.bf16.msra.mxu0 %v2609
        %3403 = vmatprep.subr.bf16.mxu0 %v2602
        %3404 = vmatpush2.bf16.msra.mxu0 %v2601
        %3405 = vmatprep.mubr.bf16.mxu0 %v1118
        %3406 = vmatmul.mubr.bf16.gmra.mxu0 %v1117
        %v3407 = vpop.f32.mrf.mxu0
        %v3408 = vadd.f32 %v3367, %v3407
        %v3409 = vpop.f32.mrf.mxu0
        %v3410 = vadd.f32 %v3369, %v3409
        %v3411 = vpop.f32.mrf.mxu0
        %v3412 = vpop.f32.mrf.mxu0
        %3413 = vdwg.mxu0
        %3414 = vmatprep.subr.bf16.mxu0 %v2340
        %3415 = vmatpush1.bf16.msra.mxu0 %v2339
        %3416 = vmatprep.subr.bf16.mxu0 %v2332
        %3417 = vmatpush1.bf16.msra.mxu0 %v2331
        %3418 = vmatprep.subr.bf16.mxu0 %v2324
        %3419 = vmatpush1.bf16.msra.mxu0 %v2323
        %3420 = vmatprep.subr.bf16.mxu0 %v2316
        %3421 = vmatpush1.bf16.msra.mxu0 %v2315
        %3422 = vmatprep.subr.bf16.mxu0 %v2308
        %3423 = vmatpush1.bf16.msra.mxu0 %v2307
        %3424 = vmatprep.subr.bf16.mxu0 %v2300
        %3425 = vmatpush1.bf16.msra.mxu0 %v2299
        %3426 = vmatprep.subr.bf16.mxu0 %v2292
        %3427 = vmatpush1.bf16.msra.mxu0 %v2291
        %3428 = vmatprep.subr.bf16.mxu0 %v2284
        %3429 = vmatpush1.bf16.msra.mxu0 %v2283
        %3430 = vmatprep.subr.bf16.mxu0 %v2404
        %3431 = vmatpush2.bf16.msra.mxu0 %v2403
        %3432 = vmatprep.subr.bf16.mxu0 %v2396
        %3433 = vmatpush2.bf16.msra.mxu0 %v2395
        %3434 = vmatprep.subr.bf16.mxu0 %v2388
        %3435 = vmatpush2.bf16.msra.mxu0 %v2387
        %3436 = vmatprep.subr.bf16.mxu0 %v2380
        %3437 = vmatpush2.bf16.msra.mxu0 %v2379
        %3438 = vmatprep.subr.bf16.mxu0 %v2372
        %3439 = vmatpush2.bf16.msra.mxu0 %v2371
        %3440 = vmatprep.subr.bf16.mxu0 %v2364
        %3441 = vmatpush2.bf16.msra.mxu0 %v2363
        %3442 = vmatprep.subr.bf16.mxu0 %v2356
        %3443 = vmatpush2.bf16.msra.mxu0 %v2355
        %3444 = vmatprep.subr.bf16.mxu0 %v2348
        %3445 = vmatpush2.bf16.msra.mxu0 %v2347
        %3446 = vmatprep.mubr.bf16.mxu0 %v1114
        %3447 = vmatmul.mubr.bf16.gmra.mxu0 %v1113
        %v3448 = vpop.f32.mrf.mxu0
        %v3449 = vadd.f32 0.0, %v3448
        %v3450 = vpop.f32.mrf.mxu0
        %v3451 = vadd.f32 0.0, %v3450
        %v3452 = vpop.f32.mrf.mxu0
        %v3453 = vpop.f32.mrf.mxu0
        %3454 = vdwg.mxu0
        %3455 = vmatprep.subr.bf16.mxu0 %v2468
        %3456 = vmatpush1.bf16.msra.mxu0 %v2467
        %3457 = vmatprep.subr.bf16.mxu0 %v2460
        %3458 = vmatpush1.bf16.msra.mxu0 %v2459
        %3459 = vmatprep.subr.bf16.mxu0 %v2452
        %3460 = vmatpush1.bf16.msra.mxu0 %v2451
        %3461 = vmatprep.subr.bf16.mxu0 %v2444
        %3462 = vmatpush1.bf16.msra.mxu0 %v2443
        %3463 = vmatprep.subr.bf16.mxu0 %v2436
        %3464 = vmatpush1.bf16.msra.mxu0 %v2435
        %3465 = vmatprep.subr.bf16.mxu0 %v2428
        %3466 = vmatpush1.bf16.msra.mxu0 %v2427
        %3467 = vmatprep.subr.bf16.mxu0 %v2420
        %3468 = vmatpush1.bf16.msra.mxu0 %v2419
        %3469 = vmatprep.subr.bf16.mxu0 %v2412
        %3470 = vmatpush1.bf16.msra.mxu0 %v2411
        %3471 = vmatprep.subr.bf16.mxu0 %v2532
        %3472 = vmatpush2.bf16.msra.mxu0 %v2531
        %3473 = vmatprep.subr.bf16.mxu0 %v2524
        %3474 = vmatpush2.bf16.msra.mxu0 %v2523
        %3475 = vmatprep.subr.bf16.mxu0 %v2516
        %3476 = vmatpush2.bf16.msra.mxu0 %v2515
        %3477 = vmatprep.subr.bf16.mxu0 %v2508
        %3478 = vmatpush2.bf16.msra.mxu0 %v2507
        %3479 = vmatprep.subr.bf16.mxu0 %v2500
        %3480 = vmatpush2.bf16.msra.mxu0 %v2499
        %3481 = vmatprep.subr.bf16.mxu0 %v2492
        %3482 = vmatpush2.bf16.msra.mxu0 %v2491
        %3483 = vmatprep.subr.bf16.mxu0 %v2484
        %3484 = vmatpush2.bf16.msra.mxu0 %v2483
        %3485 = vmatprep.subr.bf16.mxu0 %v2476
        %3486 = vmatpush2.bf16.msra.mxu0 %v2475
        %3487 = vmatprep.mubr.bf16.mxu0 %v1116
        %3488 = vmatmul.mubr.bf16.gmra.mxu0 %v1115
        %v3489 = vpop.f32.mrf.mxu0
        %v3490 = vadd.f32 %v3449, %v3489
        %v3491 = vpop.f32.mrf.mxu0
        %v3492 = vadd.f32 %v3451, %v3491
        %v3493 = vpop.f32.mrf.mxu0
        %v3494 = vpop.f32.mrf.mxu0
        %3495 = vdwg.mxu0
        %3496 = vmatprep.subr.bf16.mxu0 %v2596
        %3497 = vmatpush1.bf16.msra.mxu0 %v2595
        %3498 = vmatprep.subr.bf16.mxu0 %v2588
        %3499 = vmatpush1.bf16.msra.mxu0 %v2587
        %3500 = vmatprep.subr.bf16.mxu0 %v2580
        %3501 = vmatpush1.bf16.msra.mxu0 %v2579
        %3502 = vmatprep.subr.bf16.mxu0 %v2572
        %3503 = vmatpush1.bf16.msra.mxu0 %v2571
        %3504 = vmatprep.subr.bf16.mxu0 %v2564
        %3505 = vmatpush1.bf16.msra.mxu0 %v2563
        %3506 = vmatprep.subr.bf16.mxu0 %v2556
        %3507 = vmatpush1.bf16.msra.mxu0 %v2555
        %3508 = vmatprep.subr.bf16.mxu0 %v2548
        %3509 = vmatpush1.bf16.msra.mxu0 %v2547
        %3510 = vmatprep.subr.bf16.mxu0 %v2540
        %3511 = vmatpush1.bf16.msra.mxu0 %v2539
        %3512 = vmatprep.subr.bf16.mxu0 %v2660
        %3513 = vmatpush2.bf16.msra.mxu0 %v2659
        %3514 = vmatprep.subr.bf16.mxu0 %v2652
        %3515 = vmatpush2.bf16.msra.mxu0 %v2651
        %3516 = vmatprep.subr.bf16.mxu0 %v2644
        %3517 = vmatpush2.bf16.msra.mxu0 %v2643
        %3518 = vmatprep.subr.bf16.mxu0 %v2636
        %3519 = vmatpush2.bf16.msra.mxu0 %v2635
        %3520 = vmatprep.subr.bf16.mxu0 %v2628
        %3521 = vmatpush2.bf16.msra.mxu0 %v2627
        %3522 = vmatprep.subr.bf16.mxu0 %v2620
        %3523 = vmatpush2.bf16.msra.mxu0 %v2619
        %3524 = vmatprep.subr.bf16.mxu0 %v2612
        %3525 = vmatpush2.bf16.msra.mxu0 %v2611
        %3526 = vmatprep.subr.bf16.mxu0 %v2604
        %3527 = vmatpush2.bf16.msra.mxu0 %v2603
        %3528 = vmatprep.mubr.bf16.mxu0 %v1118
        %3529 = vmatmul.mubr.bf16.gmra.mxu0 %v1117
        %v3530 = vpop.f32.mrf.mxu0
        %v3531 = vadd.f32 %v3490, %v3530
        %v3532 = vpop.f32.mrf.mxu0
        %v3533 = vadd.f32 %v3492, %v3532
        %v3534 = vpop.f32.mrf.mxu0
        %v3535 = vpop.f32.mrf.mxu0
        %3536 = vdwg.mxu0
        %v3537 = vadd.f32 %v709, %v3162
        %v3538 = vadd.f32 %v710, %v3164
        %v3539 = vadd.f32 %v711, %v3285
        %v3540 = vadd.f32 %v712, %v3287
        %v3541 = vadd.f32 %v713, %v3408
        %v3542 = vadd.f32 %v714, %v3410
        %v3543 = vadd.f32 %v715, %v3531
        %v3544 = vadd.f32 %v716, %v3533
        %3545 = vst [vmem:[#allocation2] sm:$0xff] %v3537
        %3546 = vst [vmem:[#allocation2 + $0x8] sm:$0xff] %v3538
        %3547 = vst [vmem:[#allocation2 + $0x10] sm:$0xff] %v3539
        %3548 = vst [vmem:[#allocation2 + $0x18] sm:$0xff] %v3540
        %3549 = vst [vmem:[#allocation2 + $0x20] sm:$0xff] %v3541
        %3550 = vst [vmem:[#allocation2 + $0x28] sm:$0xff] %v3542
        %3551 = vst [vmem:[#allocation2 + $0x30] sm:$0xff] %v3543
        %3552 = vst [vmem:[#allocation2 + $0x38] sm:$0xff] %v3544
        %p3553 = scmp.eq.s32.totalorder %s39, 3
        // Predicated region
        $region141: #{tpu_custom_call.1} parent=79 // pred_check
          %p3554 = pneg %p3553
        $region142: #{tpu_custom_call.1} parent=79 // pred_check_branch
          %3556 = sbr.rel (%p3554) target = $region144
        $region143: #{tpu_custom_call.1} parent=79 // pred_region
          %v3557 = vld [vmem:[#allocation2] sm:$0xff]
          %v3558 = vld [vmem:[#allocation2 + $0x8] sm:$0xff]
          %v3559 = vld [vmem:[#allocation2 + $0x10] sm:$0xff]
          %v3560 = vld [vmem:[#allocation2 + $0x18] sm:$0xff]
          %v3561 = vld [vmem:[#allocation2 + $0x20] sm:$0xff]
          %v3562 = vld [vmem:[#allocation2 + $0x28] sm:$0xff]
          %v3563 = vld [vmem:[#allocation2 + $0x30] sm:$0xff]
          %v3564 = vld [vmem:[#allocation2 + $0x38] sm:$0xff]
          %v3565 = vld [vmem:[#allocation8] sm:$0xff]
          %v3567 = vlaneseq
          %v3568 = vshrl.u32 %v3567, 7
          %v3569 = vsub.s32 0, %v3568
          %v3570 = vrot.slane %v3565, %v3569
          %v3571 = vlaneseq
          %v3572 = vshrl.u32 %v3571, 7
          %v3573 = vsub.s32 1, %v3572
          %v3574 = vrot.slane %v3565, %v3573
          %v3575 = vlaneseq
          %v3576 = vshrl.u32 %v3575, 7
          %v3577 = vsub.s32 2, %v3576
          %v3578 = vrot.slane %v3565, %v3577
          %v3579 = vlaneseq
          %v3580 = vshrl.u32 %v3579, 7
          %v3581 = vsub.s32 3, %v3580
          %v3582 = vrot.slane %v3565, %v3581
          %v3583 = vlaneseq
          %v3584 = vshrl.u32 %v3583, 7
          %v3585 = vsub.s32 4, %v3584
          %v3586 = vrot.slane %v3565, %v3585
          %v3587 = vlaneseq
          %v3588 = vshrl.u32 %v3587, 7
          %v3589 = vsub.s32 5, %v3588
          %v3590 = vrot.slane %v3565, %v3589
          %v3591 = vlaneseq
          %v3592 = vshrl.u32 %v3591, 7
          %v3593 = vsub.s32 6, %v3592
          %v3594 = vrot.slane %v3565, %v3593
          %v3595 = vlaneseq
          %v3596 = vshrl.u32 %v3595, 7
          %v3597 = vsub.s32 7, %v3596
          %v3598 = vrot.slane %v3565, %v3597
          %v3607 = vadd.f32 %v3557, %v3570
          %v3608 = vadd.f32 %v3558, %v3574
          %v3609 = vadd.f32 %v3559, %v3578
          %v3610 = vadd.f32 %v3560, %v3582
          %v3611 = vadd.f32 %v3561, %v3586
          %v3612 = vadd.f32 %v3562, %v3590
          %v3613 = vadd.f32 %v3563, %v3594
          %v3614 = vadd.f32 %v3564, %v3598
          %v3615 = vmax.f32 %v3607, 0.0
          %v3616 = vmax.f32 %v3608, 0.0
          %v3617 = vmax.f32 %v3609, 0.0
          %v3618 = vmax.f32 %v3610, 0.0
          %v3619 = vmax.f32 %v3611, 0.0
          %v3620 = vmax.f32 %v3612, 0.0
          %v3621 = vmax.f32 %v3613, 0.0
          %v3622 = vmax.f32 %v3614, 0.0
          %v3623 = vrot.slane %v3615, 4
          %v3624 = vadd.f32 %v3615, %v3623
          %v3625 = vrot.slane %v3624, 2
          %v3626 = vadd.f32 %v3624, %v3625
          %v3627 = vrot.slane %v3626, 1
          %v3628 = vadd.f32 %v3626, %v3627
          %v3629 = vrot.slane %v3616, 4
          %v3630 = vadd.f32 %v3616, %v3629
          %v3631 = vrot.slane %v3630, 2
          %v3632 = vadd.f32 %v3630, %v3631
          %v3633 = vrot.slane %v3632, 1
          %v3634 = vadd.f32 %v3632, %v3633
          %v3635 = vrot.slane %v3617, 4
          %v3636 = vadd.f32 %v3617, %v3635
          %v3637 = vrot.slane %v3636, 2
          %v3638 = vadd.f32 %v3636, %v3637
          %v3639 = vrot.slane %v3638, 1
          %v3640 = vadd.f32 %v3638, %v3639
          %v3641 = vrot.slane %v3618, 4
          %v3642 = vadd.f32 %v3618, %v3641
          %v3643 = vrot.slane %v3642, 2
          %v3644 = vadd.f32 %v3642, %v3643
          %v3645 = vrot.slane %v3644, 1
          %v3646 = vadd.f32 %v3644, %v3645
          %v3647 = vrot.slane %v3619, 4
          %v3648 = vadd.f32 %v3619, %v3647
          %v3649 = vrot.slane %v3648, 2
          %v3650 = vadd.f32 %v3648, %v3649
          %v3651 = vrot.slane %v3650, 1
          %v3652 = vadd.f32 %v3650, %v3651
          %v3653 = vrot.slane %v3620, 4
          %v3654 = vadd.f32 %v3620, %v3653
          %v3655 = vrot.slane %v3654, 2
          %v3656 = vadd.f32 %v3654, %v3655
          %v3657 = vrot.slane %v3656, 1
          %v3658 = vadd.f32 %v3656, %v3657
          %v3659 = vrot.slane %v3621, 4
          %v3660 = vadd.f32 %v3621, %v3659
          %v3661 = vrot.slane %v3660, 2
          %v3662 = vadd.f32 %v3660, %v3661
          %v3663 = vrot.slane %v3662, 1
          %v3664 = vadd.f32 %v3662, %v3663
          %v3665 = vrot.slane %v3622, 4
          %v3666 = vadd.f32 %v3622, %v3665
          %v3667 = vrot.slane %v3666, 2
          %v3668 = vadd.f32 %v3666, %v3667
          %v3669 = vrot.slane %v3668, 1
          %v3670 = vadd.f32 %v3668, %v3669
          %v3671 = vrcp.pop 8.0
          %v3672 = vmul.f32 %v3628, %v3671
          %v3673 = vmul.f32 %v3634, %v3671
          %v3674 = vmul.f32 %v3640, %v3671
          %v3675 = vmul.f32 %v3646, %v3671
          %v3676 = vmul.f32 %v3652, %v3671
          %v3677 = vmul.f32 %v3658, %v3671
          %v3678 = vmul.f32 %v3664, %v3671
          %v3679 = vmul.f32 %v3670, %v3671
          %v3680 = vsub.f32 %v3615, %v3672
          %v3681 = vsub.f32 %v3616, %v3673
          %v3682 = vsub.f32 %v3617, %v3674
          %v3683 = vsub.f32 %v3618, %v3675
          %v3684 = vsub.f32 %v3619, %v3676
          %v3685 = vsub.f32 %v3620, %v3677
          %v3686 = vsub.f32 %v3621, %v3678
          %v3687 = vsub.f32 %v3622, %v3679
          %v3688 = vmul.f32 %v3680, %v3680
          %v3689 = vmul.f32 %v3681, %v3681
          %v3690 = vmul.f32 %v3682, %v3682
          %v3691 = vmul.f32 %v3683, %v3683
          %v3692 = vmul.f32 %v3684, %v3684
          %v3693 = vmul.f32 %v3685, %v3685
          %v3694 = vmul.f32 %v3686, %v3686
          %v3695 = vmul.f32 %v3687, %v3687
          %v3696 = vrot.slane %v3688, 4
          %v3697 = vadd.f32 %v3688, %v3696
          %v3698 = vrot.slane %v3697, 2
          %v3699 = vadd.f32 %v3697, %v3698
          %v3700 = vrot.slane %v3699, 1
          %v3701 = vadd.f32 %v3699, %v3700
          %v3702 = vrot.slane %v3689, 4
          %v3703 = vadd.f32 %v3689, %v3702
          %v3704 = vrot.slane %v3703, 2
          %v3705 = vadd.f32 %v3703, %v3704
          %v3706 = vrot.slane %v3705, 1
          %v3707 = vadd.f32 %v3705, %v3706
          %v3708 = vrot.slane %v3690, 4
          %v3709 = vadd.f32 %v3690, %v3708
          %v3710 = vrot.slane %v3709, 2
          %v3711 = vadd.f32 %v3709, %v3710
          %v3712 = vrot.slane %v3711, 1
          %v3713 = vadd.f32 %v3711, %v3712
          %v3714 = vrot.slane %v3691, 4
          %v3715 = vadd.f32 %v3691, %v3714
          %v3716 = vrot.slane %v3715, 2
          %v3717 = vadd.f32 %v3715, %v3716
          %v3718 = vrot.slane %v3717, 1
          %v3719 = vadd.f32 %v3717, %v3718
          %v3720 = vrot.slane %v3692, 4
          %v3721 = vadd.f32 %v3692, %v3720
          %v3722 = vrot.slane %v3721, 2
          %v3723 = vadd.f32 %v3721, %v3722
          %v3724 = vrot.slane %v3723, 1
          %v3725 = vadd.f32 %v3723, %v3724
          %v3726 = vrot.slane %v3693, 4
          %v3727 = vadd.f32 %v3693, %v3726
          %v3728 = vrot.slane %v3727, 2
          %v3729 = vadd.f32 %v3727, %v3728
          %v3730 = vrot.slane %v3729, 1
          %v3731 = vadd.f32 %v3729, %v3730
          %v3732 = vrot.slane %v3694, 4
          %v3733 = vadd.f32 %v3694, %v3732
          %v3734 = vrot.slane %v3733, 2
          %v3735 = vadd.f32 %v3733, %v3734
          %v3736 = vrot.slane %v3735, 1
          %v3737 = vadd.f32 %v3735, %v3736
          %v3738 = vrot.slane %v3695, 4
          %v3739 = vadd.f32 %v3695, %v3738
          %v3740 = vrot.slane %v3739, 2
          %v3741 = vadd.f32 %v3739, %v3740
          %v3742 = vrot.slane %v3741, 1
          %v3743 = vadd.f32 %v3741, %v3742
          %v3744 = vmul.f32 %v3701, %v3671
          %v3745 = vmul.f32 %v3707, %v3671
          %v3746 = vmul.f32 %v3713, %v3671
          %v3747 = vmul.f32 %v3719, %v3671
          %v3748 = vmul.f32 %v3725, %v3671
          %v3749 = vmul.f32 %v3731, %v3671
          %v3750 = vmul.f32 %v3737, %v3671
          %v3751 = vmul.f32 %v3743, %v3671
          %v3752 = vld [vmem:[#allocation9] sm:$0xff]
          %v3753 = vadd.f32 %v3744, 1e-05
          %v3754 = vadd.f32 %v3745, 1e-05
          %v3755 = vadd.f32 %v3746, 1e-05
          %v3756 = vadd.f32 %v3747, 1e-05
          %v3757 = vadd.f32 %v3748, 1e-05
          %v3758 = vadd.f32 %v3749, 1e-05
          %v3759 = vadd.f32 %v3750, 1e-05
          %v3760 = vadd.f32 %v3751, 1e-05
          %v3761 = vrsqrt.pop %v3753
          %v3762 = vrsqrt.pop %v3754
          %v3763 = vrsqrt.pop %v3755
          %v3764 = vrsqrt.pop %v3756
          %v3765 = vrsqrt.pop %v3757
          %v3766 = vrsqrt.pop %v3758
          %v3767 = vrsqrt.pop %v3759
          %v3768 = vrsqrt.pop %v3760
          %v3777 = vcombine.low %v3761, %v3762
          %v3778 = vcombine.low %v3763, %v3764
          %v3779 = vcombine.low %v3765, %v3766
          %v3780 = vcombine.low %v3767, %v3768
          %v3782 = vunpack.c.l.s4 1966171168
          %v3783 = vunpack.c.0.s8 %v3782
          %v3784 = vlaneseq
          %v3785 = vshrl.u32 %v3784, 7
          %v3786 = vsub.s32 %v3783, %v3785
          %v3787 = vrot.slane %v3777, %v3786
          %v3789 = vunpack.c.l.s4 1966171168
          %v3790 = vunpack.c.0.s8 %v3789
          %v3791 = vlaneseq
          %v3792 = vshrl.u32 %v3791, 7
          %v3793 = vsub.s32 %v3790, %v3792
          %v3794 = vrot.slane %v3778, %v3793
          %v3796 = vunpack.c.l.s4 1966171168
          %v3797 = vunpack.c.0.s8 %v3796
          %v3798 = vlaneseq
          %v3799 = vshrl.u32 %v3798, 7
          %v3800 = vsub.s32 %v3797, %v3799
          %v3801 = vrot.slane %v3779, %v3800
          %v3803 = vunpack.c.l.s4 1966171168
          %v3804 = vunpack.c.0.s8 %v3803
          %v3805 = vlaneseq
          %v3806 = vshrl.u32 %v3805, 7
          %v3807 = vsub.s32 %v3804, %v3806
          %v3808 = vrot.slane %v3780, %v3807
          %v3809 = vcombine.low %v3787, %v3794
          %v3810 = vcombine.low %v3801, %v3808
          %v3812 = vunpack.c.l.s4 1966171168
          %v3813 = vunpack.c.0.s8 %v3812
          %v3814 = vlaneseq
          %v3815 = vshrl.u32 %v3814, 7
          %v3816 = vsub.s32 %v3813, %v3815
          %v3817 = vrot.slane %v3809, %v3816
          %v3819 = vunpack.c.l.s4 1966171168
          %v3820 = vunpack.c.0.s8 %v3819
          %v3821 = vlaneseq
          %v3822 = vshrl.u32 %v3821, 7
          %v3823 = vsub.s32 %v3820, %v3822
          %v3824 = vrot.slane %v3810, %v3823
          %v3825 = vcombine.low %v3817, %v3824
          %v3827 = vmul.f32 %v3752, %v3825
          %v3829 = vlaneseq
          %v3830 = vshrl.u32 %v3829, 7
          %v3831 = vsub.s32 0, %v3830
          %v3832 = vrot.slane %v3827, %v3831
          %v3833 = vlaneseq
          %v3834 = vshrl.u32 %v3833, 7
          %v3835 = vsub.s32 1, %v3834
          %v3836 = vrot.slane %v3827, %v3835
          %v3837 = vlaneseq
          %v3838 = vshrl.u32 %v3837, 7
          %v3839 = vsub.s32 2, %v3838
          %v3840 = vrot.slane %v3827, %v3839
          %v3841 = vlaneseq
          %v3842 = vshrl.u32 %v3841, 7
          %v3843 = vsub.s32 3, %v3842
          %v3844 = vrot.slane %v3827, %v3843
          %v3845 = vlaneseq
          %v3846 = vshrl.u32 %v3845, 7
          %v3847 = vsub.s32 4, %v3846
          %v3848 = vrot.slane %v3827, %v3847
          %v3849 = vlaneseq
          %v3850 = vshrl.u32 %v3849, 7
          %v3851 = vsub.s32 5, %v3850
          %v3852 = vrot.slane %v3827, %v3851
          %v3853 = vlaneseq
          %v3854 = vshrl.u32 %v3853, 7
          %v3855 = vsub.s32 6, %v3854
          %v3856 = vrot.slane %v3827, %v3855
          %v3857 = vlaneseq
          %v3858 = vshrl.u32 %v3857, 7
          %v3859 = vsub.s32 7, %v3858
          %v3860 = vrot.slane %v3827, %v3859
          %v3869 = vmul.f32 %v3615, %v3832
          %v3870 = vmul.f32 %v3616, %v3836
          %v3871 = vmul.f32 %v3617, %v3840
          %v3872 = vmul.f32 %v3618, %v3844
          %v3873 = vmul.f32 %v3619, %v3848
          %v3874 = vmul.f32 %v3620, %v3852
          %v3875 = vmul.f32 %v3621, %v3856
          %v3876 = vmul.f32 %v3622, %v3860
          %v3877 = vld [vmem:[#allocation11] sm:$0xff]
          %v3878 = vmul.f32 %v3672, %v3832
          %v3879 = vmul.f32 %v3673, %v3836
          %v3880 = vmul.f32 %v3674, %v3840
          %v3881 = vmul.f32 %v3675, %v3844
          %v3882 = vmul.f32 %v3676, %v3848
          %v3883 = vmul.f32 %v3677, %v3852
          %v3884 = vmul.f32 %v3678, %v3856
          %v3885 = vmul.f32 %v3679, %v3860
          %v3894 = vcombine.low %v3878, %v3879
          %v3895 = vcombine.low %v3880, %v3881
          %v3896 = vcombine.low %v3882, %v3883
          %v3897 = vcombine.low %v3884, %v3885
          %v3899 = vunpack.c.l.s4 1966171168
          %v3900 = vunpack.c.0.s8 %v3899
          %v3901 = vlaneseq
          %v3902 = vshrl.u32 %v3901, 7
          %v3903 = vsub.s32 %v3900, %v3902
          %v3904 = vrot.slane %v3894, %v3903
          %v3906 = vunpack.c.l.s4 1966171168
          %v3907 = vunpack.c.0.s8 %v3906
          %v3908 = vlaneseq
          %v3909 = vshrl.u32 %v3908, 7
          %v3910 = vsub.s32 %v3907, %v3909
          %v3911 = vrot.slane %v3895, %v3910
          %v3913 = vunpack.c.l.s4 1966171168
          %v3914 = vunpack.c.0.s8 %v3913
          %v3915 = vlaneseq
          %v3916 = vshrl.u32 %v3915, 7
          %v3917 = vsub.s32 %v3914, %v3916
          %v3918 = vrot.slane %v3896, %v3917
          %v3920 = vunpack.c.l.s4 1966171168
          %v3921 = vunpack.c.0.s8 %v3920
          %v3922 = vlaneseq
          %v3923 = vshrl.u32 %v3922, 7
          %v3924 = vsub.s32 %v3921, %v3923
          %v3925 = vrot.slane %v3897, %v3924
          %v3926 = vcombine.low %v3904, %v3911
          %v3927 = vcombine.low %v3918, %v3925
          %v3929 = vunpack.c.l.s4 1966171168
          %v3930 = vunpack.c.0.s8 %v3929
          %v3931 = vlaneseq
          %v3932 = vshrl.u32 %v3931, 7
          %v3933 = vsub.s32 %v3930, %v3932
          %v3934 = vrot.slane %v3926, %v3933
          %v3936 = vunpack.c.l.s4 1966171168
          %v3937 = vunpack.c.0.s8 %v3936
          %v3938 = vlaneseq
          %v3939 = vshrl.u32 %v3938, 7
          %v3940 = vsub.s32 %v3937, %v3939
          %v3941 = vrot.slane %v3927, %v3940
          %v3942 = vcombine.low %v3934, %v3941
          %v3944 = vsub.f32 %v3877, %v3942
          %v3946 = vlaneseq
          %v3947 = vshrl.u32 %v3946, 7
          %v3948 = vsub.s32 0, %v3947
          %v3949 = vrot.slane %v3944, %v3948
          %v3950 = vlaneseq
          %v3951 = vshrl.u32 %v3950, 7
          %v3952 = vsub.s32 1, %v3951
          %v3953 = vrot.slane %v3944, %v3952
          %v3954 = vlaneseq
          %v3955 = vshrl.u32 %v3954, 7
          %v3956 = vsub.s32 2, %v3955
          %v3957 = vrot.slane %v3944, %v3956
          %v3958 = vlaneseq
          %v3959 = vshrl.u32 %v3958, 7
          %v3960 = vsub.s32 3, %v3959
          %v3961 = vrot.slane %v3944, %v3960
          %v3962 = vlaneseq
          %v3963 = vshrl.u32 %v3962, 7
          %v3964 = vsub.s32 4, %v3963
          %v3965 = vrot.slane %v3944, %v3964
          %v3966 = vlaneseq
          %v3967 = vshrl.u32 %v3966, 7
          %v3968 = vsub.s32 5, %v3967
          %v3969 = vrot.slane %v3944, %v3968
          %v3970 = vlaneseq
          %v3971 = vshrl.u32 %v3970, 7
          %v3972 = vsub.s32 6, %v3971
          %v3973 = vrot.slane %v3944, %v3972
          %v3974 = vlaneseq
          %v3975 = vshrl.u32 %v3974, 7
          %v3976 = vsub.s32 7, %v3975
          %v3977 = vrot.slane %v3944, %v3976
          %v3986 = vadd.f32 %v3869, %v3949
          %v3987 = vadd.f32 %v3870, %v3953
          %v3988 = vadd.f32 %v3871, %v3957
          %v3989 = vadd.f32 %v3872, %v3961
          %v3990 = vadd.f32 %v3873, %v3965
          %v3991 = vadd.f32 %v3874, %v3969
          %v3992 = vadd.f32 %v3875, %v3973
          %v3993 = vadd.f32 %v3876, %v3977
          %v3994 = vpack.c.bf16 %v3986, %v3986
          %v3995 = vpack.c.bf16 %v3987, %v3987
          %v3996 = vpack.c.bf16 %v3988, %v3988
          %v3997 = vpack.c.bf16 %v3989, %v3989
          %v3998 = vpack.c.bf16 %v3990, %v3990
          %v3999 = vpack.c.bf16 %v3991, %v3991
          %v4000 = vpack.c.bf16 %v3992, %v3992
          %v4001 = vpack.c.bf16 %v3993, %v3993
          %v4002 = vld [vmem:[#allocation12] sm:$0xff]
          %v4003 = vld [vmem:[#allocation12 + $0x8] sm:$0xff]
          %v4004 = vld [vmem:[#allocation12 + $0x10] sm:$0xff]
          %v4005 = vld [vmem:[#allocation12 + $0x18] sm:$0xff]
          %v4006 = vld [vmem:[#allocation12 + $0x20] sm:$0xff]
          %v4007 = vld [vmem:[#allocation12 + $0x28] sm:$0xff]
          %v4008 = vld [vmem:[#allocation12 + $0x30] sm:$0xff]
          %v4009 = vld [vmem:[#allocation12 + $0x38] sm:$0xff]
          %v4010 = vld [vmem:[#allocation12 + $0x40] sm:$0xff]
          %v4011 = vld [vmem:[#allocation12 + $0x48] sm:$0xff]
          %v4012 = vld [vmem:[#allocation12 + $0x50] sm:$0xff]
          %v4013 = vld [vmem:[#allocation12 + $0x58] sm:$0xff]
          %v4014 = vld [vmem:[#allocation12 + $0x60] sm:$0xff]
          %v4015 = vld [vmem:[#allocation12 + $0x68] sm:$0xff]
          %v4016 = vld [vmem:[#allocation12 + $0x70] sm:$0xff]
          %v4017 = vld [vmem:[#allocation12 + $0x78] sm:$0xff]
          %v4018 = vld [vmem:[#allocation12 + $0x80] sm:$0xff]
          %v4019 = vld [vmem:[#allocation12 + $0x88] sm:$0xff]
          %v4020 = vld [vmem:[#allocation12 + $0x90] sm:$0xff]
          %v4021 = vld [vmem:[#allocation12 + $0x98] sm:$0xff]
          %v4022 = vld [vmem:[#allocation12 + $0xa0] sm:$0xff]
          %v4023 = vld [vmem:[#allocation12 + $0xa8] sm:$0xff]
          %v4024 = vld [vmem:[#allocation12 + $0xb0] sm:$0xff]
          %v4025 = vld [vmem:[#allocation12 + $0xb8] sm:$0xff]
          %v4026 = vld [vmem:[#allocation12 + $0xc0] sm:$0xff]
          %v4027 = vld [vmem:[#allocation12 + $0xc8] sm:$0xff]
          %v4028 = vld [vmem:[#allocation12 + $0xd0] sm:$0xff]
          %v4029 = vld [vmem:[#allocation12 + $0xd8] sm:$0xff]
          %v4030 = vld [vmem:[#allocation12 + $0xe0] sm:$0xff]
          %v4031 = vld [vmem:[#allocation12 + $0xe8] sm:$0xff]
          %v4032 = vld [vmem:[#allocation12 + $0xf0] sm:$0xff]
          %v4033 = vld [vmem:[#allocation12 + $0xf8] sm:$0xff]
          %v4034 = vld [vmem:[#allocation12 + $0x100] sm:$0xff]
          %v4035 = vld [vmem:[#allocation12 + $0x108] sm:$0xff]
          %v4036 = vld [vmem:[#allocation12 + $0x110] sm:$0xff]
          %v4037 = vld [vmem:[#allocation12 + $0x118] sm:$0xff]
          %v4038 = vld [vmem:[#allocation12 + $0x120] sm:$0xff]
          %v4039 = vld [vmem:[#allocation12 + $0x128] sm:$0xff]
          %v4040 = vld [vmem:[#allocation12 + $0x130] sm:$0xff]
          %v4041 = vld [vmem:[#allocation12 + $0x138] sm:$0xff]
          %v4042 = vld [vmem:[#allocation12 + $0x140] sm:$0xff]
          %v4043 = vld [vmem:[#allocation12 + $0x148] sm:$0xff]
          %v4044 = vld [vmem:[#allocation12 + $0x150] sm:$0xff]
          %v4045 = vld [vmem:[#allocation12 + $0x158] sm:$0xff]
          %v4046 = vld [vmem:[#allocation12 + $0x160] sm:$0xff]
          %v4047 = vld [vmem:[#allocation12 + $0x168] sm:$0xff]
          %v4048 = vld [vmem:[#allocation12 + $0x170] sm:$0xff]
          %v4049 = vld [vmem:[#allocation12 + $0x178] sm:$0xff]
          %v4050 = vld [vmem:[#allocation12 + $0x180] sm:$0xff]
          %v4051 = vld [vmem:[#allocation12 + $0x188] sm:$0xff]
          %v4052 = vld [vmem:[#allocation12 + $0x190] sm:$0xff]
          %v4053 = vld [vmem:[#allocation12 + $0x198] sm:$0xff]
          %v4054 = vld [vmem:[#allocation12 + $0x1a0] sm:$0xff]
          %v4055 = vld [vmem:[#allocation12 + $0x1a8] sm:$0xff]
          %v4056 = vld [vmem:[#allocation12 + $0x1b0] sm:$0xff]
          %v4057 = vld [vmem:[#allocation12 + $0x1b8] sm:$0xff]
          %v4058 = vld [vmem:[#allocation12 + $0x1c0] sm:$0xff]
          %v4059 = vld [vmem:[#allocation12 + $0x1c8] sm:$0xff]
          %v4060 = vld [vmem:[#allocation12 + $0x1d0] sm:$0xff]
          %v4061 = vld [vmem:[#allocation12 + $0x1d8] sm:$0xff]
          %v4062 = vld [vmem:[#allocation12 + $0x1e0] sm:$0xff]
          %v4063 = vld [vmem:[#allocation12 + $0x1e8] sm:$0xff]
          %v4064 = vld [vmem:[#allocation12 + $0x1f0] sm:$0xff]
          %v4065 = vld [vmem:[#allocation12 + $0x1f8] sm:$0xff]
          %v4066 = vld [vmem:[#allocation12 + $0x200] sm:$0xff]
          %v4067 = vld [vmem:[#allocation12 + $0x208] sm:$0xff]
          %v4068 = vld [vmem:[#allocation12 + $0x210] sm:$0xff]
          %v4069 = vld [vmem:[#allocation12 + $0x218] sm:$0xff]
          %v4070 = vld [vmem:[#allocation12 + $0x220] sm:$0xff]
          %v4071 = vld [vmem:[#allocation12 + $0x228] sm:$0xff]
          %v4072 = vld [vmem:[#allocation12 + $0x230] sm:$0xff]
          %v4073 = vld [vmem:[#allocation12 + $0x238] sm:$0xff]
          %v4074 = vld [vmem:[#allocation12 + $0x240] sm:$0xff]
          %v4075 = vld [vmem:[#allocation12 + $0x248] sm:$0xff]
          %v4076 = vld [vmem:[#allocation12 + $0x250] sm:$0xff]
          %v4077 = vld [vmem:[#allocation12 + $0x258] sm:$0xff]
          %v4078 = vld [vmem:[#allocation12 + $0x260] sm:$0xff]
          %v4079 = vld [vmem:[#allocation12 + $0x268] sm:$0xff]
          %v4080 = vld [vmem:[#allocation12 + $0x270] sm:$0xff]
          %v4081 = vld [vmem:[#allocation12 + $0x278] sm:$0xff]
          %v4082 = vld [vmem:[#allocation12 + $0x280] sm:$0xff]
          %v4083 = vld [vmem:[#allocation12 + $0x288] sm:$0xff]
          %v4084 = vld [vmem:[#allocation12 + $0x290] sm:$0xff]
          %v4085 = vld [vmem:[#allocation12 + $0x298] sm:$0xff]
          %v4086 = vld [vmem:[#allocation12 + $0x2a0] sm:$0xff]
          %v4087 = vld [vmem:[#allocation12 + $0x2a8] sm:$0xff]
          %v4088 = vld [vmem:[#allocation12 + $0x2b0] sm:$0xff]
          %v4089 = vld [vmem:[#allocation12 + $0x2b8] sm:$0xff]
          %v4090 = vld [vmem:[#allocation12 + $0x2c0] sm:$0xff]
          %v4091 = vld [vmem:[#allocation12 + $0x2c8] sm:$0xff]
          %v4092 = vld [vmem:[#allocation12 + $0x2d0] sm:$0xff]
          %v4093 = vld [vmem:[#allocation12 + $0x2d8] sm:$0xff]
          %v4094 = vld [vmem:[#allocation12 + $0x2e0] sm:$0xff]
          %v4095 = vld [vmem:[#allocation12 + $0x2e8] sm:$0xff]
          %v4096 = vld [vmem:[#allocation12 + $0x2f0] sm:$0xff]
          %v4097 = vld [vmem:[#allocation12 + $0x2f8] sm:$0xff]
          %v4098 = vld [vmem:[#allocation12 + $0x300] sm:$0xff]
          %v4099 = vld [vmem:[#allocation12 + $0x308] sm:$0xff]
          %v4100 = vld [vmem:[#allocation12 + $0x310] sm:$0xff]
          %v4101 = vld [vmem:[#allocation12 + $0x318] sm:$0xff]
          %v4102 = vld [vmem:[#allocation12 + $0x320] sm:$0xff]
          %v4103 = vld [vmem:[#allocation12 + $0x328] sm:$0xff]
          %v4104 = vld [vmem:[#allocation12 + $0x330] sm:$0xff]
          %v4105 = vld [vmem:[#allocation12 + $0x338] sm:$0xff]
          %v4106 = vld [vmem:[#allocation12 + $0x340] sm:$0xff]
          %v4107 = vld [vmem:[#allocation12 + $0x348] sm:$0xff]
          %v4108 = vld [vmem:[#allocation12 + $0x350] sm:$0xff]
          %v4109 = vld [vmem:[#allocation12 + $0x358] sm:$0xff]
          %v4110 = vld [vmem:[#allocation12 + $0x360] sm:$0xff]
          %v4111 = vld [vmem:[#allocation12 + $0x368] sm:$0xff]
          %v4112 = vld [vmem:[#allocation12 + $0x370] sm:$0xff]
          %v4113 = vld [vmem:[#allocation12 + $0x378] sm:$0xff]
          %v4114 = vld [vmem:[#allocation12 + $0x380] sm:$0xff]
          %v4115 = vld [vmem:[#allocation12 + $0x388] sm:$0xff]
          %v4116 = vld [vmem:[#allocation12 + $0x390] sm:$0xff]
          %v4117 = vld [vmem:[#allocation12 + $0x398] sm:$0xff]
          %v4118 = vld [vmem:[#allocation12 + $0x3a0] sm:$0xff]
          %v4119 = vld [vmem:[#allocation12 + $0x3a8] sm:$0xff]
          %v4120 = vld [vmem:[#allocation12 + $0x3b0] sm:$0xff]
          %v4121 = vld [vmem:[#allocation12 + $0x3b8] sm:$0xff]
          %v4122 = vld [vmem:[#allocation12 + $0x3c0] sm:$0xff]
          %v4123 = vld [vmem:[#allocation12 + $0x3c8] sm:$0xff]
          %v4124 = vld [vmem:[#allocation12 + $0x3d0] sm:$0xff]
          %v4125 = vld [vmem:[#allocation12 + $0x3d8] sm:$0xff]
          %v4126 = vld [vmem:[#allocation12 + $0x3e0] sm:$0xff]
          %v4127 = vld [vmem:[#allocation12 + $0x3e8] sm:$0xff]
          %v4128 = vld [vmem:[#allocation12 + $0x3f0] sm:$0xff]
          %v4129 = vld [vmem:[#allocation12 + $0x3f8] sm:$0xff]
          %v4130 = vld [vmem:[#allocation12 + $0x400] sm:$0xff]
          %v4131 = vld [vmem:[#allocation12 + $0x408] sm:$0xff]
          %v4132 = vld [vmem:[#allocation12 + $0x410] sm:$0xff]
          %v4133 = vld [vmem:[#allocation12 + $0x418] sm:$0xff]
          %v4134 = vld [vmem:[#allocation12 + $0x420] sm:$0xff]
          %v4135 = vld [vmem:[#allocation12 + $0x428] sm:$0xff]
          %v4136 = vld [vmem:[#allocation12 + $0x430] sm:$0xff]
          %v4137 = vld [vmem:[#allocation12 + $0x438] sm:$0xff]
          %v4138 = vld [vmem:[#allocation12 + $0x440] sm:$0xff]
          %v4139 = vld [vmem:[#allocation12 + $0x448] sm:$0xff]
          %v4140 = vld [vmem:[#allocation12 + $0x450] sm:$0xff]
          %v4141 = vld [vmem:[#allocation12 + $0x458] sm:$0xff]
          %v4142 = vld [vmem:[#allocation12 + $0x460] sm:$0xff]
          %v4143 = vld [vmem:[#allocation12 + $0x468] sm:$0xff]
          %v4144 = vld [vmem:[#allocation12 + $0x470] sm:$0xff]
          %v4145 = vld [vmem:[#allocation12 + $0x478] sm:$0xff]
          %v4146 = vld [vmem:[#allocation12 + $0x480] sm:$0xff]
          %v4147 = vld [vmem:[#allocation12 + $0x488] sm:$0xff]
          %v4148 = vld [vmem:[#allocation12 + $0x490] sm:$0xff]
          %v4149 = vld [vmem:[#allocation12 + $0x498] sm:$0xff]
          %v4150 = vld [vmem:[#allocation12 + $0x4a0] sm:$0xff]
          %v4151 = vld [vmem:[#allocation12 + $0x4a8] sm:$0xff]
          %v4152 = vld [vmem:[#allocation12 + $0x4b0] sm:$0xff]
          %v4153 = vld [vmem:[#allocation12 + $0x4b8] sm:$0xff]
          %v4154 = vld [vmem:[#allocation12 + $0x4c0] sm:$0xff]
          %v4155 = vld [vmem:[#allocation12 + $0x4c8] sm:$0xff]
          %v4156 = vld [vmem:[#allocation12 + $0x4d0] sm:$0xff]
          %v4157 = vld [vmem:[#allocation12 + $0x4d8] sm:$0xff]
          %v4158 = vld [vmem:[#allocation12 + $0x4e0] sm:$0xff]
          %v4159 = vld [vmem:[#allocation12 + $0x4e8] sm:$0xff]
          %v4160 = vld [vmem:[#allocation12 + $0x4f0] sm:$0xff]
          %v4161 = vld [vmem:[#allocation12 + $0x4f8] sm:$0xff]
          %v4162 = vld [vmem:[#allocation12 + $0x500] sm:$0xff]
          %v4163 = vld [vmem:[#allocation12 + $0x508] sm:$0xff]
          %v4164 = vld [vmem:[#allocation12 + $0x510] sm:$0xff]
          %v4165 = vld [vmem:[#allocation12 + $0x518] sm:$0xff]
          %v4166 = vld [vmem:[#allocation12 + $0x520] sm:$0xff]
          %v4167 = vld [vmem:[#allocation12 + $0x528] sm:$0xff]
          %v4168 = vld [vmem:[#allocation12 + $0x530] sm:$0xff]
          %v4169 = vld [vmem:[#allocation12 + $0x538] sm:$0xff]
          %v4170 = vld [vmem:[#allocation12 + $0x540] sm:$0xff]
          %v4171 = vld [vmem:[#allocation12 + $0x548] sm:$0xff]
          %v4172 = vld [vmem:[#allocation12 + $0x550] sm:$0xff]
          %v4173 = vld [vmem:[#allocation12 + $0x558] sm:$0xff]
          %v4174 = vld [vmem:[#allocation12 + $0x560] sm:$0xff]
          %v4175 = vld [vmem:[#allocation12 + $0x568] sm:$0xff]
          %v4176 = vld [vmem:[#allocation12 + $0x570] sm:$0xff]
          %v4177 = vld [vmem:[#allocation12 + $0x578] sm:$0xff]
          %v4178 = vld [vmem:[#allocation12 + $0x580] sm:$0xff]
          %v4179 = vld [vmem:[#allocation12 + $0x588] sm:$0xff]
          %v4180 = vld [vmem:[#allocation12 + $0x590] sm:$0xff]
          %v4181 = vld [vmem:[#allocation12 + $0x598] sm:$0xff]
          %v4182 = vld [vmem:[#allocation12 + $0x5a0] sm:$0xff]
          %v4183 = vld [vmem:[#allocation12 + $0x5a8] sm:$0xff]
          %v4184 = vld [vmem:[#allocation12 + $0x5b0] sm:$0xff]
          %v4185 = vld [vmem:[#allocation12 + $0x5b8] sm:$0xff]
          %v4186 = vld [vmem:[#allocation12 + $0x5c0] sm:$0xff]
          %v4187 = vld [vmem:[#allocation12 + $0x5c8] sm:$0xff]
          %v4188 = vld [vmem:[#allocation12 + $0x5d0] sm:$0xff]
          %v4189 = vld [vmem:[#allocation12 + $0x5d8] sm:$0xff]
          %v4190 = vld [vmem:[#allocation12 + $0x5e0] sm:$0xff]
          %v4191 = vld [vmem:[#allocation12 + $0x5e8] sm:$0xff]
          %v4192 = vld [vmem:[#allocation12 + $0x5f0] sm:$0xff]
          %v4193 = vld [vmem:[#allocation12 + $0x5f8] sm:$0xff]
          %v4194 = vld [vmem:[#allocation12 + $0x600] sm:$0xff]
          %v4195 = vld [vmem:[#allocation12 + $0x608] sm:$0xff]
          %v4196 = vld [vmem:[#allocation12 + $0x610] sm:$0xff]
          %v4197 = vld [vmem:[#allocation12 + $0x618] sm:$0xff]
          %v4198 = vld [vmem:[#allocation12 + $0x620] sm:$0xff]
          %v4199 = vld [vmem:[#allocation12 + $0x628] sm:$0xff]
          %v4200 = vld [vmem:[#allocation12 + $0x630] sm:$0xff]
          %v4201 = vld [vmem:[#allocation12 + $0x638] sm:$0xff]
          %v4202 = vld [vmem:[#allocation12 + $0x640] sm:$0xff]
          %v4203 = vld [vmem:[#allocation12 + $0x648] sm:$0xff]
          %v4204 = vld [vmem:[#allocation12 + $0x650] sm:$0xff]
          %v4205 = vld [vmem:[#allocation12 + $0x658] sm:$0xff]
          %v4206 = vld [vmem:[#allocation12 + $0x660] sm:$0xff]
          %v4207 = vld [vmem:[#allocation12 + $0x668] sm:$0xff]
          %v4208 = vld [vmem:[#allocation12 + $0x670] sm:$0xff]
          %v4209 = vld [vmem:[#allocation12 + $0x678] sm:$0xff]
          %v4210 = vld [vmem:[#allocation12 + $0x680] sm:$0xff]
          %v4211 = vld [vmem:[#allocation12 + $0x688] sm:$0xff]
          %v4212 = vld [vmem:[#allocation12 + $0x690] sm:$0xff]
          %v4213 = vld [vmem:[#allocation12 + $0x698] sm:$0xff]
          %v4214 = vld [vmem:[#allocation12 + $0x6a0] sm:$0xff]
          %v4215 = vld [vmem:[#allocation12 + $0x6a8] sm:$0xff]
          %v4216 = vld [vmem:[#allocation12 + $0x6b0] sm:$0xff]
          %v4217 = vld [vmem:[#allocation12 + $0x6b8] sm:$0xff]
          %v4218 = vld [vmem:[#allocation12 + $0x6c0] sm:$0xff]
          %v4219 = vld [vmem:[#allocation12 + $0x6c8] sm:$0xff]
          %v4220 = vld [vmem:[#allocation12 + $0x6d0] sm:$0xff]
          %v4221 = vld [vmem:[#allocation12 + $0x6d8] sm:$0xff]
          %v4222 = vld [vmem:[#allocation12 + $0x6e0] sm:$0xff]
          %v4223 = vld [vmem:[#allocation12 + $0x6e8] sm:$0xff]
          %v4224 = vld [vmem:[#allocation12 + $0x6f0] sm:$0xff]
          %v4225 = vld [vmem:[#allocation12 + $0x6f8] sm:$0xff]
          %v4226 = vld [vmem:[#allocation12 + $0x700] sm:$0xff]
          %v4227 = vld [vmem:[#allocation12 + $0x708] sm:$0xff]
          %v4228 = vld [vmem:[#allocation12 + $0x710] sm:$0xff]
          %v4229 = vld [vmem:[#allocation12 + $0x718] sm:$0xff]
          %v4230 = vld [vmem:[#allocation12 + $0x720] sm:$0xff]
          %v4231 = vld [vmem:[#allocation12 + $0x728] sm:$0xff]
          %v4232 = vld [vmem:[#allocation12 + $0x730] sm:$0xff]
          %v4233 = vld [vmem:[#allocation12 + $0x738] sm:$0xff]
          %v4234 = vld [vmem:[#allocation12 + $0x740] sm:$0xff]
          %v4235 = vld [vmem:[#allocation12 + $0x748] sm:$0xff]
          %v4236 = vld [vmem:[#allocation12 + $0x750] sm:$0xff]
          %v4237 = vld [vmem:[#allocation12 + $0x758] sm:$0xff]
          %v4238 = vld [vmem:[#allocation12 + $0x760] sm:$0xff]
          %v4239 = vld [vmem:[#allocation12 + $0x768] sm:$0xff]
          %v4240 = vld [vmem:[#allocation12 + $0x770] sm:$0xff]
          %v4241 = vld [vmem:[#allocation12 + $0x778] sm:$0xff]
          %v4242 = vld [vmem:[#allocation12 + $0x780] sm:$0xff]
          %v4243 = vld [vmem:[#allocation12 + $0x788] sm:$0xff]
          %v4244 = vld [vmem:[#allocation12 + $0x790] sm:$0xff]
          %v4245 = vld [vmem:[#allocation12 + $0x798] sm:$0xff]
          %v4246 = vld [vmem:[#allocation12 + $0x7a0] sm:$0xff]
          %v4247 = vld [vmem:[#allocation12 + $0x7a8] sm:$0xff]
          %v4248 = vld [vmem:[#allocation12 + $0x7b0] sm:$0xff]
          %v4249 = vld [vmem:[#allocation12 + $0x7b8] sm:$0xff]
          %v4250 = vld [vmem:[#allocation12 + $0x7c0] sm:$0xff]
          %v4251 = vld [vmem:[#allocation12 + $0x7c8] sm:$0xff]
          %v4252 = vld [vmem:[#allocation12 + $0x7d0] sm:$0xff]
          %v4253 = vld [vmem:[#allocation12 + $0x7d8] sm:$0xff]
          %v4254 = vld [vmem:[#allocation12 + $0x7e0] sm:$0xff]
          %v4255 = vld [vmem:[#allocation12 + $0x7e8] sm:$0xff]
          %v4256 = vld [vmem:[#allocation12 + $0x7f0] sm:$0xff]
          %v4257 = vld [vmem:[#allocation12 + $0x7f8] sm:$0xff]
          %v4258 = vld [vmem:[#allocation14] sm:$0xf]
          %v4260 = vlaneseq
          %v4261 = vshrl.u32 %v4260, 7
          %v4262 = vsub.s32 0, %v4261
          %v4263 = vrot.slane %v4258, %v4262
          %v4264 = vlaneseq
          %v4265 = vshrl.u32 %v4264, 7
          %v4266 = vsub.s32 1, %v4265
          %v4267 = vrot.slane %v4258, %v4266
          %v4268 = vlaneseq
          %v4269 = vshrl.u32 %v4268, 7
          %v4270 = vsub.s32 2, %v4269
          %v4271 = vrot.slane %v4258, %v4270
          %v4272 = vlaneseq
          %v4273 = vshrl.u32 %v4272, 7
          %v4274 = vsub.s32 3, %v4273
          %v4275 = vrot.slane %v4258, %v4274
          %v4536 = vunpack.c.l.b16 %v4002
          %v4537 = vunpack.c.h.b16 %v4002
          %v4538 = vunpack.c.l.b16 %v4003
          %v4539 = vunpack.c.h.b16 %v4003
          %v4540 = vunpack.c.l.b16 %v4004
          %v4541 = vunpack.c.h.b16 %v4004
          %v4542 = vunpack.c.l.b16 %v4005
          %v4543 = vunpack.c.h.b16 %v4005
          %v4544 = vunpack.c.l.b16 %v4006
          %v4545 = vunpack.c.h.b16 %v4006
          %v4546 = vunpack.c.l.b16 %v4007
          %v4547 = vunpack.c.h.b16 %v4007
          %v4548 = vunpack.c.l.b16 %v4008
          %v4549 = vunpack.c.h.b16 %v4008
          %v4550 = vunpack.c.l.b16 %v4009
          %v4551 = vunpack.c.h.b16 %v4009
          %v4552 = vunpack.c.l.b16 %v4010
          %v4553 = vunpack.c.h.b16 %v4010
          %v4554 = vunpack.c.l.b16 %v4011
          %v4555 = vunpack.c.h.b16 %v4011
          %v4556 = vunpack.c.l.b16 %v4012
          %v4557 = vunpack.c.h.b16 %v4012
          %v4558 = vunpack.c.l.b16 %v4013
          %v4559 = vunpack.c.h.b16 %v4013
          %v4560 = vunpack.c.l.b16 %v4014
          %v4561 = vunpack.c.h.b16 %v4014
          %v4562 = vunpack.c.l.b16 %v4015
          %v4563 = vunpack.c.h.b16 %v4015
          %v4564 = vunpack.c.l.b16 %v4016
          %v4565 = vunpack.c.h.b16 %v4016
          %v4566 = vunpack.c.l.b16 %v4017
          %v4567 = vunpack.c.h.b16 %v4017
          %v4568 = vunpack.c.l.b16 %v4018
          %v4569 = vunpack.c.h.b16 %v4018
          %v4570 = vunpack.c.l.b16 %v4019
          %v4571 = vunpack.c.h.b16 %v4019
          %v4572 = vunpack.c.l.b16 %v4020
          %v4573 = vunpack.c.h.b16 %v4020
          %v4574 = vunpack.c.l.b16 %v4021
          %v4575 = vunpack.c.h.b16 %v4021
          %v4576 = vunpack.c.l.b16 %v4022
          %v4577 = vunpack.c.h.b16 %v4022
          %v4578 = vunpack.c.l.b16 %v4023
          %v4579 = vunpack.c.h.b16 %v4023
          %v4580 = vunpack.c.l.b16 %v4024
          %v4581 = vunpack.c.h.b16 %v4024
          %v4582 = vunpack.c.l.b16 %v4025
          %v4583 = vunpack.c.h.b16 %v4025
          %v4584 = vunpack.c.l.b16 %v4026
          %v4585 = vunpack.c.h.b16 %v4026
          %v4586 = vunpack.c.l.b16 %v4027
          %v4587 = vunpack.c.h.b16 %v4027
          %v4588 = vunpack.c.l.b16 %v4028
          %v4589 = vunpack.c.h.b16 %v4028
          %v4590 = vunpack.c.l.b16 %v4029
          %v4591 = vunpack.c.h.b16 %v4029
          %v4592 = vunpack.c.l.b16 %v4030
          %v4593 = vunpack.c.h.b16 %v4030
          %v4594 = vunpack.c.l.b16 %v4031
          %v4595 = vunpack.c.h.b16 %v4031
          %v4596 = vunpack.c.l.b16 %v4032
          %v4597 = vunpack.c.h.b16 %v4032
          %v4598 = vunpack.c.l.b16 %v4033
          %v4599 = vunpack.c.h.b16 %v4033
          %v4600 = vunpack.c.l.b16 %v4034
          %v4601 = vunpack.c.h.b16 %v4034
          %v4602 = vunpack.c.l.b16 %v4035
          %v4603 = vunpack.c.h.b16 %v4035
          %v4604 = vunpack.c.l.b16 %v4036
          %v4605 = vunpack.c.h.b16 %v4036
          %v4606 = vunpack.c.l.b16 %v4037
          %v4607 = vunpack.c.h.b16 %v4037
          %v4608 = vunpack.c.l.b16 %v4038
          %v4609 = vunpack.c.h.b16 %v4038
          %v4610 = vunpack.c.l.b16 %v4039
          %v4611 = vunpack.c.h.b16 %v4039
          %v4612 = vunpack.c.l.b16 %v4040
          %v4613 = vunpack.c.h.b16 %v4040
          %v4614 = vunpack.c.l.b16 %v4041
          %v4615 = vunpack.c.h.b16 %v4041
          %v4616 = vunpack.c.l.b16 %v4042
          %v4617 = vunpack.c.h.b16 %v4042
          %v4618 = vunpack.c.l.b16 %v4043
          %v4619 = vunpack.c.h.b16 %v4043
          %v4620 = vunpack.c.l.b16 %v4044
          %v4621 = vunpack.c.h.b16 %v4044
          %v4622 = vunpack.c.l.b16 %v4045
          %v4623 = vunpack.c.h.b16 %v4045
          %v4624 = vunpack.c.l.b16 %v4046
          %v4625 = vunpack.c.h.b16 %v4046
          %v4626 = vunpack.c.l.b16 %v4047
          %v4627 = vunpack.c.h.b16 %v4047
          %v4628 = vunpack.c.l.b16 %v4048
          %v4629 = vunpack.c.h.b16 %v4048
          %v4630 = vunpack.c.l.b16 %v4049
          %v4631 = vunpack.c.h.b16 %v4049
          %v4632 = vunpack.c.l.b16 %v4050
          %v4633 = vunpack.c.h.b16 %v4050
          %v4634 = vunpack.c.l.b16 %v4051
          %v4635 = vunpack.c.h.b16 %v4051
          %v4636 = vunpack.c.l.b16 %v4052
          %v4637 = vunpack.c.h.b16 %v4052
          %v4638 = vunpack.c.l.b16 %v4053
          %v4639 = vunpack.c.h.b16 %v4053
          %v4640 = vunpack.c.l.b16 %v4054
          %v4641 = vunpack.c.h.b16 %v4054
          %v4642 = vunpack.c.l.b16 %v4055
          %v4643 = vunpack.c.h.b16 %v4055
          %v4644 = vunpack.c.l.b16 %v4056
          %v4645 = vunpack.c.h.b16 %v4056
          %v4646 = vunpack.c.l.b16 %v4057
          %v4647 = vunpack.c.h.b16 %v4057
          %v4648 = vunpack.c.l.b16 %v4058
          %v4649 = vunpack.c.h.b16 %v4058
          %v4650 = vunpack.c.l.b16 %v4059
          %v4651 = vunpack.c.h.b16 %v4059
          %v4652 = vunpack.c.l.b16 %v4060
          %v4653 = vunpack.c.h.b16 %v4060
          %v4654 = vunpack.c.l.b16 %v4061
          %v4655 = vunpack.c.h.b16 %v4061
          %v4656 = vunpack.c.l.b16 %v4062
          %v4657 = vunpack.c.h.b16 %v4062
          %v4658 = vunpack.c.l.b16 %v4063
          %v4659 = vunpack.c.h.b16 %v4063
          %v4660 = vunpack.c.l.b16 %v4064
          %v4661 = vunpack.c.h.b16 %v4064
          %v4662 = vunpack.c.l.b16 %v4065
          %v4663 = vunpack.c.h.b16 %v4065
          %v4664 = vunpack.c.l.b16 %v4066
          %v4665 = vunpack.c.h.b16 %v4066
          %v4666 = vunpack.c.l.b16 %v4067
          %v4667 = vunpack.c.h.b16 %v4067
          %v4668 = vunpack.c.l.b16 %v4068
          %v4669 = vunpack.c.h.b16 %v4068
          %v4670 = vunpack.c.l.b16 %v4069
          %v4671 = vunpack.c.h.b16 %v4069
          %v4672 = vunpack.c.l.b16 %v4070
          %v4673 = vunpack.c.h.b16 %v4070
          %v4674 = vunpack.c.l.b16 %v4071
          %v4675 = vunpack.c.h.b16 %v4071
          %v4676 = vunpack.c.l.b16 %v4072
          %v4677 = vunpack.c.h.b16 %v4072
          %v4678 = vunpack.c.l.b16 %v4073
          %v4679 = vunpack.c.h.b16 %v4073
          %v4680 = vunpack.c.l.b16 %v4074
          %v4681 = vunpack.c.h.b16 %v4074
          %v4682 = vunpack.c.l.b16 %v4075
          %v4683 = vunpack.c.h.b16 %v4075
          %v4684 = vunpack.c.l.b16 %v4076
          %v4685 = vunpack.c.h.b16 %v4076
          %v4686 = vunpack.c.l.b16 %v4077
          %v4687 = vunpack.c.h.b16 %v4077
          %v4688 = vunpack.c.l.b16 %v4078
          %v4689 = vunpack.c.h.b16 %v4078
          %v4690 = vunpack.c.l.b16 %v4079
          %v4691 = vunpack.c.h.b16 %v4079
          %v4692 = vunpack.c.l.b16 %v4080
          %v4693 = vunpack.c.h.b16 %v4080
          %v4694 = vunpack.c.l.b16 %v4081
          %v4695 = vunpack.c.h.b16 %v4081
          %v4696 = vunpack.c.l.b16 %v4082
          %v4697 = vunpack.c.h.b16 %v4082
          %v4698 = vunpack.c.l.b16 %v4083
          %v4699 = vunpack.c.h.b16 %v4083
          %v4700 = vunpack.c.l.b16 %v4084
          %v4701 = vunpack.c.h.b16 %v4084
          %v4702 = vunpack.c.l.b16 %v4085
          %v4703 = vunpack.c.h.b16 %v4085
          %v4704 = vunpack.c.l.b16 %v4086
          %v4705 = vunpack.c.h.b16 %v4086
          %v4706 = vunpack.c.l.b16 %v4087
          %v4707 = vunpack.c.h.b16 %v4087
          %v4708 = vunpack.c.l.b16 %v4088
          %v4709 = vunpack.c.h.b16 %v4088
          %v4710 = vunpack.c.l.b16 %v4089
          %v4711 = vunpack.c.h.b16 %v4089
          %v4712 = vunpack.c.l.b16 %v4090
          %v4713 = vunpack.c.h.b16 %v4090
          %v4714 = vunpack.c.l.b16 %v4091
          %v4715 = vunpack.c.h.b16 %v4091
          %v4716 = vunpack.c.l.b16 %v4092
          %v4717 = vunpack.c.h.b16 %v4092
          %v4718 = vunpack.c.l.b16 %v4093
          %v4719 = vunpack.c.h.b16 %v4093
          %v4720 = vunpack.c.l.b16 %v4094
          %v4721 = vunpack.c.h.b16 %v4094
          %v4722 = vunpack.c.l.b16 %v4095
          %v4723 = vunpack.c.h.b16 %v4095
          %v4724 = vunpack.c.l.b16 %v4096
          %v4725 = vunpack.c.h.b16 %v4096
          %v4726 = vunpack.c.l.b16 %v4097
          %v4727 = vunpack.c.h.b16 %v4097
          %v4728 = vunpack.c.l.b16 %v4098
          %v4729 = vunpack.c.h.b16 %v4098
          %v4730 = vunpack.c.l.b16 %v4099
          %v4731 = vunpack.c.h.b16 %v4099
          %v4732 = vunpack.c.l.b16 %v4100
          %v4733 = vunpack.c.h.b16 %v4100
          %v4734 = vunpack.c.l.b16 %v4101
          %v4735 = vunpack.c.h.b16 %v4101
          %v4736 = vunpack.c.l.b16 %v4102
          %v4737 = vunpack.c.h.b16 %v4102
          %v4738 = vunpack.c.l.b16 %v4103
          %v4739 = vunpack.c.h.b16 %v4103
          %v4740 = vunpack.c.l.b16 %v4104
          %v4741 = vunpack.c.h.b16 %v4104
          %v4742 = vunpack.c.l.b16 %v4105
          %v4743 = vunpack.c.h.b16 %v4105
          %v4744 = vunpack.c.l.b16 %v4106
          %v4745 = vunpack.c.h.b16 %v4106
          %v4746 = vunpack.c.l.b16 %v4107
          %v4747 = vunpack.c.h.b16 %v4107
          %v4748 = vunpack.c.l.b16 %v4108
          %v4749 = vunpack.c.h.b16 %v4108
          %v4750 = vunpack.c.l.b16 %v4109
          %v4751 = vunpack.c.h.b16 %v4109
          %v4752 = vunpack.c.l.b16 %v4110
          %v4753 = vunpack.c.h.b16 %v4110
          %v4754 = vunpack.c.l.b16 %v4111
          %v4755 = vunpack.c.h.b16 %v4111
          %v4756 = vunpack.c.l.b16 %v4112
          %v4757 = vunpack.c.h.b16 %v4112
          %v4758 = vunpack.c.l.b16 %v4113
          %v4759 = vunpack.c.h.b16 %v4113
          %v4760 = vunpack.c.l.b16 %v4114
          %v4761 = vunpack.c.h.b16 %v4114
          %v4762 = vunpack.c.l.b16 %v4115
          %v4763 = vunpack.c.h.b16 %v4115
          %v4764 = vunpack.c.l.b16 %v4116
          %v4765 = vunpack.c.h.b16 %v4116
          %v4766 = vunpack.c.l.b16 %v4117
          %v4767 = vunpack.c.h.b16 %v4117
          %v4768 = vunpack.c.l.b16 %v4118
          %v4769 = vunpack.c.h.b16 %v4118
          %v4770 = vunpack.c.l.b16 %v4119
          %v4771 = vunpack.c.h.b16 %v4119
          %v4772 = vunpack.c.l.b16 %v4120
          %v4773 = vunpack.c.h.b16 %v4120
          %v4774 = vunpack.c.l.b16 %v4121
          %v4775 = vunpack.c.h.b16 %v4121
          %v4776 = vunpack.c.l.b16 %v4122
          %v4777 = vunpack.c.h.b16 %v4122
          %v4778 = vunpack.c.l.b16 %v4123
          %v4779 = vunpack.c.h.b16 %v4123
          %v4780 = vunpack.c.l.b16 %v4124
          %v4781 = vunpack.c.h.b16 %v4124
          %v4782 = vunpack.c.l.b16 %v4125
          %v4783 = vunpack.c.h.b16 %v4125
          %v4784 = vunpack.c.l.b16 %v4126
          %v4785 = vunpack.c.h.b16 %v4126
          %v4786 = vunpack.c.l.b16 %v4127
          %v4787 = vunpack.c.h.b16 %v4127
          %v4788 = vunpack.c.l.b16 %v4128
          %v4789 = vunpack.c.h.b16 %v4128
          %v4790 = vunpack.c.l.b16 %v4129
          %v4791 = vunpack.c.h.b16 %v4129
          %v4792 = vunpack.c.l.b16 %v4130
          %v4793 = vunpack.c.h.b16 %v4130
          %v4794 = vunpack.c.l.b16 %v4131
          %v4795 = vunpack.c.h.b16 %v4131
          %v4796 = vunpack.c.l.b16 %v4132
          %v4797 = vunpack.c.h.b16 %v4132
          %v4798 = vunpack.c.l.b16 %v4133
          %v4799 = vunpack.c.h.b16 %v4133
          %v4800 = vunpack.c.l.b16 %v4134
          %v4801 = vunpack.c.h.b16 %v4134
          %v4802 = vunpack.c.l.b16 %v4135
          %v4803 = vunpack.c.h.b16 %v4135
          %v4804 = vunpack.c.l.b16 %v4136
          %v4805 = vunpack.c.h.b16 %v4136
          %v4806 = vunpack.c.l.b16 %v4137
          %v4807 = vunpack.c.h.b16 %v4137
          %v4808 = vunpack.c.l.b16 %v4138
          %v4809 = vunpack.c.h.b16 %v4138
          %v4810 = vunpack.c.l.b16 %v4139
          %v4811 = vunpack.c.h.b16 %v4139
          %v4812 = vunpack.c.l.b16 %v4140
          %v4813 = vunpack.c.h.b16 %v4140
          %v4814 = vunpack.c.l.b16 %v4141
          %v4815 = vunpack.c.h.b16 %v4141
          %v4816 = vunpack.c.l.b16 %v4142
          %v4817 = vunpack.c.h.b16 %v4142
          %v4818 = vunpack.c.l.b16 %v4143
          %v4819 = vunpack.c.h.b16 %v4143
          %v4820 = vunpack.c.l.b16 %v4144
          %v4821 = vunpack.c.h.b16 %v4144
          %v4822 = vunpack.c.l.b16 %v4145
          %v4823 = vunpack.c.h.b16 %v4145
          %v4824 = vunpack.c.l.b16 %v4146
          %v4825 = vunpack.c.h.b16 %v4146
          %v4826 = vunpack.c.l.b16 %v4147
          %v4827 = vunpack.c.h.b16 %v4147
          %v4828 = vunpack.c.l.b16 %v4148
          %v4829 = vunpack.c.h.b16 %v4148
          %v4830 = vunpack.c.l.b16 %v4149
          %v4831 = vunpack.c.h.b16 %v4149
          %v4832 = vunpack.c.l.b16 %v4150
          %v4833 = vunpack.c.h.b16 %v4150
          %v4834 = vunpack.c.l.b16 %v4151
          %v4835 = vunpack.c.h.b16 %v4151
          %v4836 = vunpack.c.l.b16 %v4152
          %v4837 = vunpack.c.h.b16 %v4152
          %v4838 = vunpack.c.l.b16 %v4153
          %v4839 = vunpack.c.h.b16 %v4153
          %v4840 = vunpack.c.l.b16 %v4154
          %v4841 = vunpack.c.h.b16 %v4154
          %v4842 = vunpack.c.l.b16 %v4155
          %v4843 = vunpack.c.h.b16 %v4155
          %v4844 = vunpack.c.l.b16 %v4156
          %v4845 = vunpack.c.h.b16 %v4156
          %v4846 = vunpack.c.l.b16 %v4157
          %v4847 = vunpack.c.h.b16 %v4157
          %v4848 = vunpack.c.l.b16 %v4158
          %v4849 = vunpack.c.h.b16 %v4158
          %v4850 = vunpack.c.l.b16 %v4159
          %v4851 = vunpack.c.h.b16 %v4159
          %v4852 = vunpack.c.l.b16 %v4160
          %v4853 = vunpack.c.h.b16 %v4160
          %v4854 = vunpack.c.l.b16 %v4161
          %v4855 = vunpack.c.h.b16 %v4161
          %v4856 = vunpack.c.l.b16 %v4162
          %v4857 = vunpack.c.h.b16 %v4162
          %v4858 = vunpack.c.l.b16 %v4163
          %v4859 = vunpack.c.h.b16 %v4163
          %v4860 = vunpack.c.l.b16 %v4164
          %v4861 = vunpack.c.h.b16 %v4164
          %v4862 = vunpack.c.l.b16 %v4165
          %v4863 = vunpack.c.h.b16 %v4165
          %v4864 = vunpack.c.l.b16 %v4166
          %v4865 = vunpack.c.h.b16 %v4166
          %v4866 = vunpack.c.l.b16 %v4167
          %v4867 = vunpack.c.h.b16 %v4167
          %v4868 = vunpack.c.l.b16 %v4168
          %v4869 = vunpack.c.h.b16 %v4168
          %v4870 = vunpack.c.l.b16 %v4169
          %v4871 = vunpack.c.h.b16 %v4169
          %v4872 = vunpack.c.l.b16 %v4170
          %v4873 = vunpack.c.h.b16 %v4170
          %v4874 = vunpack.c.l.b16 %v4171
          %v4875 = vunpack.c.h.b16 %v4171
          %v4876 = vunpack.c.l.b16 %v4172
          %v4877 = vunpack.c.h.b16 %v4172
          %v4878 = vunpack.c.l.b16 %v4173
          %v4879 = vunpack.c.h.b16 %v4173
          %v4880 = vunpack.c.l.b16 %v4174
          %v4881 = vunpack.c.h.b16 %v4174
          %v4882 = vunpack.c.l.b16 %v4175
          %v4883 = vunpack.c.h.b16 %v4175
          %v4884 = vunpack.c.l.b16 %v4176
          %v4885 = vunpack.c.h.b16 %v4176
          %v4886 = vunpack.c.l.b16 %v4177
          %v4887 = vunpack.c.h.b16 %v4177
          %v4888 = vunpack.c.l.b16 %v4178
          %v4889 = vunpack.c.h.b16 %v4178
          %v4890 = vunpack.c.l.b16 %v4179
          %v4891 = vunpack.c.h.b16 %v4179
          %v4892 = vunpack.c.l.b16 %v4180
          %v4893 = vunpack.c.h.b16 %v4180
          %v4894 = vunpack.c.l.b16 %v4181
          %v4895 = vunpack.c.h.b16 %v4181
          %v4896 = vunpack.c.l.b16 %v4182
          %v4897 = vunpack.c.h.b16 %v4182
          %v4898 = vunpack.c.l.b16 %v4183
          %v4899 = vunpack.c.h.b16 %v4183
          %v4900 = vunpack.c.l.b16 %v4184
          %v4901 = vunpack.c.h.b16 %v4184
          %v4902 = vunpack.c.l.b16 %v4185
          %v4903 = vunpack.c.h.b16 %v4185
          %v4904 = vunpack.c.l.b16 %v4186
          %v4905 = vunpack.c.h.b16 %v4186
          %v4906 = vunpack.c.l.b16 %v4187
          %v4907 = vunpack.c.h.b16 %v4187
          %v4908 = vunpack.c.l.b16 %v4188
          %v4909 = vunpack.c.h.b16 %v4188
          %v4910 = vunpack.c.l.b16 %v4189
          %v4911 = vunpack.c.h.b16 %v4189
          %v4912 = vunpack.c.l.b16 %v4190
          %v4913 = vunpack.c.h.b16 %v4190
          %v4914 = vunpack.c.l.b16 %v4191
          %v4915 = vunpack.c.h.b16 %v4191
          %v4916 = vunpack.c.l.b16 %v4192
          %v4917 = vunpack.c.h.b16 %v4192
          %v4918 = vunpack.c.l.b16 %v4193
          %v4919 = vunpack.c.h.b16 %v4193
          %v4920 = vunpack.c.l.b16 %v4194
          %v4921 = vunpack.c.h.b16 %v4194
          %v4922 = vunpack.c.l.b16 %v4195
          %v4923 = vunpack.c.h.b16 %v4195
          %v4924 = vunpack.c.l.b16 %v4196
          %v4925 = vunpack.c.h.b16 %v4196
          %v4926 = vunpack.c.l.b16 %v4197
          %v4927 = vunpack.c.h.b16 %v4197
          %v4928 = vunpack.c.l.b16 %v4198
          %v4929 = vunpack.c.h.b16 %v4198
          %v4930 = vunpack.c.l.b16 %v4199
          %v4931 = vunpack.c.h.b16 %v4199
          %v4932 = vunpack.c.l.b16 %v4200
          %v4933 = vunpack.c.h.b16 %v4200
          %v4934 = vunpack.c.l.b16 %v4201
          %v4935 = vunpack.c.h.b16 %v4201
          %v4936 = vunpack.c.l.b16 %v4202
          %v4937 = vunpack.c.h.b16 %v4202
          %v4938 = vunpack.c.l.b16 %v4203
          %v4939 = vunpack.c.h.b16 %v4203
          %v4940 = vunpack.c.l.b16 %v4204
          %v4941 = vunpack.c.h.b16 %v4204
          %v4942 = vunpack.c.l.b16 %v4205
          %v4943 = vunpack.c.h.b16 %v4205
          %v4944 = vunpack.c.l.b16 %v4206
          %v4945 = vunpack.c.h.b16 %v4206
          %v4946 = vunpack.c.l.b16 %v4207
          %v4947 = vunpack.c.h.b16 %v4207
          %v4948 = vunpack.c.l.b16 %v4208
          %v4949 = vunpack.c.h.b16 %v4208
          %v4950 = vunpack.c.l.b16 %v4209
          %v4951 = vunpack.c.h.b16 %v4209
          %v4952 = vunpack.c.l.b16 %v4210
          %v4953 = vunpack.c.h.b16 %v4210
          %v4954 = vunpack.c.l.b16 %v4211
          %v4955 = vunpack.c.h.b16 %v4211
          %v4956 = vunpack.c.l.b16 %v4212
          %v4957 = vunpack.c.h.b16 %v4212
          %v4958 = vunpack.c.l.b16 %v4213
          %v4959 = vunpack.c.h.b16 %v4213
          %v4960 = vunpack.c.l.b16 %v4214
          %v4961 = vunpack.c.h.b16 %v4214
          %v4962 = vunpack.c.l.b16 %v4215
          %v4963 = vunpack.c.h.b16 %v4215
          %v4964 = vunpack.c.l.b16 %v4216
          %v4965 = vunpack.c.h.b16 %v4216
          %v4966 = vunpack.c.l.b16 %v4217
          %v4967 = vunpack.c.h.b16 %v4217
          %v4968 = vunpack.c.l.b16 %v4218
          %v4969 = vunpack.c.h.b16 %v4218
          %v4970 = vunpack.c.l.b16 %v4219
          %v4971 = vunpack.c.h.b16 %v4219
          %v4972 = vunpack.c.l.b16 %v4220
          %v4973 = vunpack.c.h.b16 %v4220
          %v4974 = vunpack.c.l.b16 %v4221
          %v4975 = vunpack.c.h.b16 %v4221
          %v4976 = vunpack.c.l.b16 %v4222
          %v4977 = vunpack.c.h.b16 %v4222
          %v4978 = vunpack.c.l.b16 %v4223
          %v4979 = vunpack.c.h.b16 %v4223
          %v4980 = vunpack.c.l.b16 %v4224
          %v4981 = vunpack.c.h.b16 %v4224
          %v4982 = vunpack.c.l.b16 %v4225
          %v4983 = vunpack.c.h.b16 %v4225
          %v4984 = vunpack.c.l.b16 %v4226
          %v4985 = vunpack.c.h.b16 %v4226
          %v4986 = vunpack.c.l.b16 %v4227
          %v4987 = vunpack.c.h.b16 %v4227
          %v4988 = vunpack.c.l.b16 %v4228
          %v4989 = vunpack.c.h.b16 %v4228
          %v4990 = vunpack.c.l.b16 %v4229
          %v4991 = vunpack.c.h.b16 %v4229
          %v4992 = vunpack.c.l.b16 %v4230
          %v4993 = vunpack.c.h.b16 %v4230
          %v4994 = vunpack.c.l.b16 %v4231
          %v4995 = vunpack.c.h.b16 %v4231
          %v4996 = vunpack.c.l.b16 %v4232
          %v4997 = vunpack.c.h.b16 %v4232
          %v4998 = vunpack.c.l.b16 %v4233
          %v4999 = vunpack.c.h.b16 %v4233
          %v5000 = vunpack.c.l.b16 %v4234
          %v5001 = vunpack.c.h.b16 %v4234
          %v5002 = vunpack.c.l.b16 %v4235
          %v5003 = vunpack.c.h.b16 %v4235
          %v5004 = vunpack.c.l.b16 %v4236
          %v5005 = vunpack.c.h.b16 %v4236
          %v5006 = vunpack.c.l.b16 %v4237
          %v5007 = vunpack.c.h.b16 %v4237
          %v5008 = vunpack.c.l.b16 %v4238
          %v5009 = vunpack.c.h.b16 %v4238
          %v5010 = vunpack.c.l.b16 %v4239
          %v5011 = vunpack.c.h.b16 %v4239
          %v5012 = vunpack.c.l.b16 %v4240
          %v5013 = vunpack.c.h.b16 %v4240
          %v5014 = vunpack.c.l.b16 %v4241
          %v5015 = vunpack.c.h.b16 %v4241
          %v5016 = vunpack.c.l.b16 %v4242
          %v5017 = vunpack.c.h.b16 %v4242
          %v5018 = vunpack.c.l.b16 %v4243
          %v5019 = vunpack.c.h.b16 %v4243
          %v5020 = vunpack.c.l.b16 %v4244
          %v5021 = vunpack.c.h.b16 %v4244
          %v5022 = vunpack.c.l.b16 %v4245
          %v5023 = vunpack.c.h.b16 %v4245
          %v5024 = vunpack.c.l.b16 %v4246
          %v5025 = vunpack.c.h.b16 %v4246
          %v5026 = vunpack.c.l.b16 %v4247
          %v5027 = vunpack.c.h.b16 %v4247
          %v5028 = vunpack.c.l.b16 %v4248
          %v5029 = vunpack.c.h.b16 %v4248
          %v5030 = vunpack.c.l.b16 %v4249
          %v5031 = vunpack.c.h.b16 %v4249
          %v5032 = vunpack.c.l.b16 %v4250
          %v5033 = vunpack.c.h.b16 %v4250
          %v5034 = vunpack.c.l.b16 %v4251
          %v5035 = vunpack.c.h.b16 %v4251
          %v5036 = vunpack.c.l.b16 %v4252
          %v5037 = vunpack.c.h.b16 %v4252
          %v5038 = vunpack.c.l.b16 %v4253
          %v5039 = vunpack.c.h.b16 %v4253
          %v5040 = vunpack.c.l.b16 %v4254
          %v5041 = vunpack.c.h.b16 %v4254
          %v5042 = vunpack.c.l.b16 %v4255
          %v5043 = vunpack.c.h.b16 %v4255
          %v5044 = vunpack.c.l.b16 %v4256
          %v5045 = vunpack.c.h.b16 %v4256
          %v5046 = vunpack.c.l.b16 %v4257
          %v5047 = vunpack.c.h.b16 %v4257
          %v5048 = vpack.c.b16 %v4540, %v4536
          %v5049 = vpack.c.b16 %v4541, %v4537
          %v5050 = vpack.c.b16 %v4542, %v4538
          %v5051 = vpack.c.b16 %v4543, %v4539
          %v5052 = vpack.c.b16 %v4548, %v4544
          %v5053 = vpack.c.b16 %v4549, %v4545
          %v5054 = vpack.c.b16 %v4550, %v4546
          %v5055 = vpack.c.b16 %v4551, %v4547
          %v5056 = vpack.c.b16 %v4556, %v4552
          %v5057 = vpack.c.b16 %v4557, %v4553
          %v5058 = vpack.c.b16 %v4558, %v4554
          %v5059 = vpack.c.b16 %v4559, %v4555
          %v5060 = vpack.c.b16 %v4564, %v4560
          %v5061 = vpack.c.b16 %v4565, %v4561
          %v5062 = vpack.c.b16 %v4566, %v4562
          %v5063 = vpack.c.b16 %v4567, %v4563
          %v5064 = vpack.c.b16 %v4572, %v4568
          %v5065 = vpack.c.b16 %v4573, %v4569
          %v5066 = vpack.c.b16 %v4574, %v4570
          %v5067 = vpack.c.b16 %v4575, %v4571
          %v5068 = vpack.c.b16 %v4580, %v4576
          %v5069 = vpack.c.b16 %v4581, %v4577
          %v5070 = vpack.c.b16 %v4582, %v4578
          %v5071 = vpack.c.b16 %v4583, %v4579
          %v5072 = vpack.c.b16 %v4588, %v4584
          %v5073 = vpack.c.b16 %v4589, %v4585
          %v5074 = vpack.c.b16 %v4590, %v4586
          %v5075 = vpack.c.b16 %v4591, %v4587
          %v5076 = vpack.c.b16 %v4596, %v4592
          %v5077 = vpack.c.b16 %v4597, %v4593
          %v5078 = vpack.c.b16 %v4598, %v4594
          %v5079 = vpack.c.b16 %v4599, %v4595
          %v5080 = vpack.c.b16 %v4604, %v4600
          %v5081 = vpack.c.b16 %v4605, %v4601
          %v5082 = vpack.c.b16 %v4606, %v4602
          %v5083 = vpack.c.b16 %v4607, %v4603
          %v5084 = vpack.c.b16 %v4612, %v4608
          %v5085 = vpack.c.b16 %v4613, %v4609
          %v5086 = vpack.c.b16 %v4614, %v4610
          %v5087 = vpack.c.b16 %v4615, %v4611
          %v5088 = vpack.c.b16 %v4620, %v4616
          %v5089 = vpack.c.b16 %v4621, %v4617
          %v5090 = vpack.c.b16 %v4622, %v4618
          %v5091 = vpack.c.b16 %v4623, %v4619
          %v5092 = vpack.c.b16 %v4628, %v4624
          %v5093 = vpack.c.b16 %v4629, %v4625
          %v5094 = vpack.c.b16 %v4630, %v4626
          %v5095 = vpack.c.b16 %v4631, %v4627
          %v5096 = vpack.c.b16 %v4636, %v4632
          %v5097 = vpack.c.b16 %v4637, %v4633
          %v5098 = vpack.c.b16 %v4638, %v4634
          %v5099 = vpack.c.b16 %v4639, %v4635
          %v5100 = vpack.c.b16 %v4644, %v4640
          %v5101 = vpack.c.b16 %v4645, %v4641
          %v5102 = vpack.c.b16 %v4646, %v4642
          %v5103 = vpack.c.b16 %v4647, %v4643
          %v5104 = vpack.c.b16 %v4652, %v4648
          %v5105 = vpack.c.b16 %v4653, %v4649
          %v5106 = vpack.c.b16 %v4654, %v4650
          %v5107 = vpack.c.b16 %v4655, %v4651
          %v5108 = vpack.c.b16 %v4660, %v4656
          %v5109 = vpack.c.b16 %v4661, %v4657
          %v5110 = vpack.c.b16 %v4662, %v4658
          %v5111 = vpack.c.b16 %v4663, %v4659
          %v5112 = vpack.c.b16 %v4668, %v4664
          %v5113 = vpack.c.b16 %v4669, %v4665
          %v5114 = vpack.c.b16 %v4670, %v4666
          %v5115 = vpack.c.b16 %v4671, %v4667
          %v5116 = vpack.c.b16 %v4676, %v4672
          %v5117 = vpack.c.b16 %v4677, %v4673
          %v5118 = vpack.c.b16 %v4678, %v4674
          %v5119 = vpack.c.b16 %v4679, %v4675
          %v5120 = vpack.c.b16 %v4684, %v4680
          %v5121 = vpack.c.b16 %v4685, %v4681
          %v5122 = vpack.c.b16 %v4686, %v4682
          %v5123 = vpack.c.b16 %v4687, %v4683
          %v5124 = vpack.c.b16 %v4692, %v4688
          %v5125 = vpack.c.b16 %v4693, %v4689
          %v5126 = vpack.c.b16 %v4694, %v4690
          %v5127 = vpack.c.b16 %v4695, %v4691
          %v5128 = vpack.c.b16 %v4700, %v4696
          %v5129 = vpack.c.b16 %v4701, %v4697
          %v5130 = vpack.c.b16 %v4702, %v4698
          %v5131 = vpack.c.b16 %v4703, %v4699
          %v5132 = vpack.c.b16 %v4708, %v4704
          %v5133 = vpack.c.b16 %v4709, %v4705
          %v5134 = vpack.c.b16 %v4710, %v4706
          %v5135 = vpack.c.b16 %v4711, %v4707
          %v5136 = vpack.c.b16 %v4716, %v4712
          %v5137 = vpack.c.b16 %v4717, %v4713
          %v5138 = vpack.c.b16 %v4718, %v4714
          %v5139 = vpack.c.b16 %v4719, %v4715
          %v5140 = vpack.c.b16 %v4724, %v4720
          %v5141 = vpack.c.b16 %v4725, %v4721
          %v5142 = vpack.c.b16 %v4726, %v4722
          %v5143 = vpack.c.b16 %v4727, %v4723
          %v5144 = vpack.c.b16 %v4732, %v4728
          %v5145 = vpack.c.b16 %v4733, %v4729
          %v5146 = vpack.c.b16 %v4734, %v4730
          %v5147 = vpack.c.b16 %v4735, %v4731
          %v5148 = vpack.c.b16 %v4740, %v4736
          %v5149 = vpack.c.b16 %v4741, %v4737
          %v5150 = vpack.c.b16 %v4742, %v4738
          %v5151 = vpack.c.b16 %v4743, %v4739
          %v5152 = vpack.c.b16 %v4748, %v4744
          %v5153 = vpack.c.b16 %v4749, %v4745
          %v5154 = vpack.c.b16 %v4750, %v4746
          %v5155 = vpack.c.b16 %v4751, %v4747
          %v5156 = vpack.c.b16 %v4756, %v4752
          %v5157 = vpack.c.b16 %v4757, %v4753
          %v5158 = vpack.c.b16 %v4758, %v4754
          %v5159 = vpack.c.b16 %v4759, %v4755
          %v5160 = vpack.c.b16 %v4764, %v4760
          %v5161 = vpack.c.b16 %v4765, %v4761
          %v5162 = vpack.c.b16 %v4766, %v4762
          %v5163 = vpack.c.b16 %v4767, %v4763
          %v5164 = vpack.c.b16 %v4772, %v4768
          %v5165 = vpack.c.b16 %v4773, %v4769
          %v5166 = vpack.c.b16 %v4774, %v4770
          %v5167 = vpack.c.b16 %v4775, %v4771
          %v5168 = vpack.c.b16 %v4780, %v4776
          %v5169 = vpack.c.b16 %v4781, %v4777
          %v5170 = vpack.c.b16 %v4782, %v4778
          %v5171 = vpack.c.b16 %v4783, %v4779
          %v5172 = vpack.c.b16 %v4788, %v4784
          %v5173 = vpack.c.b16 %v4789, %v4785
          %v5174 = vpack.c.b16 %v4790, %v4786
          %v5175 = vpack.c.b16 %v4791, %v4787
          %v5176 = vpack.c.b16 %v4796, %v4792
          %v5177 = vpack.c.b16 %v4797, %v4793
          %v5178 = vpack.c.b16 %v4798, %v4794
          %v5179 = vpack.c.b16 %v4799, %v4795
          %v5180 = vpack.c.b16 %v4804, %v4800
          %v5181 = vpack.c.b16 %v4805, %v4801
          %v5182 = vpack.c.b16 %v4806, %v4802
          %v5183 = vpack.c.b16 %v4807, %v4803
          %v5184 = vpack.c.b16 %v4812, %v4808
          %v5185 = vpack.c.b16 %v4813, %v4809
          %v5186 = vpack.c.b16 %v4814, %v4810
          %v5187 = vpack.c.b16 %v4815, %v4811
          %v5188 = vpack.c.b16 %v4820, %v4816
          %v5189 = vpack.c.b16 %v4821, %v4817
          %v5190 = vpack.c.b16 %v4822, %v4818
          %v5191 = vpack.c.b16 %v4823, %v4819
          %v5192 = vpack.c.b16 %v4828, %v4824
          %v5193 = vpack.c.b16 %v4829, %v4825
          %v5194 = vpack.c.b16 %v4830, %v4826
          %v5195 = vpack.c.b16 %v4831, %v4827
          %v5196 = vpack.c.b16 %v4836, %v4832
          %v5197 = vpack.c.b16 %v4837, %v4833
          %v5198 = vpack.c.b16 %v4838, %v4834
          %v5199 = vpack.c.b16 %v4839, %v4835
          %v5200 = vpack.c.b16 %v4844, %v4840
          %v5201 = vpack.c.b16 %v4845, %v4841
          %v5202 = vpack.c.b16 %v4846, %v4842
          %v5203 = vpack.c.b16 %v4847, %v4843
          %v5204 = vpack.c.b16 %v4852, %v4848
          %v5205 = vpack.c.b16 %v4853, %v4849
          %v5206 = vpack.c.b16 %v4854, %v4850
          %v5207 = vpack.c.b16 %v4855, %v4851
          %v5208 = vpack.c.b16 %v4860, %v4856
          %v5209 = vpack.c.b16 %v4861, %v4857
          %v5210 = vpack.c.b16 %v4862, %v4858
          %v5211 = vpack.c.b16 %v4863, %v4859
          %v5212 = vpack.c.b16 %v4868, %v4864
          %v5213 = vpack.c.b16 %v4869, %v4865
          %v5214 = vpack.c.b16 %v4870, %v4866
          %v5215 = vpack.c.b16 %v4871, %v4867
          %v5216 = vpack.c.b16 %v4876, %v4872
          %v5217 = vpack.c.b16 %v4877, %v4873
          %v5218 = vpack.c.b16 %v4878, %v4874
          %v5219 = vpack.c.b16 %v4879, %v4875
          %v5220 = vpack.c.b16 %v4884, %v4880
          %v5221 = vpack.c.b16 %v4885, %v4881
          %v5222 = vpack.c.b16 %v4886, %v4882
          %v5223 = vpack.c.b16 %v4887, %v4883
          %v5224 = vpack.c.b16 %v4892, %v4888
          %v5225 = vpack.c.b16 %v4893, %v4889
          %v5226 = vpack.c.b16 %v4894, %v4890
          %v5227 = vpack.c.b16 %v4895, %v4891
          %v5228 = vpack.c.b16 %v4900, %v4896
          %v5229 = vpack.c.b16 %v4901, %v4897
          %v5230 = vpack.c.b16 %v4902, %v4898
          %v5231 = vpack.c.b16 %v4903, %v4899
          %v5232 = vpack.c.b16 %v4908, %v4904
          %v5233 = vpack.c.b16 %v4909, %v4905
          %v5234 = vpack.c.b16 %v4910, %v4906
          %v5235 = vpack.c.b16 %v4911, %v4907
          %v5236 = vpack.c.b16 %v4916, %v4912
          %v5237 = vpack.c.b16 %v4917, %v4913
          %v5238 = vpack.c.b16 %v4918, %v4914
          %v5239 = vpack.c.b16 %v4919, %v4915
          %v5240 = vpack.c.b16 %v4924, %v4920
          %v5241 = vpack.c.b16 %v4925, %v4921
          %v5242 = vpack.c.b16 %v4926, %v4922
          %v5243 = vpack.c.b16 %v4927, %v4923
          %v5244 = vpack.c.b16 %v4932, %v4928
          %v5245 = vpack.c.b16 %v4933, %v4929
          %v5246 = vpack.c.b16 %v4934, %v4930
          %v5247 = vpack.c.b16 %v4935, %v4931
          %v5248 = vpack.c.b16 %v4940, %v4936
          %v5249 = vpack.c.b16 %v4941, %v4937
          %v5250 = vpack.c.b16 %v4942, %v4938
          %v5251 = vpack.c.b16 %v4943, %v4939
          %v5252 = vpack.c.b16 %v4948, %v4944
          %v5253 = vpack.c.b16 %v4949, %v4945
          %v5254 = vpack.c.b16 %v4950, %v4946
          %v5255 = vpack.c.b16 %v4951, %v4947
          %v5256 = vpack.c.b16 %v4956, %v4952
          %v5257 = vpack.c.b16 %v4957, %v4953
          %v5258 = vpack.c.b16 %v4958, %v4954
          %v5259 = vpack.c.b16 %v4959, %v4955
          %v5260 = vpack.c.b16 %v4964, %v4960
          %v5261 = vpack.c.b16 %v4965, %v4961
          %v5262 = vpack.c.b16 %v4966, %v4962
          %v5263 = vpack.c.b16 %v4967, %v4963
          %v5264 = vpack.c.b16 %v4972, %v4968
          %v5265 = vpack.c.b16 %v4973, %v4969
          %v5266 = vpack.c.b16 %v4974, %v4970
          %v5267 = vpack.c.b16 %v4975, %v4971
          %v5268 = vpack.c.b16 %v4980, %v4976
          %v5269 = vpack.c.b16 %v4981, %v4977
          %v5270 = vpack.c.b16 %v4982, %v4978
          %v5271 = vpack.c.b16 %v4983, %v4979
          %v5272 = vpack.c.b16 %v4988, %v4984
          %v5273 = vpack.c.b16 %v4989, %v4985
          %v5274 = vpack.c.b16 %v4990, %v4986
          %v5275 = vpack.c.b16 %v4991, %v4987
          %v5276 = vpack.c.b16 %v4996, %v4992
          %v5277 = vpack.c.b16 %v4997, %v4993
          %v5278 = vpack.c.b16 %v4998, %v4994
          %v5279 = vpack.c.b16 %v4999, %v4995
          %v5280 = vpack.c.b16 %v5004, %v5000
          %v5281 = vpack.c.b16 %v5005, %v5001
          %v5282 = vpack.c.b16 %v5006, %v5002
          %v5283 = vpack.c.b16 %v5007, %v5003
          %v5284 = vpack.c.b16 %v5012, %v5008
          %v5285 = vpack.c.b16 %v5013, %v5009
          %v5286 = vpack.c.b16 %v5014, %v5010
          %v5287 = vpack.c.b16 %v5015, %v5011
          %v5288 = vpack.c.b16 %v5020, %v5016
          %v5289 = vpack.c.b16 %v5021, %v5017
          %v5290 = vpack.c.b16 %v5022, %v5018
          %v5291 = vpack.c.b16 %v5023, %v5019
          %v5292 = vpack.c.b16 %v5028, %v5024
          %v5293 = vpack.c.b16 %v5029, %v5025
          %v5294 = vpack.c.b16 %v5030, %v5026
          %v5295 = vpack.c.b16 %v5031, %v5027
          %v5296 = vpack.c.b16 %v5036, %v5032
          %v5297 = vpack.c.b16 %v5037, %v5033
          %v5298 = vpack.c.b16 %v5038, %v5034
          %v5299 = vpack.c.b16 %v5039, %v5035
          %v5300 = vpack.c.b16 %v5044, %v5040
          %v5301 = vpack.c.b16 %v5045, %v5041
          %v5302 = vpack.c.b16 %v5046, %v5042
          %v5303 = vpack.c.b16 %v5047, %v5043
          %5560 = vmatprep.subr.bf16.mxu0 %v5077
          %5561 = vmatpush1.bf16.msra.mxu0 %v5076
          %5562 = vmatprep.subr.bf16.mxu0 %v5073
          %5563 = vmatpush1.bf16.msra.mxu0 %v5072
          %5564 = vmatprep.subr.bf16.mxu0 %v5069
          %5565 = vmatpush1.bf16.msra.mxu0 %v5068
          %5566 = vmatprep.subr.bf16.mxu0 %v5065
          %5567 = vmatpush1.bf16.msra.mxu0 %v5064
          %5568 = vmatprep.subr.bf16.mxu0 %v5061
          %5569 = vmatpush1.bf16.msra.mxu0 %v5060
          %5570 = vmatprep.subr.bf16.mxu0 %v5057
          %5571 = vmatpush1.bf16.msra.mxu0 %v5056
          %5572 = vmatprep.subr.bf16.mxu0 %v5053
          %5573 = vmatpush1.bf16.msra.mxu0 %v5052
          %5574 = vmatprep.subr.bf16.mxu0 %v5049
          %5575 = vmatpush1.bf16.msra.mxu0 %v5048
          %5576 = vmatprep.subr.bf16.mxu0 %v5109
          %5577 = vmatpush2.bf16.msra.mxu0 %v5108
          %5578 = vmatprep.subr.bf16.mxu0 %v5105
          %5579 = vmatpush2.bf16.msra.mxu0 %v5104
          %5580 = vmatprep.subr.bf16.mxu0 %v5101
          %5581 = vmatpush2.bf16.msra.mxu0 %v5100
          %5582 = vmatprep.subr.bf16.mxu0 %v5097
          %5583 = vmatpush2.bf16.msra.mxu0 %v5096
          %5584 = vmatprep.subr.bf16.mxu0 %v5093
          %5585 = vmatpush2.bf16.msra.mxu0 %v5092
          %5586 = vmatprep.subr.bf16.mxu0 %v5089
          %5587 = vmatpush2.bf16.msra.mxu0 %v5088
          %5588 = vmatprep.subr.bf16.mxu0 %v5085
          %5589 = vmatpush2.bf16.msra.mxu0 %v5084
          %5590 = vmatprep.subr.bf16.mxu0 %v5081
          %5591 = vmatpush2.bf16.msra.mxu0 %v5080
          %5592 = vmatprep.mubr.bf16.mxu0 %v3995
          %5593 = vmatmul.mubr.bf16.gmra.mxu0 %v3994
          %v5594 = vpop.f32.mrf.mxu0
          %v5595 = vadd.f32 %v4263, %v5594
          %v5596 = vpop.f32.mrf.mxu0
          %v5597 = vadd.f32 %v4267, %v5596
          %v5598 = vpop.f32.mrf.mxu0
          %v5599 = vpop.f32.mrf.mxu0
          %5600 = vdwg.mxu0
          %5601 = vmatprep.subr.bf16.mxu0 %v5141
          %5602 = vmatpush1.bf16.msra.mxu0 %v5140
          %5603 = vmatprep.subr.bf16.mxu0 %v5137
          %5604 = vmatpush1.bf16.msra.mxu0 %v5136
          %5605 = vmatprep.subr.bf16.mxu0 %v5133
          %5606 = vmatpush1.bf16.msra.mxu0 %v5132
          %5607 = vmatprep.subr.bf16.mxu0 %v5129
          %5608 = vmatpush1.bf16.msra.mxu0 %v5128
          %5609 = vmatprep.subr.bf16.mxu0 %v5125
          %5610 = vmatpush1.bf16.msra.mxu0 %v5124
          %5611 = vmatprep.subr.bf16.mxu0 %v5121
          %5612 = vmatpush1.bf16.msra.mxu0 %v5120
          %5613 = vmatprep.subr.bf16.mxu0 %v5117
          %5614 = vmatpush1.bf16.msra.mxu0 %v5116
          %5615 = vmatprep.subr.bf16.mxu0 %v5113
          %5616 = vmatpush1.bf16.msra.mxu0 %v5112
          %5617 = vmatprep.subr.bf16.mxu0 %v5173
          %5618 = vmatpush2.bf16.msra.mxu0 %v5172
          %5619 = vmatprep.subr.bf16.mxu0 %v5169
          %5620 = vmatpush2.bf16.msra.mxu0 %v5168
          %5621 = vmatprep.subr.bf16.mxu0 %v5165
          %5622 = vmatpush2.bf16.msra.mxu0 %v5164
          %5623 = vmatprep.subr.bf16.mxu0 %v5161
          %5624 = vmatpush2.bf16.msra.mxu0 %v5160
          %5625 = vmatprep.subr.bf16.mxu0 %v5157
          %5626 = vmatpush2.bf16.msra.mxu0 %v5156
          %5627 = vmatprep.subr.bf16.mxu0 %v5153
          %5628 = vmatpush2.bf16.msra.mxu0 %v5152
          %5629 = vmatprep.subr.bf16.mxu0 %v5149
          %5630 = vmatpush2.bf16.msra.mxu0 %v5148
          %5631 = vmatprep.subr.bf16.mxu0 %v5145
          %5632 = vmatpush2.bf16.msra.mxu0 %v5144
          %5633 = vmatprep.mubr.bf16.mxu0 %v3997
          %5634 = vmatmul.mubr.bf16.gmra.mxu0 %v3996
          %v5635 = vpop.f32.mrf.mxu0
          %v5636 = vadd.f32 %v5595, %v5635
          %v5637 = vpop.f32.mrf.mxu0
          %v5638 = vadd.f32 %v5597, %v5637
          %v5639 = vpop.f32.mrf.mxu0
          %v5640 = vpop.f32.mrf.mxu0
          %5641 = vdwg.mxu0
          %5642 = vmatprep.subr.bf16.mxu0 %v5205
          %5643 = vmatpush1.bf16.msra.mxu0 %v5204
          %5644 = vmatprep.subr.bf16.mxu0 %v5201
          %5645 = vmatpush1.bf16.msra.mxu0 %v5200
          %5646 = vmatprep.subr.bf16.mxu0 %v5197
          %5647 = vmatpush1.bf16.msra.mxu0 %v5196
          %5648 = vmatprep.subr.bf16.mxu0 %v5193
          %5649 = vmatpush1.bf16.msra.mxu0 %v5192
          %5650 = vmatprep.subr.bf16.mxu0 %v5189
          %5651 = vmatpush1.bf16.msra.mxu0 %v5188
          %5652 = vmatprep.subr.bf16.mxu0 %v5185
          %5653 = vmatpush1.bf16.msra.mxu0 %v5184
          %5654 = vmatprep.subr.bf16.mxu0 %v5181
          %5655 = vmatpush1.bf16.msra.mxu0 %v5180
          %5656 = vmatprep.subr.bf16.mxu0 %v5177
          %5657 = vmatpush1.bf16.msra.mxu0 %v5176
          %5658 = vmatprep.subr.bf16.mxu0 %v5237
          %5659 = vmatpush2.bf16.msra.mxu0 %v5236
          %5660 = vmatprep.subr.bf16.mxu0 %v5233
          %5661 = vmatpush2.bf16.msra.mxu0 %v5232
          %5662 = vmatprep.subr.bf16.mxu0 %v5229
          %5663 = vmatpush2.bf16.msra.mxu0 %v5228
          %5664 = vmatprep.subr.bf16.mxu0 %v5225
          %5665 = vmatpush2.bf16.msra.mxu0 %v5224
          %5666 = vmatprep.subr.bf16.mxu0 %v5221
          %5667 = vmatpush2.bf16.msra.mxu0 %v5220
          %5668 = vmatprep.subr.bf16.mxu0 %v5217
          %5669 = vmatpush2.bf16.msra.mxu0 %v5216
          %5670 = vmatprep.subr.bf16.mxu0 %v5213
          %5671 = vmatpush2.bf16.msra.mxu0 %v5212
          %5672 = vmatprep.subr.bf16.mxu0 %v5209
          %5673 = vmatpush2.bf16.msra.mxu0 %v5208
          %5674 = vmatprep.mubr.bf16.mxu0 %v3999
          %5675 = vmatmul.mubr.bf16.gmra.mxu0 %v3998
          %v5676 = vpop.f32.mrf.mxu0
          %v5677 = vadd.f32 %v5636, %v5676
          %v5678 = vpop.f32.mrf.mxu0
          %v5679 = vadd.f32 %v5638, %v5678
          %v5680 = vpop.f32.mrf.mxu0
          %v5681 = vpop.f32.mrf.mxu0
          %5682 = vdwg.mxu0
          %5683 = vmatprep.subr.bf16.mxu0 %v5269
          %5684 = vmatpush1.bf16.msra.mxu0 %v5268
          %5685 = vmatprep.subr.bf16.mxu0 %v5265
          %5686 = vmatpush1.bf16.msra.mxu0 %v5264
          %5687 = vmatprep.subr.bf16.mxu0 %v5261
          %5688 = vmatpush1.bf16.msra.mxu0 %v5260
          %5689 = vmatprep.subr.bf16.mxu0 %v5257
          %5690 = vmatpush1.bf16.msra.mxu0 %v5256
          %5691 = vmatprep.subr.bf16.mxu0 %v5253
          %5692 = vmatpush1.bf16.msra.mxu0 %v5252
          %5693 = vmatprep.subr.bf16.mxu0 %v5249
          %5694 = vmatpush1.bf16.msra.mxu0 %v5248
          %5695 = vmatprep.subr.bf16.mxu0 %v5245
          %5696 = vmatpush1.bf16.msra.mxu0 %v5244
          %5697 = vmatprep.subr.bf16.mxu0 %v5241
          %5698 = vmatpush1.bf16.msra.mxu0 %v5240
          %5699 = vmatprep.subr.bf16.mxu0 %v5301
          %5700 = vmatpush2.bf16.msra.mxu0 %v5300
          %5701 = vmatprep.subr.bf16.mxu0 %v5297
          %5702 = vmatpush2.bf16.msra.mxu0 %v5296
          %5703 = vmatprep.subr.bf16.mxu0 %v5293
          %5704 = vmatpush2.bf16.msra.mxu0 %v5292
          %5705 = vmatprep.subr.bf16.mxu0 %v5289
          %5706 = vmatpush2.bf16.msra.mxu0 %v5288
          %5707 = vmatprep.subr.bf16.mxu0 %v5285
          %5708 = vmatpush2.bf16.msra.mxu0 %v5284
          %5709 = vmatprep.subr.bf16.mxu0 %v5281
          %5710 = vmatpush2.bf16.msra.mxu0 %v5280
          %5711 = vmatprep.subr.bf16.mxu0 %v5277
          %5712 = vmatpush2.bf16.msra.mxu0 %v5276
          %5713 = vmatprep.subr.bf16.mxu0 %v5273
          %5714 = vmatpush2.bf16.msra.mxu0 %v5272
          %5715 = vmatprep.mubr.bf16.mxu0 %v4001
          %5716 = vmatmul.mubr.bf16.gmra.mxu0 %v4000
          %v5717 = vpop.f32.mrf.mxu0
          %v5718 = vadd.f32 %v5677, %v5717
          %v5719 = vpop.f32.mrf.mxu0
          %v5720 = vadd.f32 %v5679, %v5719
          %v5721 = vpop.f32.mrf.mxu0
          %v5722 = vpop.f32.mrf.mxu0
          %5723 = vdwg.mxu0
          %5724 = vmatprep.subr.bf16.mxu0 %v5079
          %5725 = vmatpush1.bf16.msra.mxu0 %v5078
          %5726 = vmatprep.subr.bf16.mxu0 %v5075
          %5727 = vmatpush1.bf16.msra.mxu0 %v5074
          %5728 = vmatprep.subr.bf16.mxu0 %v5071
          %5729 = vmatpush1.bf16.msra.mxu0 %v5070
          %5730 = vmatprep.subr.bf16.mxu0 %v5067
          %5731 = vmatpush1.bf16.msra.mxu0 %v5066
          %5732 = vmatprep.subr.bf16.mxu0 %v5063
          %5733 = vmatpush1.bf16.msra.mxu0 %v5062
          %5734 = vmatprep.subr.bf16.mxu0 %v5059
          %5735 = vmatpush1.bf16.msra.mxu0 %v5058
          %5736 = vmatprep.subr.bf16.mxu0 %v5055
          %5737 = vmatpush1.bf16.msra.mxu0 %v5054
          %5738 = vmatprep.subr.bf16.mxu0 %v5051
          %5739 = vmatpush1.bf16.msra.mxu0 %v5050
          %5740 = vmatprep.subr.bf16.mxu0 %v5111
          %5741 = vmatpush2.bf16.msra.mxu0 %v5110
          %5742 = vmatprep.subr.bf16.mxu0 %v5107
          %5743 = vmatpush2.bf16.msra.mxu0 %v5106
          %5744 = vmatprep.subr.bf16.mxu0 %v5103
          %5745 = vmatpush2.bf16.msra.mxu0 %v5102
          %5746 = vmatprep.subr.bf16.mxu0 %v5099
          %5747 = vmatpush2.bf16.msra.mxu0 %v5098
          %5748 = vmatprep.subr.bf16.mxu0 %v5095
          %5749 = vmatpush2.bf16.msra.mxu0 %v5094
          %5750 = vmatprep.subr.bf16.mxu0 %v5091
          %5751 = vmatpush2.bf16.msra.mxu0 %v5090
          %5752 = vmatprep.subr.bf16.mxu0 %v5087
          %5753 = vmatpush2.bf16.msra.mxu0 %v5086
          %5754 = vmatprep.subr.bf16.mxu0 %v5083
          %5755 = vmatpush2.bf16.msra.mxu0 %v5082
          %5756 = vmatprep.mubr.bf16.mxu0 %v3995
          %5757 = vmatmul.mubr.bf16.gmra.mxu0 %v3994
          %v5758 = vpop.f32.mrf.mxu0
          %v5759 = vadd.f32 %v4271, %v5758
          %v5760 = vpop.f32.mrf.mxu0
          %v5761 = vadd.f32 %v4275, %v5760
          %v5762 = vpop.f32.mrf.mxu0
          %v5763 = vpop.f32.mrf.mxu0
          %5764 = vdwg.mxu0
          %5765 = vmatprep.subr.bf16.mxu0 %v5143
          %5766 = vmatpush1.bf16.msra.mxu0 %v5142
          %5767 = vmatprep.subr.bf16.mxu0 %v5139
          %5768 = vmatpush1.bf16.msra.mxu0 %v5138
          %5769 = vmatprep.subr.bf16.mxu0 %v5135
          %5770 = vmatpush1.bf16.msra.mxu0 %v5134
          %5771 = vmatprep.subr.bf16.mxu0 %v5131
          %5772 = vmatpush1.bf16.msra.mxu0 %v5130
          %5773 = vmatprep.subr.bf16.mxu0 %v5127
          %5774 = vmatpush1.bf16.msra.mxu0 %v5126
          %5775 = vmatprep.subr.bf16.mxu0 %v5123
          %5776 = vmatpush1.bf16.msra.mxu0 %v5122
          %5777 = vmatprep.subr.bf16.mxu0 %v5119
          %5778 = vmatpush1.bf16.msra.mxu0 %v5118
          %5779 = vmatprep.subr.bf16.mxu0 %v5115
          %5780 = vmatpush1.bf16.msra.mxu0 %v5114
          %5781 = vmatprep.subr.bf16.mxu0 %v5175
          %5782 = vmatpush2.bf16.msra.mxu0 %v5174
          %5783 = vmatprep.subr.bf16.mxu0 %v5171
          %5784 = vmatpush2.bf16.msra.mxu0 %v5170
          %5785 = vmatprep.subr.bf16.mxu0 %v5167
          %5786 = vmatpush2.bf16.msra.mxu0 %v5166
          %5787 = vmatprep.subr.bf16.mxu0 %v5163
          %5788 = vmatpush2.bf16.msra.mxu0 %v5162
          %5789 = vmatprep.subr.bf16.mxu0 %v5159
          %5790 = vmatpush2.bf16.msra.mxu0 %v5158
          %5791 = vmatprep.subr.bf16.mxu0 %v5155
          %5792 = vmatpush2.bf16.msra.mxu0 %v5154
          %5793 = vmatprep.subr.bf16.mxu0 %v5151
          %5794 = vmatpush2.bf16.msra.mxu0 %v5150
          %5795 = vmatprep.subr.bf16.mxu0 %v5147
          %5796 = vmatpush2.bf16.msra.mxu0 %v5146
          %5797 = vmatprep.mubr.bf16.mxu0 %v3997
          %5798 = vmatmul.mubr.bf16.gmra.mxu0 %v3996
          %v5799 = vpop.f32.mrf.mxu0
          %v5800 = vadd.f32 %v5759, %v5799
          %v5801 = vpop.f32.mrf.mxu0
          %v5802 = vadd.f32 %v5761, %v5801
          %v5803 = vpop.f32.mrf.mxu0
          %v5804 = vpop.f32.mrf.mxu0
          %5805 = vdwg.mxu0
          %5806 = vmatprep.subr.bf16.mxu0 %v5207
          %5807 = vmatpush1.bf16.msra.mxu0 %v5206
          %5808 = vmatprep.subr.bf16.mxu0 %v5203
          %5809 = vmatpush1.bf16.msra.mxu0 %v5202
          %5810 = vmatprep.subr.bf16.mxu0 %v5199
          %5811 = vmatpush1.bf16.msra.mxu0 %v5198
          %5812 = vmatprep.subr.bf16.mxu0 %v5195
          %5813 = vmatpush1.bf16.msra.mxu0 %v5194
          %5814 = vmatprep.subr.bf16.mxu0 %v5191
          %5815 = vmatpush1.bf16.msra.mxu0 %v5190
          %5816 = vmatprep.subr.bf16.mxu0 %v5187
          %5817 = vmatpush1.bf16.msra.mxu0 %v5186
          %5818 = vmatprep.subr.bf16.mxu0 %v5183
          %5819 = vmatpush1.bf16.msra.mxu0 %v5182
          %5820 = vmatprep.subr.bf16.mxu0 %v5179
          %5821 = vmatpush1.bf16.msra.mxu0 %v5178
          %5822 = vmatprep.subr.bf16.mxu0 %v5239
          %5823 = vmatpush2.bf16.msra.mxu0 %v5238
          %5824 = vmatprep.subr.bf16.mxu0 %v5235
          %5825 = vmatpush2.bf16.msra.mxu0 %v5234
          %5826 = vmatprep.subr.bf16.mxu0 %v5231
          %5827 = vmatpush2.bf16.msra.mxu0 %v5230
          %5828 = vmatprep.subr.bf16.mxu0 %v5227
          %5829 = vmatpush2.bf16.msra.mxu0 %v5226
          %5830 = vmatprep.subr.bf16.mxu0 %v5223
          %5831 = vmatpush2.bf16.msra.mxu0 %v5222
          %5832 = vmatprep.subr.bf16.mxu0 %v5219
          %5833 = vmatpush2.bf16.msra.mxu0 %v5218
          %5834 = vmatprep.subr.bf16.mxu0 %v5215
          %5835 = vmatpush2.bf16.msra.mxu0 %v5214
          %5836 = vmatprep.subr.bf16.mxu0 %v5211
          %5837 = vmatpush2.bf16.msra.mxu0 %v5210
          %5838 = vmatprep.mubr.bf16.mxu0 %v3999
          %5839 = vmatmul.mubr.bf16.gmra.mxu0 %v3998
          %v5840 = vpop.f32.mrf.mxu0
          %v5841 = vadd.f32 %v5800, %v5840
          %v5842 = vpop.f32.mrf.mxu0
          %v5843 = vadd.f32 %v5802, %v5842
          %v5844 = vpop.f32.mrf.mxu0
          %v5845 = vpop.f32.mrf.mxu0
          %5846 = vdwg.mxu0
          %5847 = vmatprep.subr.bf16.mxu0 %v5271
          %5848 = vmatpush1.bf16.msra.mxu0 %v5270
          %5849 = vmatprep.subr.bf16.mxu0 %v5267
          %5850 = vmatpush1.bf16.msra.mxu0 %v5266
          %5851 = vmatprep.subr.bf16.mxu0 %v5263
          %5852 = vmatpush1.bf16.msra.mxu0 %v5262
          %5853 = vmatprep.subr.bf16.mxu0 %v5259
          %5854 = vmatpush1.bf16.msra.mxu0 %v5258
          %5855 = vmatprep.subr.bf16.mxu0 %v5255
          %5856 = vmatpush1.bf16.msra.mxu0 %v5254
          %5857 = vmatprep.subr.bf16.mxu0 %v5251
          %5858 = vmatpush1.bf16.msra.mxu0 %v5250
          %5859 = vmatprep.subr.bf16.mxu0 %v5247
          %5860 = vmatpush1.bf16.msra.mxu0 %v5246
          %5861 = vmatprep.subr.bf16.mxu0 %v5243
          %5862 = vmatpush1.bf16.msra.mxu0 %v5242
          %5863 = vmatprep.subr.bf16.mxu0 %v5303
          %5864 = vmatpush2.bf16.msra.mxu0 %v5302
          %5865 = vmatprep.subr.bf16.mxu0 %v5299
          %5866 = vmatpush2.bf16.msra.mxu0 %v5298
          %5867 = vmatprep.subr.bf16.mxu0 %v5295
          %5868 = vmatpush2.bf16.msra.mxu0 %v5294
          %5869 = vmatprep.subr.bf16.mxu0 %v5291
          %5870 = vmatpush2.bf16.msra.mxu0 %v5290
          %5871 = vmatprep.subr.bf16.mxu0 %v5287
          %5872 = vmatpush2.bf16.msra.mxu0 %v5286
          %5873 = vmatprep.subr.bf16.mxu0 %v5283
          %5874 = vmatpush2.bf16.msra.mxu0 %v5282
          %5875 = vmatprep.subr.bf16.mxu0 %v5279
          %5876 = vmatpush2.bf16.msra.mxu0 %v5278
          %5877 = vmatprep.subr.bf16.mxu0 %v5275
          %5878 = vmatpush2.bf16.msra.mxu0 %v5274
          %5879 = vmatprep.mubr.bf16.mxu0 %v4001
          %5880 = vmatmul.mubr.bf16.gmra.mxu0 %v4000
          %v5881 = vpop.f32.mrf.mxu0
          %v5882 = vadd.f32 %v5841, %v5881
          %v5883 = vpop.f32.mrf.mxu0
          %v5884 = vadd.f32 %v5843, %v5883
          %v5885 = vpop.f32.mrf.mxu0
          %v5886 = vpop.f32.mrf.mxu0
          %5887 = vdwg.mxu0
          %v5888 = vmax.f32 %v5718, 0.0
          %v5889 = vmax.f32 %v5720, 0.0
          %v5890 = vmax.f32 %v5882, 0.0
          %v5891 = vmax.f32 %v5884, 0.0
          %v5892 = vrot.slane %v5888, 4
          %v5893 = vadd.f32 %v5888, %v5892
          %v5894 = vrot.slane %v5893, 2
          %v5895 = vadd.f32 %v5893, %v5894
          %v5896 = vrot.slane %v5895, 1
          %v5897 = vadd.f32 %v5895, %v5896
          %v5898 = vrot.slane %v5889, 4
          %v5899 = vadd.f32 %v5889, %v5898
          %v5900 = vrot.slane %v5899, 2
          %v5901 = vadd.f32 %v5899, %v5900
          %v5902 = vrot.slane %v5901, 1
          %v5903 = vadd.f32 %v5901, %v5902
          %v5904 = vrot.slane %v5890, 4
          %v5905 = vadd.f32 %v5890, %v5904
          %v5906 = vrot.slane %v5905, 2
          %v5907 = vadd.f32 %v5905, %v5906
          %v5908 = vrot.slane %v5907, 1
          %v5909 = vadd.f32 %v5907, %v5908
          %v5910 = vrot.slane %v5891, 4
          %v5911 = vadd.f32 %v5891, %v5910
          %v5912 = vrot.slane %v5911, 2
          %v5913 = vadd.f32 %v5911, %v5912
          %v5914 = vrot.slane %v5913, 1
          %v5915 = vadd.f32 %v5913, %v5914
          %v5916 = vmul.f32 %v5897, %v3671
          %v5917 = vmul.f32 %v5903, %v3671
          %v5918 = vmul.f32 %v5909, %v3671
          %v5919 = vmul.f32 %v5915, %v3671
          %v5920 = vsub.f32 %v5888, %v5916
          %v5921 = vsub.f32 %v5889, %v5917
          %v5922 = vsub.f32 %v5890, %v5918
          %v5923 = vsub.f32 %v5891, %v5919
          %v5924 = vmul.f32 %v5920, %v5920
          %v5925 = vmul.f32 %v5921, %v5921
          %v5926 = vmul.f32 %v5922, %v5922
          %v5927 = vmul.f32 %v5923, %v5923
          %v5928 = vrot.slane %v5924, 4
          %v5929 = vadd.f32 %v5924, %v5928
          %v5930 = vrot.slane %v5929, 2
          %v5931 = vadd.f32 %v5929, %v5930
          %v5932 = vrot.slane %v5931, 1
          %v5933 = vadd.f32 %v5931, %v5932
          %v5934 = vrot.slane %v5925, 4
          %v5935 = vadd.f32 %v5925, %v5934
          %v5936 = vrot.slane %v5935, 2
          %v5937 = vadd.f32 %v5935, %v5936
          %v5938 = vrot.slane %v5937, 1
          %v5939 = vadd.f32 %v5937, %v5938
          %v5940 = vrot.slane %v5926, 4
          %v5941 = vadd.f32 %v5926, %v5940
          %v5942 = vrot.slane %v5941, 2
          %v5943 = vadd.f32 %v5941, %v5942
          %v5944 = vrot.slane %v5943, 1
          %v5945 = vadd.f32 %v5943, %v5944
          %v5946 = vrot.slane %v5927, 4
          %v5947 = vadd.f32 %v5927, %v5946
          %v5948 = vrot.slane %v5947, 2
          %v5949 = vadd.f32 %v5947, %v5948
          %v5950 = vrot.slane %v5949, 1
          %v5951 = vadd.f32 %v5949, %v5950
          %v5952 = vmul.f32 %v5933, %v3671
          %v5953 = vmul.f32 %v5939, %v3671
          %v5954 = vmul.f32 %v5945, %v3671
          %v5955 = vmul.f32 %v5951, %v3671
          %v5956 = vld [vmem:[#allocation15] sm:$0xf]
          %v5957 = vadd.f32 %v5952, 1e-05
          %v5958 = vadd.f32 %v5953, 1e-05
          %v5959 = vadd.f32 %v5954, 1e-05
          %v5960 = vadd.f32 %v5955, 1e-05
          %v5961 = vrsqrt.pop %v5957
          %v5962 = vrsqrt.pop %v5958
          %v5963 = vrsqrt.pop %v5959
          %v5964 = vrsqrt.pop %v5960
          %v5969 = vcombine.low %v5961, %v5962
          %v5970 = vcombine.low %v5963, %v5964
          %v5972 = vunpack.c.l.s4 1966171168
          %v5973 = vunpack.c.0.s8 %v5972
          %v5974 = vlaneseq
          %v5975 = vshrl.u32 %v5974, 7
          %v5976 = vsub.s32 %v5973, %v5975
          %v5977 = vrot.slane %v5969, %v5976
          %v5979 = vunpack.c.l.s4 1966171168
          %v5980 = vunpack.c.0.s8 %v5979
          %v5981 = vlaneseq
          %v5982 = vshrl.u32 %v5981, 7
          %v5983 = vsub.s32 %v5980, %v5982
          %v5984 = vrot.slane %v5970, %v5983
          %v5985 = vcombine.low %v5977, %v5984
          %v5987 = vunpack.c.l.s4 1966171168
          %v5988 = vunpack.c.0.s8 %v5987
          %v5989 = vlaneseq
          %v5990 = vshrl.u32 %v5989, 7
          %v5991 = vsub.s32 %v5988, %v5990
          %v5992 = vrot.slane %v5985, %v5991
          %v5994 = vmul.f32 %v5956, %v5992
          %v5996 = vlaneseq
          %v5997 = vshrl.u32 %v5996, 7
          %v5998 = vsub.s32 0, %v5997
          %v5999 = vrot.slane %v5994, %v5998
          %v6000 = vlaneseq
          %v6001 = vshrl.u32 %v6000, 7
          %v6002 = vsub.s32 1, %v6001
          %v6003 = vrot.slane %v5994, %v6002
          %v6004 = vlaneseq
          %v6005 = vshrl.u32 %v6004, 7
          %v6006 = vsub.s32 2, %v6005
          %v6007 = vrot.slane %v5994, %v6006
          %v6008 = vlaneseq
          %v6009 = vshrl.u32 %v6008, 7
          %v6010 = vsub.s32 3, %v6009
          %v6011 = vrot.slane %v5994, %v6010
          %v6016 = vmul.f32 %v5888, %v5999
          %v6017 = vmul.f32 %v5889, %v6003
          %v6018 = vmul.f32 %v5890, %v6007
          %v6019 = vmul.f32 %v5891, %v6011
          %v6020 = vld [vmem:[#allocation17] sm:$0xf]
          %v6021 = vmul.f32 %v5916, %v5999
          %v6022 = vmul.f32 %v5917, %v6003
          %v6023 = vmul.f32 %v5918, %v6007
          %v6024 = vmul.f32 %v5919, %v6011
          %v6029 = vcombine.low %v6021, %v6022
          %v6030 = vcombine.low %v6023, %v6024
          %v6032 = vunpack.c.l.s4 1966171168
          %v6033 = vunpack.c.0.s8 %v6032
          %v6034 = vlaneseq
          %v6035 = vshrl.u32 %v6034, 7
          %v6036 = vsub.s32 %v6033, %v6035
          %v6037 = vrot.slane %v6029, %v6036
          %v6039 = vunpack.c.l.s4 1966171168
          %v6040 = vunpack.c.0.s8 %v6039
          %v6041 = vlaneseq
          %v6042 = vshrl.u32 %v6041, 7
          %v6043 = vsub.s32 %v6040, %v6042
          %v6044 = vrot.slane %v6030, %v6043
          %v6045 = vcombine.low %v6037, %v6044
          %v6047 = vunpack.c.l.s4 1966171168
          %v6048 = vunpack.c.0.s8 %v6047
          %v6049 = vlaneseq
          %v6050 = vshrl.u32 %v6049, 7
          %v6051 = vsub.s32 %v6048, %v6050
          %v6052 = vrot.slane %v6045, %v6051
          %v6054 = vsub.f32 %v6020, %v6052
          %v6056 = vlaneseq
          %v6057 = vshrl.u32 %v6056, 7
          %v6058 = vsub.s32 0, %v6057
          %v6059 = vrot.slane %v6054, %v6058
          %v6060 = vlaneseq
          %v6061 = vshrl.u32 %v6060, 7
          %v6062 = vsub.s32 1, %v6061
          %v6063 = vrot.slane %v6054, %v6062
          %v6064 = vlaneseq
          %v6065 = vshrl.u32 %v6064, 7
          %v6066 = vsub.s32 2, %v6065
          %v6067 = vrot.slane %v6054, %v6066
          %v6068 = vlaneseq
          %v6069 = vshrl.u32 %v6068, 7
          %v6070 = vsub.s32 3, %v6069
          %v6071 = vrot.slane %v6054, %v6070
          %v6076 = vadd.f32 %v6016, %v6059
          %v6077 = vadd.f32 %v6017, %v6063
          %v6078 = vadd.f32 %v6018, %v6067
          %v6079 = vadd.f32 %v6019, %v6071
          %v6080 = vpack.c.bf16 %v6076, %v6076
          %v6081 = vpack.c.bf16 %v6077, %v6077
          %v6082 = vpack.c.bf16 %v6078, %v6078
          %v6083 = vpack.c.bf16 %v6079, %v6079
          %v6084 = vld [vmem:[#allocation18] sm:$0xff]
          %v6085 = vld [vmem:[#allocation18 + $0x8] sm:$0xff]
          %v6086 = vld [vmem:[#allocation18 + $0x10] sm:$0xff]
          %v6087 = vld [vmem:[#allocation18 + $0x18] sm:$0xff]
          %v6088 = vld [vmem:[#allocation18 + $0x20] sm:$0xff]
          %v6089 = vld [vmem:[#allocation18 + $0x28] sm:$0xff]
          %v6090 = vld [vmem:[#allocation18 + $0x30] sm:$0xff]
          %v6091 = vld [vmem:[#allocation18 + $0x38] sm:$0xff]
          %v6092 = vld [vmem:[#allocation18 + $0x40] sm:$0xff]
          %v6093 = vld [vmem:[#allocation18 + $0x48] sm:$0xff]
          %v6094 = vld [vmem:[#allocation18 + $0x50] sm:$0xff]
          %v6095 = vld [vmem:[#allocation18 + $0x58] sm:$0xff]
          %v6096 = vld [vmem:[#allocation18 + $0x60] sm:$0xff]
          %v6097 = vld [vmem:[#allocation18 + $0x68] sm:$0xff]
          %v6098 = vld [vmem:[#allocation18 + $0x70] sm:$0xff]
          %v6099 = vld [vmem:[#allocation18 + $0x78] sm:$0xff]
          %v6100 = vld [vmem:[#allocation18 + $0x80] sm:$0xff]
          %v6101 = vld [vmem:[#allocation18 + $0x88] sm:$0xff]
          %v6102 = vld [vmem:[#allocation18 + $0x90] sm:$0xff]
          %v6103 = vld [vmem:[#allocation18 + $0x98] sm:$0xff]
          %v6104 = vld [vmem:[#allocation18 + $0xa0] sm:$0xff]
          %v6105 = vld [vmem:[#allocation18 + $0xa8] sm:$0xff]
          %v6106 = vld [vmem:[#allocation18 + $0xb0] sm:$0xff]
          %v6107 = vld [vmem:[#allocation18 + $0xb8] sm:$0xff]
          %v6108 = vld [vmem:[#allocation18 + $0xc0] sm:$0xff]
          %v6109 = vld [vmem:[#allocation18 + $0xc8] sm:$0xff]
          %v6110 = vld [vmem:[#allocation18 + $0xd0] sm:$0xff]
          %v6111 = vld [vmem:[#allocation18 + $0xd8] sm:$0xff]
          %v6112 = vld [vmem:[#allocation18 + $0xe0] sm:$0xff]
          %v6113 = vld [vmem:[#allocation18 + $0xe8] sm:$0xff]
          %v6114 = vld [vmem:[#allocation18 + $0xf0] sm:$0xff]
          %v6115 = vld [vmem:[#allocation18 + $0xf8] sm:$0xff]
          %v6116 = vld [vmem:[#allocation18 + $0x100] sm:$0xff]
          %v6117 = vld [vmem:[#allocation18 + $0x108] sm:$0xff]
          %v6118 = vld [vmem:[#allocation18 + $0x110] sm:$0xff]
          %v6119 = vld [vmem:[#allocation18 + $0x118] sm:$0xff]
          %v6120 = vld [vmem:[#allocation18 + $0x120] sm:$0xff]
          %v6121 = vld [vmem:[#allocation18 + $0x128] sm:$0xff]
          %v6122 = vld [vmem:[#allocation18 + $0x130] sm:$0xff]
          %v6123 = vld [vmem:[#allocation18 + $0x138] sm:$0xff]
          %v6124 = vld [vmem:[#allocation18 + $0x140] sm:$0xff]
          %v6125 = vld [vmem:[#allocation18 + $0x148] sm:$0xff]
          %v6126 = vld [vmem:[#allocation18 + $0x150] sm:$0xff]
          %v6127 = vld [vmem:[#allocation18 + $0x158] sm:$0xff]
          %v6128 = vld [vmem:[#allocation18 + $0x160] sm:$0xff]
          %v6129 = vld [vmem:[#allocation18 + $0x168] sm:$0xff]
          %v6130 = vld [vmem:[#allocation18 + $0x170] sm:$0xff]
          %v6131 = vld [vmem:[#allocation18 + $0x178] sm:$0xff]
          %v6132 = vld [vmem:[#allocation18 + $0x180] sm:$0xff]
          %v6133 = vld [vmem:[#allocation18 + $0x188] sm:$0xff]
          %v6134 = vld [vmem:[#allocation18 + $0x190] sm:$0xff]
          %v6135 = vld [vmem:[#allocation18 + $0x198] sm:$0xff]
          %v6136 = vld [vmem:[#allocation18 + $0x1a0] sm:$0xff]
          %v6137 = vld [vmem:[#allocation18 + $0x1a8] sm:$0xff]
          %v6138 = vld [vmem:[#allocation18 + $0x1b0] sm:$0xff]
          %v6139 = vld [vmem:[#allocation18 + $0x1b8] sm:$0xff]
          %v6140 = vld [vmem:[#allocation18 + $0x1c0] sm:$0xff]
          %v6141 = vld [vmem:[#allocation18 + $0x1c8] sm:$0xff]
          %v6142 = vld [vmem:[#allocation18 + $0x1d0] sm:$0xff]
          %v6143 = vld [vmem:[#allocation18 + $0x1d8] sm:$0xff]
          %v6144 = vld [vmem:[#allocation18 + $0x1e0] sm:$0xff]
          %v6145 = vld [vmem:[#allocation18 + $0x1e8] sm:$0xff]
          %v6146 = vld [vmem:[#allocation18 + $0x1f0] sm:$0xff]
          %v6147 = vld [vmem:[#allocation18 + $0x1f8] sm:$0xff]
          %v6148 = vld [vmem:[#allocation20] sm:$0x3]
          %v6150 = vlaneseq
          %v6151 = vshrl.u32 %v6150, 7
          %v6152 = vsub.s32 0, %v6151
          %v6153 = vrot.slane %v6148, %v6152
          %v6154 = vlaneseq
          %v6155 = vshrl.u32 %v6154, 7
          %v6156 = vsub.s32 1, %v6155
          %v6157 = vrot.slane %v6148, %v6156
          %v6224 = vunpack.c.l.b16 %v6084
          %v6225 = vunpack.c.h.b16 %v6084
          %v6226 = vunpack.c.l.b16 %v6085
          %v6227 = vunpack.c.h.b16 %v6085
          %v6228 = vunpack.c.l.b16 %v6086
          %v6229 = vunpack.c.h.b16 %v6086
          %v6230 = vunpack.c.l.b16 %v6087
          %v6231 = vunpack.c.h.b16 %v6087
          %v6232 = vunpack.c.l.b16 %v6088
          %v6233 = vunpack.c.h.b16 %v6088
          %v6234 = vunpack.c.l.b16 %v6089
          %v6235 = vunpack.c.h.b16 %v6089
          %v6236 = vunpack.c.l.b16 %v6090
          %v6237 = vunpack.c.h.b16 %v6090
          %v6238 = vunpack.c.l.b16 %v6091
          %v6239 = vunpack.c.h.b16 %v6091
          %v6240 = vunpack.c.l.b16 %v6092
          %v6241 = vunpack.c.h.b16 %v6092
          %v6242 = vunpack.c.l.b16 %v6093
          %v6243 = vunpack.c.h.b16 %v6093
          %v6244 = vunpack.c.l.b16 %v6094
          %v6245 = vunpack.c.h.b16 %v6094
          %v6246 = vunpack.c.l.b16 %v6095
          %v6247 = vunpack.c.h.b16 %v6095
          %v6248 = vunpack.c.l.b16 %v6096
          %v6249 = vunpack.c.h.b16 %v6096
          %v6250 = vunpack.c.l.b16 %v6097
          %v6251 = vunpack.c.h.b16 %v6097
          %v6252 = vunpack.c.l.b16 %v6098
          %v6253 = vunpack.c.h.b16 %v6098
          %v6254 = vunpack.c.l.b16 %v6099
          %v6255 = vunpack.c.h.b16 %v6099
          %v6256 = vunpack.c.l.b16 %v6100
          %v6257 = vunpack.c.h.b16 %v6100
          %v6258 = vunpack.c.l.b16 %v6101
          %v6259 = vunpack.c.h.b16 %v6101
          %v6260 = vunpack.c.l.b16 %v6102
          %v6261 = vunpack.c.h.b16 %v6102
          %v6262 = vunpack.c.l.b16 %v6103
          %v6263 = vunpack.c.h.b16 %v6103
          %v6264 = vunpack.c.l.b16 %v6104
          %v6265 = vunpack.c.h.b16 %v6104
          %v6266 = vunpack.c.l.b16 %v6105
          %v6267 = vunpack.c.h.b16 %v6105
          %v6268 = vunpack.c.l.b16 %v6106
          %v6269 = vunpack.c.h.b16 %v6106
          %v6270 = vunpack.c.l.b16 %v6107
          %v6271 = vunpack.c.h.b16 %v6107
          %v6272 = vunpack.c.l.b16 %v6108
          %v6273 = vunpack.c.h.b16 %v6108
          %v6274 = vunpack.c.l.b16 %v6109
          %v6275 = vunpack.c.h.b16 %v6109
          %v6276 = vunpack.c.l.b16 %v6110
          %v6277 = vunpack.c.h.b16 %v6110
          %v6278 = vunpack.c.l.b16 %v6111
          %v6279 = vunpack.c.h.b16 %v6111
          %v6280 = vunpack.c.l.b16 %v6112
          %v6281 = vunpack.c.h.b16 %v6112
          %v6282 = vunpack.c.l.b16 %v6113
          %v6283 = vunpack.c.h.b16 %v6113
          %v6284 = vunpack.c.l.b16 %v6114
          %v6285 = vunpack.c.h.b16 %v6114
          %v6286 = vunpack.c.l.b16 %v6115
          %v6287 = vunpack.c.h.b16 %v6115
          %v6288 = vunpack.c.l.b16 %v6116
          %v6289 = vunpack.c.h.b16 %v6116
          %v6290 = vunpack.c.l.b16 %v6117
          %v6291 = vunpack.c.h.b16 %v6117
          %v6292 = vunpack.c.l.b16 %v6118
          %v6293 = vunpack.c.h.b16 %v6118
          %v6294 = vunpack.c.l.b16 %v6119
          %v6295 = vunpack.c.h.b16 %v6119
          %v6296 = vunpack.c.l.b16 %v6120
          %v6297 = vunpack.c.h.b16 %v6120
          %v6298 = vunpack.c.l.b16 %v6121
          %v6299 = vunpack.c.h.b16 %v6121
          %v6300 = vunpack.c.l.b16 %v6122
          %v6301 = vunpack.c.h.b16 %v6122
          %v6302 = vunpack.c.l.b16 %v6123
          %v6303 = vunpack.c.h.b16 %v6123
          %v6304 = vunpack.c.l.b16 %v6124
          %v6305 = vunpack.c.h.b16 %v6124
          %v6306 = vunpack.c.l.b16 %v6125
          %v6307 = vunpack.c.h.b16 %v6125
          %v6308 = vunpack.c.l.b16 %v6126
          %v6309 = vunpack.c.h.b16 %v6126
          %v6310 = vunpack.c.l.b16 %v6127
          %v6311 = vunpack.c.h.b16 %v6127
          %v6312 = vunpack.c.l.b16 %v6128
          %v6313 = vunpack.c.h.b16 %v6128
          %v6314 = vunpack.c.l.b16 %v6129
          %v6315 = vunpack.c.h.b16 %v6129
          %v6316 = vunpack.c.l.b16 %v6130
          %v6317 = vunpack.c.h.b16 %v6130
          %v6318 = vunpack.c.l.b16 %v6131
          %v6319 = vunpack.c.h.b16 %v6131
          %v6320 = vunpack.c.l.b16 %v6132
          %v6321 = vunpack.c.h.b16 %v6132
          %v6322 = vunpack.c.l.b16 %v6133
          %v6323 = vunpack.c.h.b16 %v6133
          %v6324 = vunpack.c.l.b16 %v6134
          %v6325 = vunpack.c.h.b16 %v6134
          %v6326 = vunpack.c.l.b16 %v6135
          %v6327 = vunpack.c.h.b16 %v6135
          %v6328 = vunpack.c.l.b16 %v6136
          %v6329 = vunpack.c.h.b16 %v6136
          %v6330 = vunpack.c.l.b16 %v6137
          %v6331 = vunpack.c.h.b16 %v6137
          %v6332 = vunpack.c.l.b16 %v6138
          %v6333 = vunpack.c.h.b16 %v6138
          %v6334 = vunpack.c.l.b16 %v6139
          %v6335 = vunpack.c.h.b16 %v6139
          %v6336 = vunpack.c.l.b16 %v6140
          %v6337 = vunpack.c.h.b16 %v6140
          %v6338 = vunpack.c.l.b16 %v6141
          %v6339 = vunpack.c.h.b16 %v6141
          %v6340 = vunpack.c.l.b16 %v6142
          %v6341 = vunpack.c.h.b16 %v6142
          %v6342 = vunpack.c.l.b16 %v6143
          %v6343 = vunpack.c.h.b16 %v6143
          %v6344 = vunpack.c.l.b16 %v6144
          %v6345 = vunpack.c.h.b16 %v6144
          %v6346 = vunpack.c.l.b16 %v6145
          %v6347 = vunpack.c.h.b16 %v6145
          %v6348 = vunpack.c.l.b16 %v6146
          %v6349 = vunpack.c.h.b16 %v6146
          %v6350 = vunpack.c.l.b16 %v6147
          %v6351 = vunpack.c.h.b16 %v6147
          %v6352 = vpack.c.b16 %v6226, %v6224
          %v6353 = vpack.c.b16 %v6227, %v6225
          %v6354 = vpack.c.b16 %v6230, %v6228
          %v6355 = vpack.c.b16 %v6231, %v6229
          %v6356 = vpack.c.b16 %v6234, %v6232
          %v6357 = vpack.c.b16 %v6235, %v6233
          %v6358 = vpack.c.b16 %v6238, %v6236
          %v6359 = vpack.c.b16 %v6239, %v6237
          %v6360 = vpack.c.b16 %v6242, %v6240
          %v6361 = vpack.c.b16 %v6243, %v6241
          %v6362 = vpack.c.b16 %v6246, %v6244
          %v6363 = vpack.c.b16 %v6247, %v6245
          %v6364 = vpack.c.b16 %v6250, %v6248
          %v6365 = vpack.c.b16 %v6251, %v6249
          %v6366 = vpack.c.b16 %v6254, %v6252
          %v6367 = vpack.c.b16 %v6255, %v6253
          %v6368 = vpack.c.b16 %v6258, %v6256
          %v6369 = vpack.c.b16 %v6259, %v6257
          %v6370 = vpack.c.b16 %v6262, %v6260
          %v6371 = vpack.c.b16 %v6263, %v6261
          %v6372 = vpack.c.b16 %v6266, %v6264
          %v6373 = vpack.c.b16 %v6267, %v6265
          %v6374 = vpack.c.b16 %v6270, %v6268
          %v6375 = vpack.c.b16 %v6271, %v6269
          %v6376 = vpack.c.b16 %v6274, %v6272
          %v6377 = vpack.c.b16 %v6275, %v6273
          %v6378 = vpack.c.b16 %v6278, %v6276
          %v6379 = vpack.c.b16 %v6279, %v6277
          %v6380 = vpack.c.b16 %v6282, %v6280
          %v6381 = vpack.c.b16 %v6283, %v6281
          %v6382 = vpack.c.b16 %v6286, %v6284
          %v6383 = vpack.c.b16 %v6287, %v6285
          %v6384 = vpack.c.b16 %v6290, %v6288
          %v6385 = vpack.c.b16 %v6291, %v6289
          %v6386 = vpack.c.b16 %v6294, %v6292
          %v6387 = vpack.c.b16 %v6295, %v6293
          %v6388 = vpack.c.b16 %v6298, %v6296
          %v6389 = vpack.c.b16 %v6299, %v6297
          %v6390 = vpack.c.b16 %v6302, %v6300
          %v6391 = vpack.c.b16 %v6303, %v6301
          %v6392 = vpack.c.b16 %v6306, %v6304
          %v6393 = vpack.c.b16 %v6307, %v6305
          %v6394 = vpack.c.b16 %v6310, %v6308
          %v6395 = vpack.c.b16 %v6311, %v6309
          %v6396 = vpack.c.b16 %v6314, %v6312
          %v6397 = vpack.c.b16 %v6315, %v6313
          %v6398 = vpack.c.b16 %v6318, %v6316
          %v6399 = vpack.c.b16 %v6319, %v6317
          %v6400 = vpack.c.b16 %v6322, %v6320
          %v6401 = vpack.c.b16 %v6323, %v6321
          %v6402 = vpack.c.b16 %v6326, %v6324
          %v6403 = vpack.c.b16 %v6327, %v6325
          %v6404 = vpack.c.b16 %v6330, %v6328
          %v6405 = vpack.c.b16 %v6331, %v6329
          %v6406 = vpack.c.b16 %v6334, %v6332
          %v6407 = vpack.c.b16 %v6335, %v6333
          %v6408 = vpack.c.b16 %v6338, %v6336
          %v6409 = vpack.c.b16 %v6339, %v6337
          %v6410 = vpack.c.b16 %v6342, %v6340
          %v6411 = vpack.c.b16 %v6343, %v6341
          %v6412 = vpack.c.b16 %v6346, %v6344
          %v6413 = vpack.c.b16 %v6347, %v6345
          %v6414 = vpack.c.b16 %v6350, %v6348
          %v6415 = vpack.c.b16 %v6351, %v6349
          %6480 = vmatprep.subr.bf16.mxu0 %v6367
          %6481 = vmatpush1.bf16.msra.mxu0 %v6366
          %6482 = vmatprep.subr.bf16.mxu0 %v6365
          %6483 = vmatpush1.bf16.msra.mxu0 %v6364
          %6484 = vmatprep.subr.bf16.mxu0 %v6363
          %6485 = vmatpush1.bf16.msra.mxu0 %v6362
          %6486 = vmatprep.subr.bf16.mxu0 %v6361
          %6487 = vmatpush1.bf16.msra.mxu0 %v6360
          %6488 = vmatprep.subr.bf16.mxu0 %v6359
          %6489 = vmatpush1.bf16.msra.mxu0 %v6358
          %6490 = vmatprep.subr.bf16.mxu0 %v6357
          %6491 = vmatpush1.bf16.msra.mxu0 %v6356
          %6492 = vmatprep.subr.bf16.mxu0 %v6355
          %6493 = vmatpush1.bf16.msra.mxu0 %v6354
          %6494 = vmatprep.subr.bf16.mxu0 %v6353
          %6495 = vmatpush1.bf16.msra.mxu0 %v6352
          %6496 = vmatprep.subr.bf16.mxu0 %v6383
          %6497 = vmatpush2.bf16.msra.mxu0 %v6382
          %6498 = vmatprep.subr.bf16.mxu0 %v6381
          %6499 = vmatpush2.bf16.msra.mxu0 %v6380
          %6500 = vmatprep.subr.bf16.mxu0 %v6379
          %6501 = vmatpush2.bf16.msra.mxu0 %v6378
          %6502 = vmatprep.subr.bf16.mxu0 %v6377
          %6503 = vmatpush2.bf16.msra.mxu0 %v6376
          %6504 = vmatprep.subr.bf16.mxu0 %v6375
          %6505 = vmatpush2.bf16.msra.mxu0 %v6374
          %6506 = vmatprep.subr.bf16.mxu0 %v6373
          %6507 = vmatpush2.bf16.msra.mxu0 %v6372
          %6508 = vmatprep.subr.bf16.mxu0 %v6371
          %6509 = vmatpush2.bf16.msra.mxu0 %v6370
          %6510 = vmatprep.subr.bf16.mxu0 %v6369
          %6511 = vmatpush2.bf16.msra.mxu0 %v6368
          %6512 = vmatprep.mubr.bf16.mxu0 %v6081
          %6513 = vmatmul.mubr.bf16.gmra.mxu0 %v6080
          %v6514 = vpop.f32.mrf.mxu0
          %v6515 = vadd.f32 %v6153, %v6514
          %v6516 = vpop.f32.mrf.mxu0
          %v6517 = vadd.f32 %v6157, %v6516
          %v6518 = vpop.f32.mrf.mxu0
          %v6519 = vpop.f32.mrf.mxu0
          %6520 = vdwg.mxu0
          %6521 = vmatprep.subr.bf16.mxu0 %v6399
          %6522 = vmatpush1.bf16.msra.mxu0 %v6398
          %6523 = vmatprep.subr.bf16.mxu0 %v6397
          %6524 = vmatpush1.bf16.msra.mxu0 %v6396
          %6525 = vmatprep.subr.bf16.mxu0 %v6395
          %6526 = vmatpush1.bf16.msra.mxu0 %v6394
          %6527 = vmatprep.subr.bf16.mxu0 %v6393
          %6528 = vmatpush1.bf16.msra.mxu0 %v6392
          %6529 = vmatprep.subr.bf16.mxu0 %v6391
          %6530 = vmatpush1.bf16.msra.mxu0 %v6390
          %6531 = vmatprep.subr.bf16.mxu0 %v6389
          %6532 = vmatpush1.bf16.msra.mxu0 %v6388
          %6533 = vmatprep.subr.bf16.mxu0 %v6387
          %6534 = vmatpush1.bf16.msra.mxu0 %v6386
          %6535 = vmatprep.subr.bf16.mxu0 %v6385
          %6536 = vmatpush1.bf16.msra.mxu0 %v6384
          %6537 = vmatprep.subr.bf16.mxu0 %v6415
          %6538 = vmatpush2.bf16.msra.mxu0 %v6414
          %6539 = vmatprep.subr.bf16.mxu0 %v6413
          %6540 = vmatpush2.bf16.msra.mxu0 %v6412
          %6541 = vmatprep.subr.bf16.mxu0 %v6411
          %6542 = vmatpush2.bf16.msra.mxu0 %v6410
          %6543 = vmatprep.subr.bf16.mxu0 %v6409
          %6544 = vmatpush2.bf16.msra.mxu0 %v6408
          %6545 = vmatprep.subr.bf16.mxu0 %v6407
          %6546 = vmatpush2.bf16.msra.mxu0 %v6406
          %6547 = vmatprep.subr.bf16.mxu0 %v6405
          %6548 = vmatpush2.bf16.msra.mxu0 %v6404
          %6549 = vmatprep.subr.bf16.mxu0 %v6403
          %6550 = vmatpush2.bf16.msra.mxu0 %v6402
          %6551 = vmatprep.subr.bf16.mxu0 %v6401
          %6552 = vmatpush2.bf16.msra.mxu0 %v6400
          %6553 = vmatprep.mubr.bf16.mxu0 %v6083
          %6554 = vmatmul.mubr.bf16.gmra.mxu0 %v6082
          %v6555 = vpop.f32.mrf.mxu0
          %v6556 = vadd.f32 %v6515, %v6555
          %v6557 = vpop.f32.mrf.mxu0
          %v6558 = vadd.f32 %v6517, %v6557
          %v6559 = vpop.f32.mrf.mxu0
          %v6560 = vpop.f32.mrf.mxu0
          %6561 = vdwg.mxu0
          %v6562 = vmax.f32 %v6556, 0.0
          %v6563 = vmax.f32 %v6558, 0.0
          %v6564 = vrot.slane %v6562, 4
          %v6565 = vadd.f32 %v6562, %v6564
          %v6566 = vrot.slane %v6565, 2
          %v6567 = vadd.f32 %v6565, %v6566
          %v6568 = vrot.slane %v6567, 1
          %v6569 = vadd.f32 %v6567, %v6568
          %v6570 = vrot.slane %v6563, 4
          %v6571 = vadd.f32 %v6563, %v6570
          %v6572 = vrot.slane %v6571, 2
          %v6573 = vadd.f32 %v6571, %v6572
          %v6574 = vrot.slane %v6573, 1
          %v6575 = vadd.f32 %v6573, %v6574
          %v6576 = vmul.f32 %v6569, %v3671
          %v6577 = vmul.f32 %v6575, %v3671
          %v6578 = vsub.f32 %v6562, %v6576
          %v6579 = vsub.f32 %v6563, %v6577
          %v6580 = vmul.f32 %v6578, %v6578
          %v6581 = vmul.f32 %v6579, %v6579
          %v6582 = vrot.slane %v6580, 4
          %v6583 = vadd.f32 %v6580, %v6582
          %v6584 = vrot.slane %v6583, 2
          %v6585 = vadd.f32 %v6583, %v6584
          %v6586 = vrot.slane %v6585, 1
          %v6587 = vadd.f32 %v6585, %v6586
          %v6588 = vrot.slane %v6581, 4
          %v6589 = vadd.f32 %v6581, %v6588
          %v6590 = vrot.slane %v6589, 2
          %v6591 = vadd.f32 %v6589, %v6590
          %v6592 = vrot.slane %v6591, 1
          %v6593 = vadd.f32 %v6591, %v6592
          %v6594 = vmul.f32 %v6587, %v3671
          %v6595 = vmul.f32 %v6593, %v3671
          %v6596 = vld [vmem:[#allocation21] sm:$0x3]
          %v6597 = vadd.f32 %v6594, 1e-05
          %v6598 = vadd.f32 %v6595, 1e-05
          %v6599 = vrsqrt.pop %v6597
          %v6600 = vrsqrt.pop %v6598
          %v6603 = vcombine.low %v6599, %v6600
          %v6605 = vunpack.c.l.s4 1966171168
          %v6606 = vunpack.c.0.s8 %v6605
          %v6607 = vlaneseq
          %v6608 = vshrl.u32 %v6607, 7
          %v6609 = vsub.s32 %v6606, %v6608
          %v6610 = vrot.slane %v6603, %v6609
          %v6612 = vunpack.c.l.s4 1966171168
          %v6613 = vunpack.c.0.s8 %v6612
          %v6614 = vlaneseq
          %v6615 = vshrl.u32 %v6614, 7
          %v6616 = vsub.s32 %v6613, %v6615
          %v6617 = vrot.slane %v6610, %v6616
          %v6619 = vmul.f32 %v6596, %v6617
          %v6621 = vlaneseq
          %v6622 = vshrl.u32 %v6621, 7
          %v6623 = vsub.s32 0, %v6622
          %v6624 = vrot.slane %v6619, %v6623
          %v6625 = vlaneseq
          %v6626 = vshrl.u32 %v6625, 7
          %v6627 = vsub.s32 1, %v6626
          %v6628 = vrot.slane %v6619, %v6627
          %v6631 = vmul.f32 %v6562, %v6624
          %v6632 = vmul.f32 %v6563, %v6628
          %v6633 = vld [vmem:[#allocation23] sm:$0x3]
          %v6634 = vmul.f32 %v6576, %v6624
          %v6635 = vmul.f32 %v6577, %v6628
          %v6638 = vcombine.low %v6634, %v6635
          %v6640 = vunpack.c.l.s4 1966171168
          %v6641 = vunpack.c.0.s8 %v6640
          %v6642 = vlaneseq
          %v6643 = vshrl.u32 %v6642, 7
          %v6644 = vsub.s32 %v6641, %v6643
          %v6645 = vrot.slane %v6638, %v6644
          %v6647 = vunpack.c.l.s4 1966171168
          %v6648 = vunpack.c.0.s8 %v6647
          %v6649 = vlaneseq
          %v6650 = vshrl.u32 %v6649, 7
          %v6651 = vsub.s32 %v6648, %v6650
          %v6652 = vrot.slane %v6645, %v6651
          %v6654 = vsub.f32 %v6633, %v6652
          %v6656 = vlaneseq
          %v6657 = vshrl.u32 %v6656, 7
          %v6658 = vsub.s32 0, %v6657
          %v6659 = vrot.slane %v6654, %v6658
          %v6660 = vlaneseq
          %v6661 = vshrl.u32 %v6660, 7
          %v6662 = vsub.s32 1, %v6661
          %v6663 = vrot.slane %v6654, %v6662
          %v6666 = vadd.f32 %v6631, %v6659
          %v6667 = vadd.f32 %v6632, %v6663
          %v6668 = vpack.c.bf16 %v6666, %v6666
          %v6669 = vpack.c.bf16 %v6667, %v6667
          %v6670 = vld [vmem:[%s13] sm:$0xf]
          %v6671 = vld [vmem:[%s13 + $0x4] sm:$0xf]
          %v6672 = vld [vmem:[%s13 + $0x8] sm:$0xf]
          %v6673 = vld [vmem:[%s13 + $0xc] sm:$0xf]
          %v6674 = vld [vmem:[%s13 + $0x10] sm:$0xf]
          %v6675 = vld [vmem:[%s13 + $0x14] sm:$0xf]
          %v6676 = vld [vmem:[%s13 + $0x18] sm:$0xf]
          %v6677 = vld [vmem:[%s13 + $0x1c] sm:$0xf]
          %v6678 = vld [vmem:[%s13 + $0x20] sm:$0xf]
          %v6679 = vld [vmem:[%s13 + $0x24] sm:$0xf]
          %v6680 = vld [vmem:[%s13 + $0x28] sm:$0xf]
          %v6681 = vld [vmem:[%s13 + $0x2c] sm:$0xf]
          %v6682 = vld [vmem:[%s13 + $0x30] sm:$0xf]
          %v6683 = vld [vmem:[%s13 + $0x34] sm:$0xf]
          %v6684 = vld [vmem:[%s13 + $0x38] sm:$0xf]
          %v6685 = vld [vmem:[%s13 + $0x3c] sm:$0xf]
          %v6686 = vld [vmem:[%s13 + $0x40] sm:$0xf]
          %v6687 = vld [vmem:[%s13 + $0x44] sm:$0xf]
          %v6688 = vld [vmem:[%s13 + $0x48] sm:$0xf]
          %v6689 = vld [vmem:[%s13 + $0x4c] sm:$0xf]
          %v6690 = vld [vmem:[%s13 + $0x50] sm:$0xf]
          %v6691 = vld [vmem:[%s13 + $0x54] sm:$0xf]
          %v6692 = vld [vmem:[%s13 + $0x58] sm:$0xf]
          %v6693 = vld [vmem:[%s13 + $0x5c] sm:$0xf]
          %v6694 = vld [vmem:[%s13 + $0x60] sm:$0xf]
          %v6695 = vld [vmem:[%s13 + $0x64] sm:$0xf]
          %v6696 = vld [vmem:[%s13 + $0x68] sm:$0xf]
          %v6697 = vld [vmem:[%s13 + $0x6c] sm:$0xf]
          %v6698 = vld [vmem:[%s13 + $0x70] sm:$0xf]
          %v6699 = vld [vmem:[%s13 + $0x74] sm:$0xf]
          %v6700 = vld [vmem:[%s13 + $0x78] sm:$0xf]
          %v6701 = vld [vmem:[%s13 + $0x7c] sm:$0xf]
          %v6702 = vld [vmem:[#allocation24] sm:$0x1]
          %v6704 = vlaneseq
          %v6705 = vshrl.u32 %v6704, 7
          %v6706 = vsub.s32 0, %v6705
          %v6707 = vrot.slane %v6702, %v6706
          %v6741 = vunpack.c.l.b16 %v6670
          %v6742 = vunpack.c.l.b16 %v6671
          %v6743 = vunpack.c.l.b16 %v6672
          %v6744 = vunpack.c.l.b16 %v6673
          %v6745 = vunpack.c.l.b16 %v6674
          %v6746 = vunpack.c.l.b16 %v6675
          %v6747 = vunpack.c.l.b16 %v6676
          %v6748 = vunpack.c.l.b16 %v6677
          %v6749 = vunpack.c.l.b16 %v6678
          %v6750 = vunpack.c.l.b16 %v6679
          %v6751 = vunpack.c.l.b16 %v6680
          %v6752 = vunpack.c.l.b16 %v6681
          %v6753 = vunpack.c.l.b16 %v6682
          %v6754 = vunpack.c.l.b16 %v6683
          %v6755 = vunpack.c.l.b16 %v6684
          %v6756 = vunpack.c.l.b16 %v6685
          %v6757 = vunpack.c.l.b16 %v6686
          %v6758 = vunpack.c.l.b16 %v6687
          %v6759 = vunpack.c.l.b16 %v6688
          %v6760 = vunpack.c.l.b16 %v6689
          %v6761 = vunpack.c.l.b16 %v6690
          %v6762 = vunpack.c.l.b16 %v6691
          %v6763 = vunpack.c.l.b16 %v6692
          %v6764 = vunpack.c.l.b16 %v6693
          %v6765 = vunpack.c.l.b16 %v6694
          %v6766 = vunpack.c.l.b16 %v6695
          %v6767 = vunpack.c.l.b16 %v6696
          %v6768 = vunpack.c.l.b16 %v6697
          %v6769 = vunpack.c.l.b16 %v6698
          %v6770 = vunpack.c.l.b16 %v6699
          %v6771 = vunpack.c.l.b16 %v6700
          %v6772 = vunpack.c.l.b16 %v6701
          %v6773 = vpack.c.b16 %v6742, %v6741
          %v6774 = vpack.c.b16 %v6744, %v6743
          %v6775 = vpack.c.b16 %v6746, %v6745
          %v6776 = vpack.c.b16 %v6748, %v6747
          %v6777 = vpack.c.b16 %v6750, %v6749
          %v6778 = vpack.c.b16 %v6752, %v6751
          %v6779 = vpack.c.b16 %v6754, %v6753
          %v6780 = vpack.c.b16 %v6756, %v6755
          %v6781 = vpack.c.b16 %v6758, %v6757
          %v6782 = vpack.c.b16 %v6760, %v6759
          %v6783 = vpack.c.b16 %v6762, %v6761
          %v6784 = vpack.c.b16 %v6764, %v6763
          %v6785 = vpack.c.b16 %v6766, %v6765
          %v6786 = vpack.c.b16 %v6768, %v6767
          %v6787 = vpack.c.b16 %v6770, %v6769
          %v6788 = vpack.c.b16 %v6772, %v6771
          %6805 = vmatprep.subr.bf16.mxu0 0
          %6806 = vmatpush1.bf16.msra.mxu0 %v6780
          %6807 = vmatprep.subr.bf16.mxu0 0
          %6808 = vmatpush1.bf16.msra.mxu0 %v6779
          %6809 = vmatprep.subr.bf16.mxu0 0
          %6810 = vmatpush1.bf16.msra.mxu0 %v6778
          %6811 = vmatprep.subr.bf16.mxu0 0
          %6812 = vmatpush1.bf16.msra.mxu0 %v6777
          %6813 = vmatprep.subr.bf16.mxu0 0
          %6814 = vmatpush1.bf16.msra.mxu0 %v6776
          %6815 = vmatprep.subr.bf16.mxu0 0
          %6816 = vmatpush1.bf16.msra.mxu0 %v6775
          %6817 = vmatprep.subr.bf16.mxu0 0
          %6818 = vmatpush1.bf16.msra.mxu0 %v6774
          %6819 = vmatprep.subr.bf16.mxu0 0
          %6820 = vmatpush1.bf16.msra.mxu0 %v6773
          %6821 = vmatprep.subr.bf16.mxu0 0
          %6822 = vmatpush2.bf16.msra.mxu0 %v6788
          %6823 = vmatprep.subr.bf16.mxu0 0
          %6824 = vmatpush2.bf16.msra.mxu0 %v6787
          %6825 = vmatprep.subr.bf16.mxu0 0
          %6826 = vmatpush2.bf16.msra.mxu0 %v6786
          %6827 = vmatprep.subr.bf16.mxu0 0
          %6828 = vmatpush2.bf16.msra.mxu0 %v6785
          %6829 = vmatprep.subr.bf16.mxu0 0
          %6830 = vmatpush2.bf16.msra.mxu0 %v6784
          %6831 = vmatprep.subr.bf16.mxu0 0
          %6832 = vmatpush2.bf16.msra.mxu0 %v6783
          %6833 = vmatprep.subr.bf16.mxu0 0
          %6834 = vmatpush2.bf16.msra.mxu0 %v6782
          %6835 = vmatprep.subr.bf16.mxu0 0
          %6836 = vmatpush2.bf16.msra.mxu0 %v6781
          %6837 = vmatprep.mubr.bf16.mxu0 %v6669
          %6838 = vmatmul.mubr.bf16.gmra.mxu0 %v6668
          %v6839 = vpop.f32.mrf.mxu0
          %v6840 = vadd.f32 %v6707, %v6839
          %v6841 = vpop.f32.mrf.mxu0
          %v6842 = vpop.f32.mrf.mxu0
          %v6843 = vpop.f32.mrf.mxu0
          %6844 = vdwg.mxu0
          %vm6845 = vcmask 80896
          %6846 = vst.msk [vmem:[#allocation26] sm:$0xff] %vm6845, %v6840
        $region144: #{tpu_custom_call.1} parent=79 // pred_fallthru
          _
        // Predicated region
        $region145: #{tpu_custom_call.1} parent=79 // pred_check
          %p6847 = pneg %p377
        $region146: #{tpu_custom_call.1} parent=79 // pred_check_branch
          %6849 = sbr.rel (%p6847) target = $region148
        $region147: #{tpu_custom_call.1} parent=79 // pred_region
          %s6851 = ssub.s32 128, 128
          %6852 = vsyncadd [#allocation5], %s6851
          %s6854 = sshll.u32 [#allocation26], 4
          %s6855 = int_to_ptr.vmem [resolvable:$true] %s6854
          %6857 = dma.vmem_to_hbm [thread:$0]  %s6855, 128, %s15, [#allocation5]
        $region148: #{tpu_custom_call.1} parent=79 // pred_fallthru
          _
        // Predicated region
        $region149: #{tpu_custom_call.1} parent=79 // pred_check
          %p6858 = pneg %p377
        $region150: #{tpu_custom_call.1} parent=79 // pred_check_branch
          %6860 = sbr.rel (%p6858) target = $region152
        $region151: #{tpu_custom_call.1} parent=79 // pred_region
          %6861 = dma.done [#allocation5], 128
        $region152: #{tpu_custom_call.1} parent=79 // pred_fallthru
          _
      $region80: #{tpu_custom_call.1} parent=5 // pred_fallthru
        _
      %p6862 = scmp.le.s32.totalorder 2, %s34
      // Predicated region
      $region153: #{tpu_custom_call.1} parent=5 // pred_check
        %p6863 = pneg %p6862
      $region154: #{tpu_custom_call.1} parent=5 // pred_check_branch
        %6865 = sbr.rel (%p6863) target = $region156
      $region155: #{tpu_custom_call.1} parent=5 // pred_region
        %s6866 = ssub.s32 %s34, 2
      $region156: #{tpu_custom_call.1} parent=5 // pred_fallthru
        _
    $region6: #{tpu_custom_call.1} parent=1 // loop_footer
      %s38 = sadd.s32 1, %s34
    $region7: #{tpu_custom_call.1} parent=1 // loop_footer_branch
      %33 = sbr.rel target = $region3
    $region8: #{tpu_custom_call.1} parent=1 // loop_exit
      _
    %6867 = vsyncpa [#allocation4], 1
    %s6868 = scalar_lea.sflag [#allocation4], 1
    %6869 = vsyncpa %s6868, 1
    %6870 = vsyncpa [#allocation7], 1
    %s6871 = scalar_lea.sflag [#allocation7], 1
    %6872 = vsyncpa %s6871, 1
    %6873 = vsyncpa [#allocation10], 1
    %6874 = vsyncpa [#allocation13], 1
    %6875 = vsyncpa [#allocation16], 1
    %6876 = vsyncpa [#allocation19], 1
    %6877 = vsyncpa [#allocation22], 1
    %6878 = vsyncpa [#allocation25], 1
    %6879 = vsyncpa [#allocation5], 1
    %s6880 = scalar_lea.sflag [#allocation5], 1
    %6881 = vsyncpa %s6880, 1

</llo_original>
